<compile_context>
chip_gen: v7x
topology: tpu7x:2x2x1
jax: 0.10.0
libtpu: 0.0.40
codegen_flags: <defaults>
</compile_context>

<pallas_src>
import functools
import math

import jax
import jax.numpy as jnp
from jax import lax
from jax.experimental import pallas as pl
from jax.experimental.pallas import tpu as pltpu


# ----------------------------------------------------------------------------
# Helpers
# ----------------------------------------------------------------------------

def _gelu(x):
    # GPT-2 "gelu_new" (tanh approximation) used by the standard MLP block.
    return 0.5 * x * (1.0 + jnp.tanh(
        jnp.float32(math.sqrt(2.0 / math.pi)) * (x + 0.044715 * x * x * x)))


def _pick_tile(dim, pref, align):
    """Largest tile <= pref that exactly divides dim (a tile equal to the full
    dim is always legal w.r.t. the (8,128) block constraint)."""
    if dim <= pref:
        return dim
    t = (pref // align) * align
    while t >= align:
        if dim % t == 0:
            return t
        t -= align
    return dim


# ----------------------------------------------------------------------------
# Pallas kernels
# ----------------------------------------------------------------------------

def _matmul_kernel(x_ref, w_ref, b_ref, o_ref, acc_ref, *, activation):
    # Tiled Conv1D:  (tm, tk) @ (tk, tn) accumulated over the K grid axis,
    # bias (+ optional GELU) applied in the finalize step.
    @pl.when(pl.program_id(2) == 0)
    def _init():
        acc_ref[...] = jnp.zeros_like(acc_ref)

    acc_ref[...] += jnp.dot(x_ref[...], w_ref[...],
                            preferred_element_type=jnp.float32)

    @pl.when(pl.program_id(2) == pl.num_programs(2) - 1)
    def _finalize():
        h = acc_ref[...] + b_ref[...].astype(jnp.float32)
        if activation == "gelu":
            h = _gelu(h)
        o_ref[...] = h.astype(o_ref.dtype)


def _matmul_res_ln_kernel(x_ref, w_ref, b_ref, res_ref, g_ref, beta_ref,
                          o_ref, acc_ref, *, eps):
    # Fused: LayerNorm(residual + x @ W + b) — LN as the matmul epilogue.
    @pl.when(pl.program_id(1) == 0)
    def _init():
        acc_ref[...] = jnp.zeros_like(acc_ref)

    acc_ref[...] += jnp.dot(x_ref[...], w_ref[...],
                            preferred_element_type=jnp.float32)

    @pl.when(pl.program_id(1) == pl.num_programs(1) - 1)
    def _finalize():
        h = (acc_ref[...] + b_ref[...].astype(jnp.float32)
             + res_ref[...].astype(jnp.float32))
        mu = jnp.mean(h, axis=-1, keepdims=True)
        var = jnp.mean((h - mu) ** 2, axis=-1, keepdims=True)
        y = (h - mu) * lax.rsqrt(var + eps)
        o_ref[...] = (y * g_ref[...].astype(jnp.float32)
                      + beta_ref[...].astype(jnp.float32)).astype(o_ref.dtype)


def _attn_kernel(q_ref, k_ref, v_ref, o_ref, *, causal, scale_val, masked_bias):
    # One group of G (batch*head) slices per grid step.
    q = q_ref[...].astype(jnp.float32)                       # (G, Tq, D)
    if scale_val != 1.0:
        q = q * jnp.float32(scale_val)                       # fold 1/sqrt(D) into q
    k = k_ref[...].astype(jnp.float32)                       # (G, Tk, D)
    v = v_ref[...].astype(jnp.float32)                       # (G, Tk, D)

    # Batched QK^T via einsum (transpose folded into the MXU operand).
    s = jnp.einsum("gqd,gkd->gqk", q, k,
                   preferred_element_type=jnp.float32)       # (G, Tq, Tk)
    if causal:
        _, tq, tk = s.shape
        row = lax.broadcasted_iota(jnp.int32, (tq, tk), 0)
        col = lax.broadcasted_iota(jnp.int32, (tq, tk), 1)
        mask = col <= (row + (tk - tq))
        s = jnp.where(mask, s, jnp.float32(masked_bias))

    # Stable softmax; reciprocal on the EUP slot.
    s = s - jnp.max(s, axis=-1, keepdims=True)
    p = jnp.exp(s)
    p = p * pl.reciprocal(jnp.sum(p, axis=-1, keepdims=True), approx=True)

    o = jnp.einsum("gqk,gkd->gqd", p, v,
                   preferred_element_type=jnp.float32)       # (G, Tq, D)
    o_ref[...] = o.astype(o_ref.dtype)
    # TODO(synk): for long sequences add a Tk grid axis with online-softmax
    # (flash-style) scratch instead of materializing the full (Tq, Tk) scores.


# ----------------------------------------------------------------------------
# Pallas wrappers
# ----------------------------------------------------------------------------

def conv1d(x, w, b, activation=None):
    """GPT-2 Conv1D: y = x @ W + b with optional fused GELU (M/N/K tiled)."""
    lead = x.shape[:-1]
    cin = x.shape[-1]
    cout = w.shape[-1]
    x2 = x.reshape(-1, cin)
    m = x2.shape[0]

    tm = _pick_tile(m, 256, 8)
    tn = _pick_tile(cout, 256, 128)
    tk = _pick_tile(cin, 512, 128)
    grid = (m // tm, cout // tn, cin // tk)

    out = pl.pallas_call(
        functools.partial(_matmul_kernel, activation=activation),
        out_shape=jax.ShapeDtypeStruct((m, cout), x.dtype),
        grid=grid,
        in_specs=[
            pl.BlockSpec((tm, tk), lambda i, j, k: (i, k)),
            pl.BlockSpec((tk, tn), lambda i, j, k: (k, j)),
            pl.BlockSpec((1, tn), lambda i, j, k: (0, j)),
        ],
        out_specs=pl.BlockSpec((tm, tn), lambda i, j, k: (i, j)),
        scratch_shapes=[pltpu.VMEM((tm, tn), jnp.float32)],
        compiler_params=pltpu.CompilerParams(
            dimension_semantics=("parallel", "parallel", "arbitrary")),
    )(x2, w, b.reshape(1, cout))
    return out.reshape(*lead, cout)


def conv1d_residual_ln(x, w, b, residual, gamma, beta, eps):
    """Fused: LayerNorm(residual + x @ W + b), tiled over rows and K."""
    lead = x.shape[:-1]
    cin = x.shape[-1]
    cout = w.shape[-1]
    x2 = x.reshape(-1, cin)
    r2 = residual.reshape(-1, cout)
    m = x2.shape[0]

    tm = _pick_tile(m, 256, 8)
    tk = _pick_tile(cin, 512, 128)
    grid = (m // tm, cin // tk)

    out = pl.pallas_call(
        functools.partial(_matmul_res_ln_kernel, eps=eps),
        out_shape=jax.ShapeDtypeStruct((m, cout), x.dtype),
        grid=grid,
        in_specs=[
            pl.BlockSpec((tm, tk), lambda i, k: (i, k)),
            pl.BlockSpec((tk, cout), lambda i, k: (k, 0)),
            pl.BlockSpec((1, cout), lambda i, k: (0, 0)),
            pl.BlockSpec((tm, cout), lambda i, k: (i, 0)),
            pl.BlockSpec((1, cout), lambda i, k: (0, 0)),
            pl.BlockSpec((1, cout), lambda i, k: (0, 0)),
        ],
        out_specs=pl.BlockSpec((tm, cout), lambda i, k: (i, 0)),
        scratch_shapes=[pltpu.VMEM((tm, cout), jnp.float32)],
        compiler_params=pltpu.CompilerParams(
            dimension_semantics=("parallel", "arbitrary")),
    )(x2, w, b.reshape(1, cout), r2,
      gamma.reshape(1, cout), beta.reshape(1, cout))
    return out.reshape(*lead, cout)


def multihead_attention(q, k, v, *, causal, scale):
    """q: (B,H,Tq,D), k/v: (B,H,Tk,D) -> (B,H,Tq,D)."""
    B, H, Tq, D = q.shape
    Tk = k.shape[2]
    BH = B * H
    qf = q.reshape(BH, Tq, D)
    kf = k.reshape(BH, Tk, D)
    vf = v.reshape(BH, Tk, D)

    # Group several (batch, head) slices per grid step to amortize per-step
    # overhead, but keep >= 2 grid steps when possible so dual-TC chips can
    # split the work.
    G = min(8, BH)
    while BH % G:
        G -= 1
    if BH // G < 2 and G > 1:
        G = max(1, G // 2)
        while BH % G:
            G -= 1
    grid = (BH // G,)

    scale_val = (1.0 / math.sqrt(D)) if scale else 1.0
    out = pl.pallas_call(
        functools.partial(_attn_kernel, causal=causal, scale_val=scale_val,
                          masked_bias=-10000.0),
        out_shape=jax.ShapeDtypeStruct((BH, Tq, D), q.dtype),
        grid=grid,
        in_specs=[
            pl.BlockSpec((G, Tq, D), lambda i: (i, 0, 0)),
            pl.BlockSpec((G, Tk, D), lambda i: (i, 0, 0)),
            pl.BlockSpec((G, Tk, D), lambda i: (i, 0, 0)),
        ],
        out_specs=pl.BlockSpec((G, Tq, D), lambda i: (i, 0, 0)),
        compiler_params=pltpu.CompilerParams(
            dimension_semantics=("parallel",)),
    )(qf, kf, vf)
    return out.reshape(B, H, Tq, D)


# ----------------------------------------------------------------------------
# DecoderBlock forward (glue in plain JAX; hot paths in Pallas)
# ----------------------------------------------------------------------------

def _split_heads(t, n_head):
    B, T, C = t.shape
    D = C // n_head
    return t.reshape(B, T, n_head, D).transpose(0, 2, 1, 3)   # (B,H,T,D)


def _merge_heads(t):
    B, H, T, D = t.shape
    return t.transpose(0, 2, 1, 3).reshape(B, T, H * D)


def decoder_block_forward(params, x, ctx, *, n_head, scale, eps):
    # ---- SelfAttention (causal) + fused residual/LN1 ----
    qkv = conv1d(x, params["c_attn_w"], params["c_attn_b"])          # (B,T,3C)
    q, k, v = jnp.split(qkv, 3, axis=-1)
    a = multihead_attention(_split_heads(q, n_head),
                            _split_heads(k, n_head),
                            _split_heads(v, n_head),
                            causal=True, scale=scale)
    x = conv1d_residual_ln(_merge_heads(a),
                           params["self_proj_w"], params["self_proj_b"],
                           x, params["ln1_g"], params["ln1_b"], eps)

    # ---- CrossAttention + fused residual/LN2 ----
    q = conv1d(x, params["q_attn_w"], params["q_attn_b"])            # (B,T,C)
    kv = conv1d(ctx, params["kv_attn_w"], params["kv_attn_b"])       # (B,Tc,2C)
    kc, vc = jnp.split(kv, 2, axis=-1)
    a = multihead_attention(_split_heads(q, n_head),
                            _split_heads(kc, n_head),
                            _split_heads(vc, n_head),
                            causal=False, scale=scale)
    x = conv1d_residual_ln(_merge_heads(a),
                           params["cross_proj_w"], params["cross_proj_b"],
                           x, params["ln2_g"], params["ln2_b"], eps)

    # ---- MLP (4*nx) + fused residual/LN3 ----
    h = conv1d(x, params["mlp_fc_w"], params["mlp_fc_b"], activation="gelu")
    x = conv1d_residual_ln(h, params["mlp_proj_w"], params["mlp_proj_b"],
                           x, params["ln3_g"], params["ln3_b"], eps)
    return x


# ----------------------------------------------------------------------------
# Pure-JAX reference (for correctness check of the Pallas path)
# ----------------------------------------------------------------------------

def _ref_attn(q, k, v, causal, scale):
    D = q.shape[-1]
    w = jnp.einsum("bhqd,bhkd->bhqk", q, k)
    if scale:
        w = w / math.sqrt(D)
    if causal:
        tq, tk = w.shape[-2], w.shape[-1]
        mask = jnp.tril(jnp.ones((tq, tk), dtype=bool), k=tk - tq)
        w = jnp.where(mask, w, jnp.float32(-10000.0))
    w = jax.nn.softmax(w, axis=-1)
    return jnp.einsum("bhqk,bhkd->bhqd", w, v)


def _ref_ln(h, g, b, eps):
    mu = jnp.mean(h, axis=-1, keepdims=True)
    var = jnp.mean((h - mu) ** 2, axis=-1, keepdims=True)
    return (h - mu) * lax.rsqrt(var + eps) * g + b


def decoder_block_reference(params, x, ctx, *, n_head, scale, eps):
    qkv = x @ params["c_attn_w"] + params["c_attn_b"]
    q, k, v = jnp.split(qkv, 3, axis=-1)
    a = _ref_attn(_split_heads(q, n_head), _split_heads(k, n_head),
                  _split_heads(v, n_head), True, scale)
    a = _merge_heads(a) @ params["self_proj_w"] + params["self_proj_b"]
    x = _ref_ln(x + a, params["ln1_g"], params["ln1_b"], eps)

    q = x @ params["q_attn_w"] + params["q_attn_b"]
    kv = ctx @ params["kv_attn_w"] + params["kv_attn_b"]
    kc, vc = jnp.split(kv, 2, axis=-1)
    a = _ref_attn(_split_heads(q, n_head), _split_heads(kc, n_head),
                  _split_heads(vc, n_head), False, scale)
    a = _merge_heads(a) @ params["cross_proj_w"] + params["cross_proj_b"]
    x = _ref_ln(x + a, params["ln2_g"], params["ln2_b"], eps)

    h = _gelu(x @ params["mlp_fc_w"] + params["mlp_fc_b"])
    m = h @ params["mlp_proj_w"] + params["mlp_proj_b"]
    x = _ref_ln(x + m, params["ln3_g"], params["ln3_b"], eps)
    return x


# ----------------------------------------------------------------------------
# Parameter init + main
# ----------------------------------------------------------------------------

def init_params(key, n_embd):
    def normal(k, shape):
        return 0.02 * jax.random.normal(k, shape, dtype=jnp.float32)

    ks = jax.random.split(key, 8)
    C = n_embd
    return {
        # SelfAttention: c_attn (C -> 3C), c_proj (C -> C)
        "c_attn_w": normal(ks[0], (C, 3 * C)),
        "c_attn_b": jnp.zeros((3 * C,), jnp.float32),
        "self_proj_w": normal(ks[1], (C, C)),
        "self_proj_b": jnp.zeros((C,), jnp.float32),
        "ln1_g": jnp.ones((C,), jnp.float32),
        "ln1_b": jnp.zeros((C,), jnp.float32),
        # CrossAttention: q_attn (C -> C), kv_attn (C -> 2C), c_proj (C -> C)
        "q_attn_w": normal(ks[2], (C, C)),
        "q_attn_b": jnp.zeros((C,), jnp.float32),
        "kv_attn_w": normal(ks[3], (C, 2 * C)),
        "kv_attn_b": jnp.zeros((2 * C,), jnp.float32),
        "cross_proj_w": normal(ks[4], (C, C)),
        "cross_proj_b": jnp.zeros((C,), jnp.float32),
        "ln2_g": jnp.ones((C,), jnp.float32),
        "ln2_b": jnp.zeros((C,), jnp.float32),
        # MLP: c_fc (C -> 4C), gelu, c_proj (4C -> C)
        "mlp_fc_w": normal(ks[5], (C, 4 * C)),
        "mlp_fc_b": jnp.zeros((4 * C,), jnp.float32),
        "mlp_proj_w": normal(ks[6], (4 * C, C)),
        "mlp_proj_b": jnp.zeros((C,), jnp.float32),
        "ln3_g": jnp.ones((C,), jnp.float32),
        "ln3_b": jnp.zeros((C,), jnp.float32),
    }


if __name__ == "__main__":
    # config: n_embd=32, n_head=4, n_ctx=seq=8, scale=True, eps=1e-5
    B, T, Tc, C, H = 2, 8, 8, 32, 4
    eps = 1e-5
    scale = True

    key = jax.random.PRNGKey(0)
    kx, kc_, kp = jax.random.split(key, 3)
    x = jax.random.normal(kx, (B, T, C), dtype=jnp.float32)
    ctx = jax.random.normal(kc_, (B, Tc, C), dtype=jnp.float32)
    params = init_params(kp, C)

    fwd = jax.jit(functools.partial(decoder_block_forward,
                                    n_head=H, scale=scale, eps=eps))
    out = fwd(params, x, ctx)
    out = jax.block_until_ready(out)

    ref = decoder_block_reference(params, x, ctx, n_head=H, scale=scale, eps=eps)
    assert out.shape == (B, T, C)
    assert jnp.allclose(out, ref, atol=5e-3, rtol=5e-3), "mismatch vs reference"

    print("KERNEL_OK")
</pallas_src>

<mosaic_0001>
module attributes {stable_mosaic.version = 11 : i64} {
  func.func @_matmul_kernel(%arg0: i32, %arg1: i32, %arg2: i32, %arg3: memref<16x32xf32, #tpu.memory_space<vmem>>, %arg4: memref<32x96xf32, #tpu.memory_space<vmem>>, %arg5: memref<1x96xf32, #tpu.memory_space<vmem>>, %arg6: memref<16x96xf32, #tpu.memory_space<vmem>>, %arg7: memref<16x96xf32, #tpu.memory_space<vmem>>) attributes {dimension_semantics = [#tpu.dimension_semantics<parallel>, #tpu.dimension_semantics<parallel>, #tpu.dimension_semantics<arbitrary>], iteration_bounds = array<i64: 1, 1, 1>, scalar_prefetch = 0 : i64, scratch_operands = 1 : i64, tpu.core_type = #tpu.core_type<tc>, window_params = [{transform_indices = @transform_0, window_bounds = array<i64: 16, 32>}, {transform_indices = @transform_1, window_bounds = array<i64: 32, 96>}, {transform_indices = @transform_2, window_bounds = array<i64: 1, 96>}, {transform_indices = @transform_3, window_bounds = array<i64: 16, 96>}]} {
    %c0_i32 = arith.constant 0 : i32
    %0 = arith.cmpi eq, %arg2, %c0_i32 : i32
    %1 = arith.extui %0 : i1 to i32
    %c0_i32_0 = arith.constant 0 : i32
    %2 = arith.cmpi ne, %1, %c0_i32_0 : i32
    scf.if %2 {
      %cst_10 = arith.constant 0.000000e+00 : f32
      %12 = vector.broadcast %cst_10 : f32 to vector<16x96xf32>
      %c0_11 = arith.constant 0 : index
      %c0_12 = arith.constant 0 : index
      %13 = vector.load %arg7[%c0_11, %c0_12] : memref<16x96xf32, #tpu.memory_space<vmem>>, vector<16x96xf32>
      tpu.vector_store %arg7[%c0_11, %c0_12], %12 {strides = array<i32>} : memref<16x96xf32, #tpu.memory_space<vmem>>, vector<16x96xf32>,
    } else {
    }
    %c0 = arith.constant 0 : index
    %c0_1 = arith.constant 0 : index
    %3 = vector.load %arg7[%c0, %c0_1] : memref<16x96xf32, #tpu.memory_space<vmem>>, vector<16x96xf32>
    %c0_2 = arith.constant 0 : index
    %c0_3 = arith.constant 0 : index
    %4 = vector.load %arg3[%c0_2, %c0_3] : memref<16x32xf32, #tpu.memory_space<vmem>>, vector<16x32xf32>
    %c0_4 = arith.constant 0 : index
    %c0_5 = arith.constant 0 : index
    %5 = vector.load %arg4[%c0_4, %c0_5] : memref<32x96xf32, #tpu.memory_space<vmem>>, vector<32x96xf32>
    %cst = arith.constant dense<0.000000e+00> : vector<16x96xf32>
    %6 = tpu.matmul %4, %5, %cst {dimension_numbers = #tpu.dot_dimension_numbers<[1], [0], [0], [1], [0, 0, 1, 1], [], []>} : vector<16x32xf32>, vector<32x96xf32>, vector<16x96xf32> -> vector<16x96xf32>
    %7 = arith.addf %3, %6 : vector<16x96xf32>
    %c0_6 = arith.constant 0 : index
    %c0_7 = arith.constant 0 : index
    %8 = vector.load %arg7[%c0_6, %c0_7] : memref<16x96xf32, #tpu.memory_space<vmem>>, vector<16x96xf32>
    tpu.vector_store %arg7[%c0_6, %c0_7], %7 {strides = array<i32>} : memref<16x96xf32, #tpu.memory_space<vmem>>, vector<16x96xf32>,
    %c0_i32_8 = arith.constant 0 : i32
    %9 = arith.cmpi eq, %arg2, %c0_i32_8 : i32
    %10 = arith.extui %9 : i1 to i32
    %c0_i32_9 = arith.constant 0 : i32
    %11 = arith.cmpi ne, %10, %c0_i32_9 : i32
    scf.if %11 {
      %c0_10 = arith.constant 0 : index
      %c0_11 = arith.constant 0 : index
      %12 = vector.load %arg7[%c0_10, %c0_11] : memref<16x96xf32, #tpu.memory_space<vmem>>, vector<16x96xf32>
      %c0_12 = arith.constant 0 : index
      %c0_13 = arith.constant 0 : index
      %13 = vector.load %arg5[%c0_12, %c0_13] : memref<1x96xf32, #tpu.memory_space<vmem>>, vector<1x96xf32>
      %14 = vector.broadcast %13 : vector<1x96xf32> to vector<16x96xf32>
      %15 = arith.addf %12, %14 : vector<16x96xf32>
      %c0_14 = arith.constant 0 : index
      %c0_15 = arith.constant 0 : index
      %16 = vector.load %arg6[%c0_14, %c0_15] : memref<16x96xf32, #tpu.memory_space<vmem>>, vector<16x96xf32>
      tpu.vector_store %arg6[%c0_14, %c0_15], %15 {strides = array<i32>} : memref<16x96xf32, #tpu.memory_space<vmem>>, vector<16x96xf32>,
    } else {
    }
    return
  }
  func.func @transform_0(%arg0: i32, %arg1: i32, %arg2: i32) -> (i32, i32) {
    %c0_i32 = arith.constant 0 : i32
    return %arg0, %arg2 : i32, i32
  }
  func.func @transform_1(%arg0: i32, %arg1: i32, %arg2: i32) -> (i32, i32) {
    %c0_i32 = arith.constant 0 : i32
    return %arg2, %arg1 : i32, i32
  }
  func.func @transform_2(%arg0: i32, %arg1: i32, %arg2: i32) -> (i32, i32) {
    %c0_i32 = arith.constant 0 : i32
    %c0_i32_0 = arith.constant 0 : i32
    return %c0_i32, %arg1 : i32, i32
  }
  func.func @transform_3(%arg0: i32, %arg1: i32, %arg2: i32) -> (i32, i32) {
    %c0_i32 = arith.constant 0 : i32
    return %arg0, %arg1 : i32, i32
  }
}

module attributes {stable_mosaic.version = 11 : i64} {
  func.func @_attn_kernel(%arg0: i32, %arg1: memref<4x8x8xf32, #tpu.memory_space<vmem>>, %arg2: memref<4x8x8xf32, #tpu.memory_space<vmem>>, %arg3: memref<4x8x8xf32, #tpu.memory_space<vmem>>, %arg4: memref<4x8x8xf32, #tpu.memory_space<vmem>>) attributes {dimension_semantics = [#tpu.dimension_semantics<parallel>], iteration_bounds = array<i64: 2>, scalar_prefetch = 0 : i64, scratch_operands = 0 : i64, tpu.core_type = #tpu.core_type<tc>, window_params = [{transform_indices = @transform_0, window_bounds = array<i64: 4, 8, 8>}, {transform_indices = @transform_1, window_bounds = array<i64: 4, 8, 8>}, {transform_indices = @transform_2, window_bounds = array<i64: 4, 8, 8>}, {transform_indices = @transform_3, window_bounds = array<i64: 4, 8, 8>}]} {
    %c0 = arith.constant 0 : index
    %c0_0 = arith.constant 0 : index
    %c0_1 = arith.constant 0 : index
    %0 = vector.load %arg1[%c0, %c0_0, %c0_1] : memref<4x8x8xf32, #tpu.memory_space<vmem>>, vector<4x8x8xf32>
    %cst = arith.constant 0.353553385 : f32
    %1 = vector.broadcast %cst : f32 to vector<4x8x8xf32>
    %2 = arith.mulf %0, %1 : vector<4x8x8xf32>
    %c0_2 = arith.constant 0 : index
    %c0_3 = arith.constant 0 : index
    %c0_4 = arith.constant 0 : index
    %3 = vector.load %arg2[%c0_2, %c0_3, %c0_4] : memref<4x8x8xf32, #tpu.memory_space<vmem>>, vector<4x8x8xf32>
    %c0_5 = arith.constant 0 : index
    %c0_6 = arith.constant 0 : index
    %c0_7 = arith.constant 0 : index
    %4 = vector.load %arg3[%c0_5, %c0_6, %c0_7] : memref<4x8x8xf32, #tpu.memory_space<vmem>>, vector<4x8x8xf32>
    "tpu.trace_start"() <{level = 10 : i32, message = "gqd,gkd->gqk"}> : () -> ()
    %cst_8 = arith.constant dense<0.000000e+00> : vector<4x8x8xf32>
    %5 = tpu.matmul %2, %3, %cst_8 {dimension_numbers = #tpu.dot_dimension_numbers<[2], [2], [1], [1], [0, 0, 0, 1, 1, 1], [0], [0]>} : vector<4x8x8xf32>, vector<4x8x8xf32>, vector<4x8x8xf32> -> vector<4x8x8xf32>
    "tpu.trace_stop"() : () -> ()
    %6 = tpu.iota {dimensions = array<i32: 0>} : vector<8x8xi32>
    %7 = tpu.iota {dimensions = array<i32: 1>} : vector<8x8xi32>
    %c0_i32 = arith.constant 0 : i32
    %8 = vector.broadcast %c0_i32 : i32 to vector<8x8xi32>
    %9 = arith.addi %6, %8 : vector<8x8xi32>
    %10 = arith.cmpi sle, %7, %9 : vector<8x8xi32>
    %cst_9 = arith.constant -1.000000e+04 : f32
    %11 = vector.shape_cast %10 : vector<8x8xi1> to vector<1x8x8xi1>
    %12 = vector.broadcast %11 : vector<1x8x8xi1> to vector<4x8x8xi1>
    %13 = vector.broadcast %cst_9 : f32 to vector<4x8x8xf32>
    %14 = arith.select %12, %5, %13 : vector<4x8x8xi1>, vector<4x8x8xf32>
    %cst_10 = arith.constant dense<0xFF800000> : vector<4x8xf32>
    %15 = vector.multi_reduction <maximumf>, %14, %cst_10 [2] : vector<4x8x8xf32> to vector<4x8xf32>
    %16 = vector.shape_cast %15 : vector<4x8xf32> to vector<4x8x1xf32>
    %17 = vector.broadcast %16 : vector<4x8x1xf32> to vector<4x8x8xf32>
    %18 = arith.subf %14, %17 : vector<4x8x8xf32>
    %19 = math.exp %18 : vector<4x8x8xf32>
    %cst_11 = arith.constant dense<0.000000e+00> : vector<4x8xf32>
    %20 = vector.multi_reduction <add>, %19, %cst_11 [2] : vector<4x8x8xf32> to vector<4x8xf32>
    %21 = vector.shape_cast %20 : vector<4x8xf32> to vector<4x8x1xf32>
    %22 = tpu.reciprocal %21 {approx = true} : vector<4x8x1xf32> -> vector<4x8x1xf32>
    %23 = vector.broadcast %22 : vector<4x8x1xf32> to vector<4x8x8xf32>
    %24 = arith.mulf %19, %23 : vector<4x8x8xf32>
    "tpu.trace_start"() <{level = 10 : i32, message = "gqk,gkd->gqd"}> : () -> ()
    %cst_12 = arith.constant dense<0.000000e+00> : vector<4x8x8xf32>
    %25 = tpu.matmul %24, %4, %cst_12 {dimension_numbers = #tpu.dot_dimension_numbers<[2], [1], [1], [2], [0, 0, 0, 1, 1, 2], [0], [0]>} : vector<4x8x8xf32>, vector<4x8x8xf32>, vector<4x8x8xf32> -> vector<4x8x8xf32>
    "tpu.trace_stop"() : () -> ()
    %c0_13 = arith.constant 0 : index
    %c0_14 = arith.constant 0 : index
    %c0_15 = arith.constant 0 : index
    %26 = vector.load %arg4[%c0_13, %c0_14, %c0_15] : memref<4x8x8xf32, #tpu.memory_space<vmem>>, vector<4x8x8xf32>
    tpu.vector_store %arg4[%c0_13, %c0_14, %c0_15], %25 {strides = array<i32>} : memref<4x8x8xf32, #tpu.memory_space<vmem>>, vector<4x8x8xf32>,
    return
  }
  func.func @transform_0(%arg0: i32) -> (i32, i32, i32) {
    %c0_i32 = arith.constant 0 : i32
    %c0_i32_0 = arith.constant 0 : i32
    %c0_i32_1 = arith.constant 0 : i32
    return %arg0, %c0_i32, %c0_i32_0 : i32, i32, i32
  }
  func.func @transform_1(%arg0: i32) -> (i32, i32, i32) {
    %c0_i32 = arith.constant 0 : i32
    %c0_i32_0 = arith.constant 0 : i32
    %c0_i32_1 = arith.constant 0 : i32
    return %arg0, %c0_i32, %c0_i32_0 : i32, i32, i32
  }
  func.func @transform_2(%arg0: i32) -> (i32, i32, i32) {
    %c0_i32 = arith.constant 0 : i32
    %c0_i32_0 = arith.constant 0 : i32
    %c0_i32_1 = arith.constant 0 : i32
    return %arg0, %c0_i32, %c0_i32_0 : i32, i32, i32
  }
  func.func @transform_3(%arg0: i32) -> (i32, i32, i32) {
    %c0_i32 = arith.constant 0 : i32
    %c0_i32_0 = arith.constant 0 : i32
    %c0_i32_1 = arith.constant 0 : i32
    return %arg0, %c0_i32, %c0_i32_0 : i32, i32, i32
  }
}

module attributes {stable_mosaic.version = 11 : i64} {
  func.func @_matmul_res_ln_kernel(%arg0: i32, %arg1: i32, %arg2: memref<16x32xf32, #tpu.memory_space<vmem>>, %arg3: memref<32x32xf32, #tpu.memory_space<vmem>>, %arg4: memref<1x32xf32, #tpu.memory_space<vmem>>, %arg5: memref<16x32xf32, #tpu.memory_space<vmem>>, %arg6: memref<1x32xf32, #tpu.memory_space<vmem>>, %arg7: memref<1x32xf32, #tpu.memory_space<vmem>>, %arg8: memref<16x32xf32, #tpu.memory_space<vmem>>, %arg9: memref<16x32xf32, #tpu.memory_space<vmem>>) attributes {dimension_semantics = [#tpu.dimension_semantics<parallel>, #tpu.dimension_semantics<arbitrary>], iteration_bounds = array<i64: 1, 1>, scalar_prefetch = 0 : i64, scratch_operands = 1 : i64, tpu.core_type = #tpu.core_type<tc>, window_params = [{transform_indices = @transform_0, window_bounds = array<i64: 16, 32>}, {transform_indices = @transform_1, window_bounds = array<i64: 32, 32>}, {pipeline_mode = #tpu.pipeline_mode<synchronous>, transform_indices = @transform_2, window_bounds = array<i64: 1, 32>}, {transform_indices = @transform_3, window_bounds = array<i64: 16, 32>}, {pipeline_mode = #tpu.pipeline_mode<synchronous>, transform_indices = @transform_4, window_bounds = array<i64: 1, 32>}, {pipeline_mode = #tpu.pipeline_mode<synchronous>, transform_indices = @transform_5, window_bounds = array<i64: 1, 32>}, {transform_indices = @transform_6, window_bounds = array<i64: 16, 32>}]} {
    %c0_i32 = arith.constant 0 : i32
    %0 = arith.cmpi eq, %arg1, %c0_i32 : i32
    %1 = arith.extui %0 : i1 to i32
    %c0_i32_0 = arith.constant 0 : i32
    %2 = arith.cmpi ne, %1, %c0_i32_0 : i32
    scf.if %2 {
      %cst_10 = arith.constant 0.000000e+00 : f32
      %12 = vector.broadcast %cst_10 : f32 to vector<16x32xf32>
      %c0_11 = arith.constant 0 : index
      %c0_12 = arith.constant 0 : index
      %13 = vector.load %arg9[%c0_11, %c0_12] : memref<16x32xf32, #tpu.memory_space<vmem>>, vector<16x32xf32>
      tpu.vector_store %arg9[%c0_11, %c0_12], %12 {strides = array<i32>} : memref<16x32xf32, #tpu.memory_space<vmem>>, vector<16x32xf32>,
    } else {
    }
    %c0 = arith.constant 0 : index
    %c0_1 = arith.constant 0 : index
    %3 = vector.load %arg9[%c0, %c0_1] : memref<16x32xf32, #tpu.memory_space<vmem>>, vector<16x32xf32>
    %c0_2 = arith.constant 0 : index
    %c0_3 = arith.constant 0 : index
    %4 = vector.load %arg2[%c0_2, %c0_3] : memref<16x32xf32, #tpu.memory_space<vmem>>, vector<16x32xf32>
    %c0_4 = arith.constant 0 : index
    %c0_5 = arith.constant 0 : index
    %5 = vector.load %arg3[%c0_4, %c0_5] : memref<32x32xf32, #tpu.memory_space<vmem>>, vector<32x32xf32>
    %cst = arith.constant dense<0.000000e+00> : vector<16x32xf32>
    %6 = tpu.matmul %4, %5, %cst {dimension_numbers = #tpu.dot_dimension_numbers<[1], [0], [0], [1], [0, 0, 1, 1], [], []>} : vector<16x32xf32>, vector<32x32xf32>, vector<16x32xf32> -> vector<16x32xf32>
    %7 = arith.addf %3, %6 : vector<16x32xf32>
    %c0_6 = arith.constant 0 : index
    %c0_7 = arith.constant 0 : index
    %8 = vector.load %arg9[%c0_6, %c0_7] : memref<16x32xf32, #tpu.memory_space<vmem>>, vector<16x32xf32>
    tpu.vector_store %arg9[%c0_6, %c0_7], %7 {strides = array<i32>} : memref<16x32xf32, #tpu.memory_space<vmem>>, vector<16x32xf32>,
    %c0_i32_8 = arith.constant 0 : i32
    %9 = arith.cmpi eq, %arg1, %c0_i32_8 : i32
    %10 = arith.extui %9 : i1 to i32
    %c0_i32_9 = arith.constant 0 : i32
    %11 = arith.cmpi ne, %10, %c0_i32_9 : i32
    scf.if %11 {
      %c0_10 = arith.constant 0 : index
      %c0_11 = arith.constant 0 : index
      %12 = vector.load %arg9[%c0_10, %c0_11] : memref<16x32xf32, #tpu.memory_space<vmem>>, vector<16x32xf32>
      %c0_12 = arith.constant 0 : index
      %c0_13 = arith.constant 0 : index
      %13 = vector.load %arg4[%c0_12, %c0_13] : memref<1x32xf32, #tpu.memory_space<vmem>>, vector<1x32xf32>
      %14 = vector.broadcast %13 : vector<1x32xf32> to vector<16x32xf32>
      %15 = arith.addf %12, %14 : vector<16x32xf32>
      %c0_14 = arith.constant 0 : index
      %c0_15 = arith.constant 0 : index
      %16 = vector.load %arg5[%c0_14, %c0_15] : memref<16x32xf32, #tpu.memory_space<vmem>>, vector<16x32xf32>
      %17 = arith.addf %15, %16 : vector<16x32xf32>
      %cst_16 = arith.constant dense<0.000000e+00> : vector<16xf32>
      %18 = vector.multi_reduction <add>, %17, %cst_16 [1] : vector<16x32xf32> to vector<16xf32>
      %19 = vector.shape_cast %18 : vector<16xf32> to vector<16x1xf32>
      %cst_17 = arith.constant 3.200000e+01 : f32
      %20 = vector.broadcast %cst_17 : f32 to vector<16x1xf32>
      %21 = arith.divf %19, %20 : vector<16x1xf32>
      %22 = vector.broadcast %21 : vector<16x1xf32> to vector<16x32xf32>
      %23 = arith.subf %17, %22 : vector<16x32xf32>
      %24 = arith.mulf %23, %23 : vector<16x32xf32>
      %cst_18 = arith.constant dense<0.000000e+00> : vector<16xf32>
      %25 = vector.multi_reduction <add>, %24, %cst_18 [1] : vector<16x32xf32> to vector<16xf32>
      %26 = vector.shape_cast %25 : vector<16xf32> to vector<16x1xf32>
      %cst_19 = arith.constant 3.200000e+01 : f32
      %27 = vector.broadcast %cst_19 : f32 to vector<16x1xf32>
      %28 = arith.divf %26, %27 : vector<16x1xf32>
      %29 = vector.broadcast %21 : vector<16x1xf32> to vector<16x32xf32>
      %30 = arith.subf %17, %29 : vector<16x32xf32>
      %cst_20 = arith.constant 9.99999974E-6 : f32
      %31 = vector.broadcast %cst_20 : f32 to vector<16x1xf32>
      %32 = arith.addf %28, %31 : vector<16x1xf32>
      %33 = math.rsqrt %32 : vector<16x1xf32>
      %34 = vector.broadcast %33 : vector<16x1xf32> to vector<16x32xf32>
      %35 = arith.mulf %30, %34 : vector<16x32xf32>
      %c0_21 = arith.constant 0 : index
      %c0_22 = arith.constant 0 : index
      %36 = vector.load %arg6[%c0_21, %c0_22] : memref<1x32xf32, #tpu.memory_space<vmem>>, vector<1x32xf32>
      %37 = vector.broadcast %36 : vector<1x32xf32> to vector<16x32xf32>
      %38 = arith.mulf %35, %37 : vector<16x32xf32>
      %c0_23 = arith.constant 0 : index
      %c0_24 = arith.constant 0 : index
      %39 = vector.load %arg7[%c0_23, %c0_24] : memref<1x32xf32, #tpu.memory_space<vmem>>, vector<1x32xf32>
      %40 = vector.broadcast %39 : vector<1x32xf32> to vector<16x32xf32>
      %41 = arith.addf %38, %40 : vector<16x32xf32>
      %c0_25 = arith.constant 0 : index
      %c0_26 = arith.constant 0 : index
      %42 = vector.load %arg8[%c0_25, %c0_26] : memref<16x32xf32, #tpu.memory_space<vmem>>, vector<16x32xf32>
      tpu.vector_store %arg8[%c0_25, %c0_26], %41 {strides = array<i32>} : memref<16x32xf32, #tpu.memory_space<vmem>>, vector<16x32xf32>,
    } else {
    }
    return
  }
  func.func @transform_0(%arg0: i32, %arg1: i32) -> (i32, i32) {
    %c0_i32 = arith.constant 0 : i32
    return %arg0, %arg1 : i32, i32
  }
  func.func @transform_1(%arg0: i32, %arg1: i32) -> (i32, i32) {
    %c0_i32 = arith.constant 0 : i32
    %c0_i32_0 = arith.constant 0 : i32
    return %arg1, %c0_i32 : i32, i32
  }
  func.func @transform_2(%arg0: i32, %arg1: i32) -> (i32, i32) {
    %c0_i32 = arith.constant 0 : i32
    %c0_i32_0 = arith.constant 0 : i32
    %c0_i32_1 = arith.constant 0 : i32
    return %c0_i32, %c0_i32_0 : i32, i32
  }
  func.func @transform_3(%arg0: i32, %arg1: i32) -> (i32, i32) {
    %c0_i32 = arith.constant 0 : i32
    %c0_i32_0 = arith.constant 0 : i32
    return %arg0, %c0_i32 : i32, i32
  }
  func.func @transform_4(%arg0: i32, %arg1: i32) -> (i32, i32) {
    %c0_i32 = arith.constant 0 : i32
    %c0_i32_0 = arith.constant 0 : i32
    %c0_i32_1 = arith.constant 0 : i32
    return %c0_i32, %c0_i32_0 : i32, i32
  }
  func.func @transform_5(%arg0: i32, %arg1: i32) -> (i32, i32) {
    %c0_i32 = arith.constant 0 : i32
    %c0_i32_0 = arith.constant 0 : i32
    %c0_i32_1 = arith.constant 0 : i32
    return %c0_i32, %c0_i32_0 : i32, i32
  }
  func.func @transform_6(%arg0: i32, %arg1: i32) -> (i32, i32) {
    %c0_i32 = arith.constant 0 : i32
    %c0_i32_0 = arith.constant 0 : i32
    return %arg0, %c0_i32 : i32, i32
  }
}

module attributes {stable_mosaic.version = 11 : i64} {
  func.func @_matmul_kernel(%arg0: i32, %arg1: i32, %arg2: i32, %arg3: memref<16x32xf32, #tpu.memory_space<vmem>>, %arg4: memref<32x32xf32, #tpu.memory_space<vmem>>, %arg5: memref<1x32xf32, #tpu.memory_space<vmem>>, %arg6: memref<16x32xf32, #tpu.memory_space<vmem>>, %arg7: memref<16x32xf32, #tpu.memory_space<vmem>>) attributes {dimension_semantics = [#tpu.dimension_semantics<parallel>, #tpu.dimension_semantics<parallel>, #tpu.dimension_semantics<arbitrary>], iteration_bounds = array<i64: 1, 1, 1>, scalar_prefetch = 0 : i64, scratch_operands = 1 : i64, tpu.core_type = #tpu.core_type<tc>, window_params = [{transform_indices = @transform_0, window_bounds = array<i64: 16, 32>}, {transform_indices = @transform_1, window_bounds = array<i64: 32, 32>}, {transform_indices = @transform_2, window_bounds = array<i64: 1, 32>}, {transform_indices = @transform_3, window_bounds = array<i64: 16, 32>}]} {
    %c0_i32 = arith.constant 0 : i32
    %0 = arith.cmpi eq, %arg2, %c0_i32 : i32
    %1 = arith.extui %0 : i1 to i32
    %c0_i32_0 = arith.constant 0 : i32
    %2 = arith.cmpi ne, %1, %c0_i32_0 : i32
    scf.if %2 {
      %cst_10 = arith.constant 0.000000e+00 : f32
      %12 = vector.broadcast %cst_10 : f32 to vector<16x32xf32>
      %c0_11 = arith.constant 0 : index
      %c0_12 = arith.constant 0 : index
      %13 = vector.load %arg7[%c0_11, %c0_12] : memref<16x32xf32, #tpu.memory_space<vmem>>, vector<16x32xf32>
      tpu.vector_store %arg7[%c0_11, %c0_12], %12 {strides = array<i32>} : memref<16x32xf32, #tpu.memory_space<vmem>>, vector<16x32xf32>,
    } else {
    }
    %c0 = arith.constant 0 : index
    %c0_1 = arith.constant 0 : index
    %3 = vector.load %arg7[%c0, %c0_1] : memref<16x32xf32, #tpu.memory_space<vmem>>, vector<16x32xf32>
    %c0_2 = arith.constant 0 : index
    %c0_3 = arith.constant 0 : index
    %4 = vector.load %arg3[%c0_2, %c0_3] : memref<16x32xf32, #tpu.memory_space<vmem>>, vector<16x32xf32>
    %c0_4 = arith.constant 0 : index
    %c0_5 = arith.constant 0 : index
    %5 = vector.load %arg4[%c0_4, %c0_5] : memref<32x32xf32, #tpu.memory_space<vmem>>, vector<32x32xf32>
    %cst = arith.constant dense<0.000000e+00> : vector<16x32xf32>
    %6 = tpu.matmul %4, %5, %cst {dimension_numbers = #tpu.dot_dimension_numbers<[1], [0], [0], [1], [0, 0, 1, 1], [], []>} : vector<16x32xf32>, vector<32x32xf32>, vector<16x32xf32> -> vector<16x32xf32>
    %7 = arith.addf %3, %6 : vector<16x32xf32>
    %c0_6 = arith.constant 0 : index
    %c0_7 = arith.constant 0 : index
    %8 = vector.load %arg7[%c0_6, %c0_7] : memref<16x32xf32, #tpu.memory_space<vmem>>, vector<16x32xf32>
    tpu.vector_store %arg7[%c0_6, %c0_7], %7 {strides = array<i32>} : memref<16x32xf32, #tpu.memory_space<vmem>>, vector<16x32xf32>,
    %c0_i32_8 = arith.constant 0 : i32
    %9 = arith.cmpi eq, %arg2, %c0_i32_8 : i32
    %10 = arith.extui %9 : i1 to i32
    %c0_i32_9 = arith.constant 0 : i32
    %11 = arith.cmpi ne, %10, %c0_i32_9 : i32
    scf.if %11 {
      %c0_10 = arith.constant 0 : index
      %c0_11 = arith.constant 0 : index
      %12 = vector.load %arg7[%c0_10, %c0_11] : memref<16x32xf32, #tpu.memory_space<vmem>>, vector<16x32xf32>
      %c0_12 = arith.constant 0 : index
      %c0_13 = arith.constant 0 : index
      %13 = vector.load %arg5[%c0_12, %c0_13] : memref<1x32xf32, #tpu.memory_space<vmem>>, vector<1x32xf32>
      %14 = vector.broadcast %13 : vector<1x32xf32> to vector<16x32xf32>
      %15 = arith.addf %12, %14 : vector<16x32xf32>
      %c0_14 = arith.constant 0 : index
      %c0_15 = arith.constant 0 : index
      %16 = vector.load %arg6[%c0_14, %c0_15] : memref<16x32xf32, #tpu.memory_space<vmem>>, vector<16x32xf32>
      tpu.vector_store %arg6[%c0_14, %c0_15], %15 {strides = array<i32>} : memref<16x32xf32, #tpu.memory_space<vmem>>, vector<16x32xf32>,
    } else {
    }
    return
  }
  func.func @transform_0(%arg0: i32, %arg1: i32, %arg2: i32) -> (i32, i32) {
    %c0_i32 = arith.constant 0 : i32
    return %arg0, %arg2 : i32, i32
  }
  func.func @transform_1(%arg0: i32, %arg1: i32, %arg2: i32) -> (i32, i32) {
    %c0_i32 = arith.constant 0 : i32
    return %arg2, %arg1 : i32, i32
  }
  func.func @transform_2(%arg0: i32, %arg1: i32, %arg2: i32) -> (i32, i32) {
    %c0_i32 = arith.constant 0 : i32
    %c0_i32_0 = arith.constant 0 : i32
    return %c0_i32, %arg1 : i32, i32
  }
  func.func @transform_3(%arg0: i32, %arg1: i32, %arg2: i32) -> (i32, i32) {
    %c0_i32 = arith.constant 0 : i32
    return %arg0, %arg1 : i32, i32
  }
}

module attributes {stable_mosaic.version = 11 : i64} {
  func.func @_matmul_kernel(%arg0: i32, %arg1: i32, %arg2: i32, %arg3: memref<16x32xf32, #tpu.memory_space<vmem>>, %arg4: memref<32x64xf32, #tpu.memory_space<vmem>>, %arg5: memref<1x64xf32, #tpu.memory_space<vmem>>, %arg6: memref<16x64xf32, #tpu.memory_space<vmem>>, %arg7: memref<16x64xf32, #tpu.memory_space<vmem>>) attributes {dimension_semantics = [#tpu.dimension_semantics<parallel>, #tpu.dimension_semantics<parallel>, #tpu.dimension_semantics<arbitrary>], iteration_bounds = array<i64: 1, 1, 1>, scalar_prefetch = 0 : i64, scratch_operands = 1 : i64, tpu.core_type = #tpu.core_type<tc>, window_params = [{transform_indices = @transform_0, window_bounds = array<i64: 16, 32>}, {transform_indices = @transform_1, window_bounds = array<i64: 32, 64>}, {transform_indices = @transform_2, window_bounds = array<i64: 1, 64>}, {transform_indices = @transform_3, window_bounds = array<i64: 16, 64>}]} {
    %c0_i32 = arith.constant 0 : i32
    %0 = arith.cmpi eq, %arg2, %c0_i32 : i32
    %1 = arith.extui %0 : i1 to i32
    %c0_i32_0 = arith.constant 0 : i32
    %2 = arith.cmpi ne, %1, %c0_i32_0 : i32
    scf.if %2 {
      %cst_10 = arith.constant 0.000000e+00 : f32
      %12 = vector.broadcast %cst_10 : f32 to vector<16x64xf32>
      %c0_11 = arith.constant 0 : index
      %c0_12 = arith.constant 0 : index
      %13 = vector.load %arg7[%c0_11, %c0_12] : memref<16x64xf32, #tpu.memory_space<vmem>>, vector<16x64xf32>
      tpu.vector_store %arg7[%c0_11, %c0_12], %12 {strides = array<i32>} : memref<16x64xf32, #tpu.memory_space<vmem>>, vector<16x64xf32>,
    } else {
    }
    %c0 = arith.constant 0 : index
    %c0_1 = arith.constant 0 : index
    %3 = vector.load %arg7[%c0, %c0_1] : memref<16x64xf32, #tpu.memory_space<vmem>>, vector<16x64xf32>
    %c0_2 = arith.constant 0 : index
    %c0_3 = arith.constant 0 : index
    %4 = vector.load %arg3[%c0_2, %c0_3] : memref<16x32xf32, #tpu.memory_space<vmem>>, vector<16x32xf32>
    %c0_4 = arith.constant 0 : index
    %c0_5 = arith.constant 0 : index
    %5 = vector.load %arg4[%c0_4, %c0_5] : memref<32x64xf32, #tpu.memory_space<vmem>>, vector<32x64xf32>
    %cst = arith.constant dense<0.000000e+00> : vector<16x64xf32>
    %6 = tpu.matmul %4, %5, %cst {dimension_numbers = #tpu.dot_dimension_numbers<[1], [0], [0], [1], [0, 0, 1, 1], [], []>} : vector<16x32xf32>, vector<32x64xf32>, vector<16x64xf32> -> vector<16x64xf32>
    %7 = arith.addf %3, %6 : vector<16x64xf32>
    %c0_6 = arith.constant 0 : index
    %c0_7 = arith.constant 0 : index
    %8 = vector.load %arg7[%c0_6, %c0_7] : memref<16x64xf32, #tpu.memory_space<vmem>>, vector<16x64xf32>
    tpu.vector_store %arg7[%c0_6, %c0_7], %7 {strides = array<i32>} : memref<16x64xf32, #tpu.memory_space<vmem>>, vector<16x64xf32>,
    %c0_i32_8 = arith.constant 0 : i32
    %9 = arith.cmpi eq, %arg2, %c0_i32_8 : i32
    %10 = arith.extui %9 : i1 to i32
    %c0_i32_9 = arith.constant 0 : i32
    %11 = arith.cmpi ne, %10, %c0_i32_9 : i32
    scf.if %11 {
      %c0_10 = arith.constant 0 : index
      %c0_11 = arith.constant 0 : index
      %12 = vector.load %arg7[%c0_10, %c0_11] : memref<16x64xf32, #tpu.memory_space<vmem>>, vector<16x64xf32>
      %c0_12 = arith.constant 0 : index
      %c0_13 = arith.constant 0 : index
      %13 = vector.load %arg5[%c0_12, %c0_13] : memref<1x64xf32, #tpu.memory_space<vmem>>, vector<1x64xf32>
      %14 = vector.broadcast %13 : vector<1x64xf32> to vector<16x64xf32>
      %15 = arith.addf %12, %14 : vector<16x64xf32>
      %c0_14 = arith.constant 0 : index
      %c0_15 = arith.constant 0 : index
      %16 = vector.load %arg6[%c0_14, %c0_15] : memref<16x64xf32, #tpu.memory_space<vmem>>, vector<16x64xf32>
      tpu.vector_store %arg6[%c0_14, %c0_15], %15 {strides = array<i32>} : memref<16x64xf32, #tpu.memory_space<vmem>>, vector<16x64xf32>,
    } else {
    }
    return
  }
  func.func @transform_0(%arg0: i32, %arg1: i32, %arg2: i32) -> (i32, i32) {
    %c0_i32 = arith.constant 0 : i32
    return %arg0, %arg2 : i32, i32
  }
  func.func @transform_1(%arg0: i32, %arg1: i32, %arg2: i32) -> (i32, i32) {
    %c0_i32 = arith.constant 0 : i32
    return %arg2, %arg1 : i32, i32
  }
  func.func @transform_2(%arg0: i32, %arg1: i32, %arg2: i32) -> (i32, i32) {
    %c0_i32 = arith.constant 0 : i32
    %c0_i32_0 = arith.constant 0 : i32
    return %c0_i32, %arg1 : i32, i32
  }
  func.func @transform_3(%arg0: i32, %arg1: i32, %arg2: i32) -> (i32, i32) {
    %c0_i32 = arith.constant 0 : i32
    return %arg0, %arg1 : i32, i32
  }
}

module attributes {stable_mosaic.version = 11 : i64} {
  func.func @_matmul_kernel(%arg0: i32, %arg1: i32, %arg2: i32, %arg3: memref<16x32xf32, #tpu.memory_space<vmem>>, %arg4: memref<32x128xf32, #tpu.memory_space<vmem>>, %arg5: memref<1x128xf32, #tpu.memory_space<vmem>>, %arg6: memref<16x128xf32, #tpu.memory_space<vmem>>, %arg7: memref<16x128xf32, #tpu.memory_space<vmem>>) attributes {dimension_semantics = [#tpu.dimension_semantics<parallel>, #tpu.dimension_semantics<parallel>, #tpu.dimension_semantics<arbitrary>], iteration_bounds = array<i64: 1, 1, 1>, scalar_prefetch = 0 : i64, scratch_operands = 1 : i64, tpu.core_type = #tpu.core_type<tc>, window_params = [{transform_indices = @transform_0, window_bounds = array<i64: 16, 32>}, {transform_indices = @transform_1, window_bounds = array<i64: 32, 128>}, {transform_indices = @transform_2, window_bounds = array<i64: 1, 128>}, {transform_indices = @transform_3, window_bounds = array<i64: 16, 128>}]} {
    %c0_i32 = arith.constant 0 : i32
    %0 = arith.cmpi eq, %arg2, %c0_i32 : i32
    %1 = arith.extui %0 : i1 to i32
    %c0_i32_0 = arith.constant 0 : i32
    %2 = arith.cmpi ne, %1, %c0_i32_0 : i32
    scf.if %2 {
      %cst_10 = arith.constant 0.000000e+00 : f32
      %12 = vector.broadcast %cst_10 : f32 to vector<16x128xf32>
      %c0_11 = arith.constant 0 : index
      %c0_12 = arith.constant 0 : index
      %13 = vector.load %arg7[%c0_11, %c0_12] : memref<16x128xf32, #tpu.memory_space<vmem>>, vector<16x128xf32>
      tpu.vector_store %arg7[%c0_11, %c0_12], %12 {strides = array<i32>} : memref<16x128xf32, #tpu.memory_space<vmem>>, vector<16x128xf32>,
    } else {
    }
    %c0 = arith.constant 0 : index
    %c0_1 = arith.constant 0 : index
    %3 = vector.load %arg7[%c0, %c0_1] : memref<16x128xf32, #tpu.memory_space<vmem>>, vector<16x128xf32>
    %c0_2 = arith.constant 0 : index
    %c0_3 = arith.constant 0 : index
    %4 = vector.load %arg3[%c0_2, %c0_3] : memref<16x32xf32, #tpu.memory_space<vmem>>, vector<16x32xf32>
    %c0_4 = arith.constant 0 : index
    %c0_5 = arith.constant 0 : index
    %5 = vector.load %arg4[%c0_4, %c0_5] : memref<32x128xf32, #tpu.memory_space<vmem>>, vector<32x128xf32>
    %cst = arith.constant dense<0.000000e+00> : vector<16x128xf32>
    %6 = tpu.matmul %4, %5, %cst {dimension_numbers = #tpu.dot_dimension_numbers<[1], [0], [0], [1], [0, 0, 1, 1], [], []>} : vector<16x32xf32>, vector<32x128xf32>, vector<16x128xf32> -> vector<16x128xf32>
    %7 = arith.addf %3, %6 : vector<16x128xf32>
    %c0_6 = arith.constant 0 : index
    %c0_7 = arith.constant 0 : index
    %8 = vector.load %arg7[%c0_6, %c0_7] : memref<16x128xf32, #tpu.memory_space<vmem>>, vector<16x128xf32>
    tpu.vector_store %arg7[%c0_6, %c0_7], %7 {strides = array<i32>} : memref<16x128xf32, #tpu.memory_space<vmem>>, vector<16x128xf32>,
    %c0_i32_8 = arith.constant 0 : i32
    %9 = arith.cmpi eq, %arg2, %c0_i32_8 : i32
    %10 = arith.extui %9 : i1 to i32
    %c0_i32_9 = arith.constant 0 : i32
    %11 = arith.cmpi ne, %10, %c0_i32_9 : i32
    scf.if %11 {
      %c0_10 = arith.constant 0 : index
      %c0_11 = arith.constant 0 : index
      %12 = vector.load %arg7[%c0_10, %c0_11] : memref<16x128xf32, #tpu.memory_space<vmem>>, vector<16x128xf32>
      %c0_12 = arith.constant 0 : index
      %c0_13 = arith.constant 0 : index
      %13 = vector.load %arg5[%c0_12, %c0_13] : memref<1x128xf32, #tpu.memory_space<vmem>>, vector<1x128xf32>
      %14 = vector.broadcast %13 : vector<1x128xf32> to vector<16x128xf32>
      %15 = arith.addf %12, %14 : vector<16x128xf32>
      %cst_14 = arith.constant 5.000000e-01 : f32
      %16 = vector.broadcast %cst_14 : f32 to vector<16x128xf32>
      %17 = arith.mulf %16, %15 : vector<16x128xf32>
      %cst_15 = arith.constant 4.471500e-02 : f32
      %18 = vector.broadcast %cst_15 : f32 to vector<16x128xf32>
      %19 = arith.mulf %18, %15 : vector<16x128xf32>
      %20 = arith.mulf %19, %15 : vector<16x128xf32>
      %21 = arith.mulf %20, %15 : vector<16x128xf32>
      %22 = arith.addf %15, %21 : vector<16x128xf32>
      %cst_16 = arith.constant 0.797884583 : f32
      %23 = vector.broadcast %cst_16 : f32 to vector<16x128xf32>
      %24 = arith.mulf %23, %22 : vector<16x128xf32>
      %25 = math.tanh %24 : vector<16x128xf32>
      %cst_17 = arith.constant 1.000000e+00 : f32
      %26 = vector.broadcast %cst_17 : f32 to vector<16x128xf32>
      %27 = arith.addf %26, %25 : vector<16x128xf32>
      %28 = arith.mulf %17, %27 : vector<16x128xf32>
      %c0_18 = arith.constant 0 : index
      %c0_19 = arith.constant 0 : index
      %29 = vector.load %arg6[%c0_18, %c0_19] : memref<16x128xf32, #tpu.memory_space<vmem>>, vector<16x128xf32>
      tpu.vector_store %arg6[%c0_18, %c0_19], %28 {strides = array<i32>} : memref<16x128xf32, #tpu.memory_space<vmem>>, vector<16x128xf32>,
    } else {
    }
    return
  }
  func.func @transform_0(%arg0: i32, %arg1: i32, %arg2: i32) -> (i32, i32) {
    %c0_i32 = arith.constant 0 : i32
    return %arg0, %arg2 : i32, i32
  }
  func.func @transform_1(%arg0: i32, %arg1: i32, %arg2: i32) -> (i32, i32) {
    %c0_i32 = arith.constant 0 : i32
    return %arg2, %arg1 : i32, i32
  }
  func.func @transform_2(%arg0: i32, %arg1: i32, %arg2: i32) -> (i32, i32) {
    %c0_i32 = arith.constant 0 : i32
    %c0_i32_0 = arith.constant 0 : i32
    return %c0_i32, %arg1 : i32, i32
  }
  func.func @transform_3(%arg0: i32, %arg1: i32, %arg2: i32) -> (i32, i32) {
    %c0_i32 = arith.constant 0 : i32
    return %arg0, %arg1 : i32, i32
  }
}

module attributes {stable_mosaic.version = 11 : i64} {
  func.func @_attn_kernel(%arg0: i32, %arg1: memref<4x8x8xf32, #tpu.memory_space<vmem>>, %arg2: memref<4x8x8xf32, #tpu.memory_space<vmem>>, %arg3: memref<4x8x8xf32, #tpu.memory_space<vmem>>, %arg4: memref<4x8x8xf32, #tpu.memory_space<vmem>>) attributes {dimension_semantics = [#tpu.dimension_semantics<parallel>], iteration_bounds = array<i64: 2>, scalar_prefetch = 0 : i64, scratch_operands = 0 : i64, tpu.core_type = #tpu.core_type<tc>, window_params = [{transform_indices = @transform_0, window_bounds = array<i64: 4, 8, 8>}, {transform_indices = @transform_1, window_bounds = array<i64: 4, 8, 8>}, {transform_indices = @transform_2, window_bounds = array<i64: 4, 8, 8>}, {transform_indices = @transform_3, window_bounds = array<i64: 4, 8, 8>}]} {
    %c0 = arith.constant 0 : index
    %c0_0 = arith.constant 0 : index
    %c0_1 = arith.constant 0 : index
    %0 = vector.load %arg1[%c0, %c0_0, %c0_1] : memref<4x8x8xf32, #tpu.memory_space<vmem>>, vector<4x8x8xf32>
    %cst = arith.constant 0.353553385 : f32
    %1 = vector.broadcast %cst : f32 to vector<4x8x8xf32>
    %2 = arith.mulf %0, %1 : vector<4x8x8xf32>
    %c0_2 = arith.constant 0 : index
    %c0_3 = arith.constant 0 : index
    %c0_4 = arith.constant 0 : index
    %3 = vector.load %arg2[%c0_2, %c0_3, %c0_4] : memref<4x8x8xf32, #tpu.memory_space<vmem>>, vector<4x8x8xf32>
    %c0_5 = arith.constant 0 : index
    %c0_6 = arith.constant 0 : index
    %c0_7 = arith.constant 0 : index
    %4 = vector.load %arg3[%c0_5, %c0_6, %c0_7] : memref<4x8x8xf32, #tpu.memory_space<vmem>>, vector<4x8x8xf32>
    "tpu.trace_start"() <{level = 10 : i32, message = "gqd,gkd->gqk"}> : () -> ()
    %cst_8 = arith.constant dense<0.000000e+00> : vector<4x8x8xf32>
    %5 = tpu.matmul %2, %3, %cst_8 {dimension_numbers = #tpu.dot_dimension_numbers<[2], [2], [1], [1], [0, 0, 0, 1, 1, 1], [0], [0]>} : vector<4x8x8xf32>, vector<4x8x8xf32>, vector<4x8x8xf32> -> vector<4x8x8xf32>
    "tpu.trace_stop"() : () -> ()
    %cst_9 = arith.constant dense<0xFF800000> : vector<4x8xf32>
    %6 = vector.multi_reduction <maximumf>, %5, %cst_9 [2] : vector<4x8x8xf32> to vector<4x8xf32>
    %7 = vector.shape_cast %6 : vector<4x8xf32> to vector<4x8x1xf32>
    %8 = vector.broadcast %7 : vector<4x8x1xf32> to vector<4x8x8xf32>
    %9 = arith.subf %5, %8 : vector<4x8x8xf32>
    %10 = math.exp %9 : vector<4x8x8xf32>
    %cst_10 = arith.constant dense<0.000000e+00> : vector<4x8xf32>
    %11 = vector.multi_reduction <add>, %10, %cst_10 [2] : vector<4x8x8xf32> to vector<4x8xf32>
    %12 = vector.shape_cast %11 : vector<4x8xf32> to vector<4x8x1xf32>
    %13 = tpu.reciprocal %12 {approx = true} : vector<4x8x1xf32> -> vector<4x8x1xf32>
    %14 = vector.broadcast %13 : vector<4x8x1xf32> to vector<4x8x8xf32>
    %15 = arith.mulf %10, %14 : vector<4x8x8xf32>
    "tpu.trace_start"() <{level = 10 : i32, message = "gqk,gkd->gqd"}> : () -> ()
    %cst_11 = arith.constant dense<0.000000e+00> : vector<4x8x8xf32>
    %16 = tpu.matmul %15, %4, %cst_11 {dimension_numbers = #tpu.dot_dimension_numbers<[2], [1], [1], [2], [0, 0, 0, 1, 1, 2], [0], [0]>} : vector<4x8x8xf32>, vector<4x8x8xf32>, vector<4x8x8xf32> -> vector<4x8x8xf32>
    "tpu.trace_stop"() : () -> ()
    %c0_12 = arith.constant 0 : index
    %c0_13 = arith.constant 0 : index
    %c0_14 = arith.constant 0 : index
    %17 = vector.load %arg4[%c0_12, %c0_13, %c0_14] : memref<4x8x8xf32, #tpu.memory_space<vmem>>, vector<4x8x8xf32>
    tpu.vector_store %arg4[%c0_12, %c0_13, %c0_14], %16 {strides = array<i32>} : memref<4x8x8xf32, #tpu.memory_space<vmem>>, vector<4x8x8xf32>,
    return
  }
  func.func @transform_0(%arg0: i32) -> (i32, i32, i32) {
    %c0_i32 = arith.constant 0 : i32
    %c0_i32_0 = arith.constant 0 : i32
    %c0_i32_1 = arith.constant 0 : i32
    return %arg0, %c0_i32, %c0_i32_0 : i32, i32, i32
  }
  func.func @transform_1(%arg0: i32) -> (i32, i32, i32) {
    %c0_i32 = arith.constant 0 : i32
    %c0_i32_0 = arith.constant 0 : i32
    %c0_i32_1 = arith.constant 0 : i32
    return %arg0, %c0_i32, %c0_i32_0 : i32, i32, i32
  }
  func.func @transform_2(%arg0: i32) -> (i32, i32, i32) {
    %c0_i32 = arith.constant 0 : i32
    %c0_i32_0 = arith.constant 0 : i32
    %c0_i32_1 = arith.constant 0 : i32
    return %arg0, %c0_i32, %c0_i32_0 : i32, i32, i32
  }
  func.func @transform_3(%arg0: i32) -> (i32, i32, i32) {
    %c0_i32 = arith.constant 0 : i32
    %c0_i32_0 = arith.constant 0 : i32
    %c0_i32_1 = arith.constant 0 : i32
    return %arg0, %c0_i32, %c0_i32_0 : i32, i32, i32
  }
}

module attributes {stable_mosaic.version = 11 : i64} {
  func.func @_matmul_res_ln_kernel(%arg0: i32, %arg1: i32, %arg2: memref<16x128xf32, #tpu.memory_space<vmem>>, %arg3: memref<128x32xf32, #tpu.memory_space<vmem>>, %arg4: memref<1x32xf32, #tpu.memory_space<vmem>>, %arg5: memref<16x32xf32, #tpu.memory_space<vmem>>, %arg6: memref<1x32xf32, #tpu.memory_space<vmem>>, %arg7: memref<1x32xf32, #tpu.memory_space<vmem>>, %arg8: memref<16x32xf32, #tpu.memory_space<vmem>>, %arg9: memref<16x32xf32, #tpu.memory_space<vmem>>) attributes {dimension_semantics = [#tpu.dimension_semantics<parallel>, #tpu.dimension_semantics<arbitrary>], iteration_bounds = array<i64: 1, 1>, scalar_prefetch = 0 : i64, scratch_operands = 1 : i64, tpu.core_type = #tpu.core_type<tc>, window_params = [{transform_indices = @transform_0, window_bounds = array<i64: 16, 128>}, {transform_indices = @transform_1, window_bounds = array<i64: 128, 32>}, {pipeline_mode = #tpu.pipeline_mode<synchronous>, transform_indices = @transform_2, window_bounds = array<i64: 1, 32>}, {transform_indices = @transform_3, window_bounds = array<i64: 16, 32>}, {pipeline_mode = #tpu.pipeline_mode<synchronous>, transform_indices = @transform_4, window_bounds = array<i64: 1, 32>}, {pipeline_mode = #tpu.pipeline_mode<synchronous>, transform_indices = @transform_5, window_bounds = array<i64: 1, 32>}, {transform_indices = @transform_6, window_bounds = array<i64: 16, 32>}]} {
    %c0_i32 = arith.constant 0 : i32
    %0 = arith.cmpi eq, %arg1, %c0_i32 : i32
    %1 = arith.extui %0 : i1 to i32
    %c0_i32_0 = arith.constant 0 : i32
    %2 = arith.cmpi ne, %1, %c0_i32_0 : i32
    scf.if %2 {
      %cst_10 = arith.constant 0.000000e+00 : f32
      %12 = vector.broadcast %cst_10 : f32 to vector<16x32xf32>
      %c0_11 = arith.constant 0 : index
      %c0_12 = arith.constant 0 : index
      %13 = vector.load %arg9[%c0_11, %c0_12] : memref<16x32xf32, #tpu.memory_space<vmem>>, vector<16x32xf32>
      tpu.vector_store %arg9[%c0_11, %c0_12], %12 {strides = array<i32>} : memref<16x32xf32, #tpu.memory_space<vmem>>, vector<16x32xf32>,
    } else {
    }
    %c0 = arith.constant 0 : index
    %c0_1 = arith.constant 0 : index
    %3 = vector.load %arg9[%c0, %c0_1] : memref<16x32xf32, #tpu.memory_space<vmem>>, vector<16x32xf32>
    %c0_2 = arith.constant 0 : index
    %c0_3 = arith.constant 0 : index
    %4 = vector.load %arg2[%c0_2, %c0_3] : memref<16x128xf32, #tpu.memory_space<vmem>>, vector<16x128xf32>
    %c0_4 = arith.constant 0 : index
    %c0_5 = arith.constant 0 : index
    %5 = vector.load %arg3[%c0_4, %c0_5] : memref<128x32xf32, #tpu.memory_space<vmem>>, vector<128x32xf32>
    %cst = arith.constant dense<0.000000e+00> : vector<16x32xf32>
    %6 = tpu.matmul %4, %5, %cst {dimension_numbers = #tpu.dot_dimension_numbers<[1], [0], [0], [1], [0, 0, 1, 1], [], []>} : vector<16x128xf32>, vector<128x32xf32>, vector<16x32xf32> -> vector<16x32xf32>
    %7 = arith.addf %3, %6 : vector<16x32xf32>
    %c0_6 = arith.constant 0 : index
    %c0_7 = arith.constant 0 : index
    %8 = vector.load %arg9[%c0_6, %c0_7] : memref<16x32xf32, #tpu.memory_space<vmem>>, vector<16x32xf32>
    tpu.vector_store %arg9[%c0_6, %c0_7], %7 {strides = array<i32>} : memref<16x32xf32, #tpu.memory_space<vmem>>, vector<16x32xf32>,
    %c0_i32_8 = arith.constant 0 : i32
    %9 = arith.cmpi eq, %arg1, %c0_i32_8 : i32
    %10 = arith.extui %9 : i1 to i32
    %c0_i32_9 = arith.constant 0 : i32
    %11 = arith.cmpi ne, %10, %c0_i32_9 : i32
    scf.if %11 {
      %c0_10 = arith.constant 0 : index
      %c0_11 = arith.constant 0 : index
      %12 = vector.load %arg9[%c0_10, %c0_11] : memref<16x32xf32, #tpu.memory_space<vmem>>, vector<16x32xf32>
      %c0_12 = arith.constant 0 : index
      %c0_13 = arith.constant 0 : index
      %13 = vector.load %arg4[%c0_12, %c0_13] : memref<1x32xf32, #tpu.memory_space<vmem>>, vector<1x32xf32>
      %14 = vector.broadcast %13 : vector<1x32xf32> to vector<16x32xf32>
      %15 = arith.addf %12, %14 : vector<16x32xf32>
      %c0_14 = arith.constant 0 : index
      %c0_15 = arith.constant 0 : index
      %16 = vector.load %arg5[%c0_14, %c0_15] : memref<16x32xf32, #tpu.memory_space<vmem>>, vector<16x32xf32>
      %17 = arith.addf %15, %16 : vector<16x32xf32>
      %cst_16 = arith.constant dense<0.000000e+00> : vector<16xf32>
      %18 = vector.multi_reduction <add>, %17, %cst_16 [1] : vector<16x32xf32> to vector<16xf32>
      %19 = vector.shape_cast %18 : vector<16xf32> to vector<16x1xf32>
      %cst_17 = arith.constant 3.200000e+01 : f32
      %20 = vector.broadcast %cst_17 : f32 to vector<16x1xf32>
      %21 = arith.divf %19, %20 : vector<16x1xf32>
      %22 = vector.broadcast %21 : vector<16x1xf32> to vector<16x32xf32>
      %23 = arith.subf %17, %22 : vector<16x32xf32>
      %24 = arith.mulf %23, %23 : vector<16x32xf32>
      %cst_18 = arith.constant dense<0.000000e+00> : vector<16xf32>
      %25 = vector.multi_reduction <add>, %24, %cst_18 [1] : vector<16x32xf32> to vector<16xf32>
      %26 = vector.shape_cast %25 : vector<16xf32> to vector<16x1xf32>
      %cst_19 = arith.constant 3.200000e+01 : f32
      %27 = vector.broadcast %cst_19 : f32 to vector<16x1xf32>
      %28 = arith.divf %26, %27 : vector<16x1xf32>
      %29 = vector.broadcast %21 : vector<16x1xf32> to vector<16x32xf32>
      %30 = arith.subf %17, %29 : vector<16x32xf32>
      %cst_20 = arith.constant 9.99999974E-6 : f32
      %31 = vector.broadcast %cst_20 : f32 to vector<16x1xf32>
      %32 = arith.addf %28, %31 : vector<16x1xf32>
      %33 = math.rsqrt %32 : vector<16x1xf32>
      %34 = vector.broadcast %33 : vector<16x1xf32> to vector<16x32xf32>
      %35 = arith.mulf %30, %34 : vector<16x32xf32>
      %c0_21 = arith.constant 0 : index
      %c0_22 = arith.constant 0 : index
      %36 = vector.load %arg6[%c0_21, %c0_22] : memref<1x32xf32, #tpu.memory_space<vmem>>, vector<1x32xf32>
      %37 = vector.broadcast %36 : vector<1x32xf32> to vector<16x32xf32>
      %38 = arith.mulf %35, %37 : vector<16x32xf32>
      %c0_23 = arith.constant 0 : index
      %c0_24 = arith.constant 0 : index
      %39 = vector.load %arg7[%c0_23, %c0_24] : memref<1x32xf32, #tpu.memory_space<vmem>>, vector<1x32xf32>
      %40 = vector.broadcast %39 : vector<1x32xf32> to vector<16x32xf32>
      %41 = arith.addf %38, %40 : vector<16x32xf32>
      %c0_25 = arith.constant 0 : index
      %c0_26 = arith.constant 0 : index
      %42 = vector.load %arg8[%c0_25, %c0_26] : memref<16x32xf32, #tpu.memory_space<vmem>>, vector<16x32xf32>
      tpu.vector_store %arg8[%c0_25, %c0_26], %41 {strides = array<i32>} : memref<16x32xf32, #tpu.memory_space<vmem>>, vector<16x32xf32>,
    } else {
    }
    return
  }
  func.func @transform_0(%arg0: i32, %arg1: i32) -> (i32, i32) {
    %c0_i32 = arith.constant 0 : i32
    return %arg0, %arg1 : i32, i32
  }
  func.func @transform_1(%arg0: i32, %arg1: i32) -> (i32, i32) {
    %c0_i32 = arith.constant 0 : i32
    %c0_i32_0 = arith.constant 0 : i32
    return %arg1, %c0_i32 : i32, i32
  }
  func.func @transform_2(%arg0: i32, %arg1: i32) -> (i32, i32) {
    %c0_i32 = arith.constant 0 : i32
    %c0_i32_0 = arith.constant 0 : i32
    %c0_i32_1 = arith.constant 0 : i32
    return %c0_i32, %c0_i32_0 : i32, i32
  }
  func.func @transform_3(%arg0: i32, %arg1: i32) -> (i32, i32) {
    %c0_i32 = arith.constant 0 : i32
    %c0_i32_0 = arith.constant 0 : i32
    return %arg0, %c0_i32 : i32, i32
  }
  func.func @transform_4(%arg0: i32, %arg1: i32) -> (i32, i32) {
    %c0_i32 = arith.constant 0 : i32
    %c0_i32_0 = arith.constant 0 : i32
    %c0_i32_1 = arith.constant 0 : i32
    return %c0_i32, %c0_i32_0 : i32, i32
  }
  func.func @transform_5(%arg0: i32, %arg1: i32) -> (i32, i32) {
    %c0_i32 = arith.constant 0 : i32
    %c0_i32_0 = arith.constant 0 : i32
    %c0_i32_1 = arith.constant 0 : i32
    return %c0_i32, %c0_i32_0 : i32, i32
  }
  func.func @transform_6(%arg0: i32, %arg1: i32) -> (i32, i32) {
    %c0_i32 = arith.constant 0 : i32
    %c0_i32_0 = arith.constant 0 : i32
    return %arg0, %c0_i32 : i32, i32
  }
}

</mosaic_0001>

<llo_original>
// kernel: decoder_block_forward.9
$region0: #{decoder_block_forward.9}
  #allocation0 [shape = 'u32[]', space=smem, size = 0x4, offset = 0x4, fixed_abs, tag = 'smem constant byte address 0x4 - core index']
  #allocation1 [shape = 'u32[144,128]{1,0:T(1,128)}', space=vmem, size = 0x12000, scoped, tag = 'internal scratch']
  #allocation2 [shape = 'f32[16,96]{1,0:T(8,128)}', space=vmem, size = 0x2000, scoped, tag = 'scratch operand']
  %s0 = inlined_call_operand.vmem [shape: f32[16,32], index: 0, kind: input, shape index: {}]
  %s1 = inlined_call_operand.vmem [shape: f32[32,96], index: 1, kind: input, shape index: {}]
  %s2 = inlined_call_operand.vmem [shape: f32[1,96], index: 2, kind: input, shape index: {}]
  %s3 = inlined_call_operand.vmem [shape: f32[16,96], index: 3, kind: output, shape index: {}]
  %s4 = sld [smem:[#allocation0]]
  $region30: #{decoder_block_forward.9} parent=0
    _
  %s6 = ssub.s32 1, %s4
  %s7 = scalar_select 0, %s6, %s4
  // Predicated region
  $region2: #{decoder_block_forward.9} parent=0 // pred_check
    _
  $region3: #{decoder_block_forward.9} parent=0 // pred_check_branch
    %9 = sbr.rel (0) target = $region5
  $region4: #{decoder_block_forward.9} parent=0 // pred_region
    _
  $region5: #{decoder_block_forward.9} parent=0 // pred_fallthru
    _
  // Predicated region
  $region6: #{decoder_block_forward.9} parent=0 // pred_check
    _
  $region7: #{decoder_block_forward.9} parent=0 // pred_check_branch
    %11 = sbr.rel (0) target = $region9
  $region8: #{decoder_block_forward.9} parent=0 // pred_region
    _
  $region9: #{decoder_block_forward.9} parent=0 // pred_fallthru
    _
  // Predicated region
  $region10: #{decoder_block_forward.9} parent=0 // pred_check
    _
  $region11: #{decoder_block_forward.9} parent=0 // pred_check_branch
    %13 = sbr.rel (0) target = $region13
  $region12: #{decoder_block_forward.9} parent=0 // pred_region
    _
  $region13: #{decoder_block_forward.9} parent=0 // pred_fallthru
    _
  %p14 = scmp.eq.s32.totalorder 0, 0
  // Predicated region
  $region14: #{decoder_block_forward.9} parent=0 // pred_check
    %p15 = pneg %p14
  $region15: #{decoder_block_forward.9} parent=0 // pred_check_branch
    %17 = sbr.rel (%p15) target = $region17
  $region16: #{decoder_block_forward.9} parent=0 // pred_region
    %vm18 = vcmask 785408
    %19 = vst.msk [vmem:[#allocation2] sm:$0xff] %vm18, 0.0
    %20 = vst.msk [vmem:[#allocation2 + $0x8] sm:$0xff] %vm18, 0.0
  $region17: #{decoder_block_forward.9} parent=0 // pred_fallthru
    _
  %v21 = vld [vmem:[#allocation2] sm:$0xff]
  %v22 = vld [vmem:[#allocation2 + $0x8] sm:$0xff]
  %v23 = vld [vmem:[%s0] sm:$0xff]
  %v24 = vld [vmem:[%s0 + $0x8] sm:$0xff]
  %v25 = vld [vmem:[%s1] sm:$0xff]
  %v26 = vld [vmem:[%s1 + $0x8] sm:$0xff]
  %v27 = vld [vmem:[%s1 + $0x10] sm:$0xff]
  %v28 = vld [vmem:[%s1 + $0x18] sm:$0xff]
  %vm29 = vcmask 261120
  %v31 = vsel %vm29, %v23, 0
  %v34 = vsel %vm29, %v24, 0
  %36 = vmatprep.subr.mxu0 0.0
  %37 = vmatpush1.msra.mxu0 %v25
  %38 = vmatprep.subr.mxu0 0.0
  %39 = vmatpush1.msra.mxu0 %v26
  %40 = vmatprep.subr.mxu0 0.0
  %41 = vmatpush1.msra.mxu0 %v27
  %42 = vmatprep.subr.mxu0 0.0
  %43 = vmatpush1.msra.mxu0 %v28
  %44 = vmatprep.subr.mxu0 0.0
  %45 = vmatpush1.msra.mxu0 0.0
  %46 = vmatprep.subr.mxu0 0.0
  %47 = vmatpush1.msra.mxu0 0.0
  %48 = vmatprep.subr.mxu0 0.0
  %49 = vmatpush1.msra.mxu0 0.0
  %50 = vmatprep.subr.mxu0 0.0
  %51 = vmatpush1.msra.mxu0 0.0
  %52 = vmatprep.subr.mxu0 0.0
  %53 = vmatpush1.msra.mxu0 0.0
  %54 = vmatprep.subr.mxu0 0.0
  %55 = vmatpush1.msra.mxu0 0.0
  %56 = vmatprep.subr.mxu0 0.0
  %57 = vmatpush1.msra.mxu0 0.0
  %58 = vmatprep.subr.mxu0 0.0
  %59 = vmatpush1.msra.mxu0 0.0
  %60 = vmatprep.subr.mxu0 0.0
  %61 = vmatpush1.msra.mxu0 0.0
  %62 = vmatprep.subr.mxu0 0.0
  %63 = vmatpush1.msra.mxu0 0.0
  %64 = vmatprep.subr.mxu0 0.0
  %65 = vmatpush1.msra.mxu0 0.0
  %66 = vmatprep.subr.mxu0 0.0
  %67 = vmatpush1.msra.mxu0 0.0
  %68 = vmatprep.subr.mxu0 0.0
  %69 = vmatpush1.msra.mxu0 0.0
  %70 = vmatprep.subr.mxu0 0.0
  %71 = vmatpush1.msra.mxu0 0.0
  %72 = vmatprep.subr.mxu0 0.0
  %73 = vmatpush1.msra.mxu0 0.0
  %74 = vmatprep.subr.mxu0 0.0
  %75 = vmatpush1.msra.mxu0 0.0
  %76 = vmatprep.subr.mxu0 0.0
  %77 = vmatpush1.msra.mxu0 0.0
  %78 = vmatprep.subr.mxu0 0.0
  %79 = vmatpush1.msra.mxu0 0.0
  %80 = vmatprep.subr.mxu0 0.0
  %81 = vmatpush1.msra.mxu0 0.0
  %82 = vmatprep.subr.mxu0 0.0
  %83 = vmatpush1.msra.mxu0 0.0
  %84 = vmatprep.subr.mxu0 0.0
  %85 = vmatpush1.msra.mxu0 0.0
  %86 = vmatprep.subr.mxu0 0.0
  %87 = vmatpush1.msra.mxu0 0.0
  %88 = vmatprep.subr.mxu0 0.0
  %89 = vmatpush1.msra.mxu0 0.0
  %90 = vmatprep.subr.mxu0 0.0
  %91 = vmatpush1.msra.mxu0 0.0
  %92 = vmatprep.subr.mxu0 0.0
  %93 = vmatpush1.msra.mxu0 0.0
  %94 = vmatprep.subr.mxu0 0.0
  %95 = vmatpush1.msra.mxu0 0.0
  %96 = vmatprep.subr.mxu0 0.0
  %97 = vmatpush1.msra.mxu0 0.0
  %98 = vmatprep.subr.mxu0 0.0
  %99 = vmatpush1.msra.mxu0 0.0
  %100 = vmatprep.mubr.f32.mxu0 0.0
  %101 = vmatmul.mubr.f32.gmra.mrb[0].mxu0 %v31
  %v102 = vpop.f32.mrb[0].mxu0
  %v103 = vadd.f32 0.0, %v102
  %v104 = vpop.f32.mrb[0].mxu0
  %105 = vmatprep.mubr.f32.mxu0 0.0
  %106 = vmatmul.mubr.f32.gmra.mrb[0].mxu0 %v34
  %v107 = vpop.f32.mrb[0].mxu0
  %v108 = vadd.f32 0.0, %v107
  %v109 = vpop.f32.mrb[0].mxu0
  %110 = vdwg.mxu0
  %v111 = vadd.f32 %v21, %v103
  %v112 = vadd.f32 %v22, %v108
  %vm113 = vcmask 785408
  %114 = vst.msk [vmem:[#allocation2] sm:$0xff] %vm113, %v111
  %115 = vst.msk [vmem:[#allocation2 + $0x8] sm:$0xff] %vm113, %v112
  // Predicated region
  $region18: #{decoder_block_forward.9} parent=0 // pred_check
    %p116 = pneg %p14
  $region19: #{decoder_block_forward.9} parent=0 // pred_check_branch
    %118 = sbr.rel (%p116) target = $region21
  $region20: #{decoder_block_forward.9} parent=0 // pred_region
    %v119 = vld [vmem:[#allocation2] sm:$0xff]
    %v120 = vld [vmem:[#allocation2 + $0x8] sm:$0xff]
    %v121 = vld [vmem:[%s2] sm:$0x1]
    %v123 = vlaneseq
    %v124 = vshrl.u32 %v123, 7
    %v125 = vsub.s32 0, %v124
    %v126 = vrot.slane %v121, %v125
    %v128 = vadd.f32 %v119, %v126
    %v129 = vadd.f32 %v120, %v126
    %130 = vst.msk [vmem:[%s3] sm:$0xff] %vm113, %v128
    %131 = vst.msk [vmem:[%s3 + $0x8] sm:$0xff] %vm113, %v129
  $region21: #{decoder_block_forward.9} parent=0 // pred_fallthru
    _
  // Predicated region
  $region22: #{decoder_block_forward.9} parent=0 // pred_check
    _
  $region23: #{decoder_block_forward.9} parent=0 // pred_check_branch
    %133 = sbr.rel (0) target = $region25
  $region24: #{decoder_block_forward.9} parent=0 // pred_region
    _
  $region25: #{decoder_block_forward.9} parent=0 // pred_fallthru
    _
  // Predicated region
  $region26: #{decoder_block_forward.9} parent=0 // pred_check
    _
  $region27: #{decoder_block_forward.9} parent=0 // pred_check_branch
    %135 = sbr.rel (0) target = $region29
  $region28: #{decoder_block_forward.9} parent=0 // pred_region
    _
  $region29: #{decoder_block_forward.9} parent=0 // pred_fallthru
    _

// kernel: decoder_block_forward.12
$region0: #{decoder_block_forward.12}
  #allocation0 [shape = 'u32[]', space=smem, size = 0x4, offset = 0x4, fixed_abs, tag = 'smem constant byte address 0x4 - core index']
  #allocation1 [shape = 'u32[144,128]{1,0:T(1,128)}', space=vmem, size = 0x12000, scoped, tag = 'internal scratch']
  #allocation2 [shape = 'f32[16,32]{1,0:T(8,128)}', space=vmem, size = 0x2000, scoped, tag = 'scratch operand']
  %s0 = inlined_call_operand.vmem [shape: f32[16,32], index: 0, kind: input, shape index: {}]
  %s1 = inlined_call_operand.vmem [shape: f32[32,32], index: 1, kind: input, shape index: {}]
  %s2 = inlined_call_operand.vmem [shape: f32[1,32], index: 2, kind: input, shape index: {}]
  %s3 = inlined_call_operand.vmem [shape: f32[16,32], index: 3, kind: output, shape index: {}]
  %s4 = sld [smem:[#allocation0]]
  $region30: #{decoder_block_forward.12} parent=0
    _
  %s6 = ssub.s32 1, %s4
  %s7 = scalar_select 0, %s6, %s4
  // Predicated region
  $region2: #{decoder_block_forward.12} parent=0 // pred_check
    _
  $region3: #{decoder_block_forward.12} parent=0 // pred_check_branch
    %9 = sbr.rel (0) target = $region5
  $region4: #{decoder_block_forward.12} parent=0 // pred_region
    _
  $region5: #{decoder_block_forward.12} parent=0 // pred_fallthru
    _
  // Predicated region
  $region6: #{decoder_block_forward.12} parent=0 // pred_check
    _
  $region7: #{decoder_block_forward.12} parent=0 // pred_check_branch
    %11 = sbr.rel (0) target = $region9
  $region8: #{decoder_block_forward.12} parent=0 // pred_region
    _
  $region9: #{decoder_block_forward.12} parent=0 // pred_fallthru
    _
  // Predicated region
  $region10: #{decoder_block_forward.12} parent=0 // pred_check
    _
  $region11: #{decoder_block_forward.12} parent=0 // pred_check_branch
    %13 = sbr.rel (0) target = $region13
  $region12: #{decoder_block_forward.12} parent=0 // pred_region
    _
  $region13: #{decoder_block_forward.12} parent=0 // pred_fallthru
    _
  %p14 = scmp.eq.s32.totalorder 0, 0
  // Predicated region
  $region14: #{decoder_block_forward.12} parent=0 // pred_check
    %p15 = pneg %p14
  $region15: #{decoder_block_forward.12} parent=0 // pred_check_branch
    %17 = sbr.rel (%p15) target = $region17
  $region16: #{decoder_block_forward.12} parent=0 // pred_region
    %vm18 = vcmask 261120
    %19 = vst.msk [vmem:[#allocation2] sm:$0xff] %vm18, 0.0
    %20 = vst.msk [vmem:[#allocation2 + $0x8] sm:$0xff] %vm18, 0.0
  $region17: #{decoder_block_forward.12} parent=0 // pred_fallthru
    _
  %v21 = vld [vmem:[#allocation2] sm:$0xff]
  %v22 = vld [vmem:[#allocation2 + $0x8] sm:$0xff]
  %v23 = vld [vmem:[%s0] sm:$0xff]
  %v24 = vld [vmem:[%s0 + $0x8] sm:$0xff]
  %v25 = vld [vmem:[%s1] sm:$0xff]
  %v26 = vld [vmem:[%s1 + $0x8] sm:$0xff]
  %v27 = vld [vmem:[%s1 + $0x10] sm:$0xff]
  %v28 = vld [vmem:[%s1 + $0x18] sm:$0xff]
  %vm29 = vcmask 261120
  %v31 = vsel %vm29, %v23, 0
  %v34 = vsel %vm29, %v24, 0
  %36 = vmatprep.subr.mxu0 0.0
  %37 = vmatpush1.msra.mxu0 %v25
  %38 = vmatprep.subr.mxu0 0.0
  %39 = vmatpush1.msra.mxu0 %v26
  %40 = vmatprep.subr.mxu0 0.0
  %41 = vmatpush1.msra.mxu0 %v27
  %42 = vmatprep.subr.mxu0 0.0
  %43 = vmatpush1.msra.mxu0 %v28
  %44 = vmatprep.subr.mxu0 0.0
  %45 = vmatpush1.msra.mxu0 0.0
  %46 = vmatprep.subr.mxu0 0.0
  %47 = vmatpush1.msra.mxu0 0.0
  %48 = vmatprep.subr.mxu0 0.0
  %49 = vmatpush1.msra.mxu0 0.0
  %50 = vmatprep.subr.mxu0 0.0
  %51 = vmatpush1.msra.mxu0 0.0
  %52 = vmatprep.subr.mxu0 0.0
  %53 = vmatpush1.msra.mxu0 0.0
  %54 = vmatprep.subr.mxu0 0.0
  %55 = vmatpush1.msra.mxu0 0.0
  %56 = vmatprep.subr.mxu0 0.0
  %57 = vmatpush1.msra.mxu0 0.0
  %58 = vmatprep.subr.mxu0 0.0
  %59 = vmatpush1.msra.mxu0 0.0
  %60 = vmatprep.subr.mxu0 0.0
  %61 = vmatpush1.msra.mxu0 0.0
  %62 = vmatprep.subr.mxu0 0.0
  %63 = vmatpush1.msra.mxu0 0.0
  %64 = vmatprep.subr.mxu0 0.0
  %65 = vmatpush1.msra.mxu0 0.0
  %66 = vmatprep.subr.mxu0 0.0
  %67 = vmatpush1.msra.mxu0 0.0
  %68 = vmatprep.subr.mxu0 0.0
  %69 = vmatpush1.msra.mxu0 0.0
  %70 = vmatprep.subr.mxu0 0.0
  %71 = vmatpush1.msra.mxu0 0.0
  %72 = vmatprep.subr.mxu0 0.0
  %73 = vmatpush1.msra.mxu0 0.0
  %74 = vmatprep.subr.mxu0 0.0
  %75 = vmatpush1.msra.mxu0 0.0
  %76 = vmatprep.subr.mxu0 0.0
  %77 = vmatpush1.msra.mxu0 0.0
  %78 = vmatprep.subr.mxu0 0.0
  %79 = vmatpush1.msra.mxu0 0.0
  %80 = vmatprep.subr.mxu0 0.0
  %81 = vmatpush1.msra.mxu0 0.0
  %82 = vmatprep.subr.mxu0 0.0
  %83 = vmatpush1.msra.mxu0 0.0
  %84 = vmatprep.subr.mxu0 0.0
  %85 = vmatpush1.msra.mxu0 0.0
  %86 = vmatprep.subr.mxu0 0.0
  %87 = vmatpush1.msra.mxu0 0.0
  %88 = vmatprep.subr.mxu0 0.0
  %89 = vmatpush1.msra.mxu0 0.0
  %90 = vmatprep.subr.mxu0 0.0
  %91 = vmatpush1.msra.mxu0 0.0
  %92 = vmatprep.subr.mxu0 0.0
  %93 = vmatpush1.msra.mxu0 0.0
  %94 = vmatprep.subr.mxu0 0.0
  %95 = vmatpush1.msra.mxu0 0.0
  %96 = vmatprep.subr.mxu0 0.0
  %97 = vmatpush1.msra.mxu0 0.0
  %98 = vmatprep.subr.mxu0 0.0
  %99 = vmatpush1.msra.mxu0 0.0
  %100 = vmatprep.mubr.f32.mxu0 0.0
  %101 = vmatmul.mubr.f32.gmra.mrb[0].mxu0 %v31
  %v102 = vpop.f32.mrb[0].mxu0
  %v103 = vadd.f32 0.0, %v102
  %v104 = vpop.f32.mrb[0].mxu0
  %105 = vmatprep.mubr.f32.mxu0 0.0
  %106 = vmatmul.mubr.f32.gmra.mrb[0].mxu0 %v34
  %v107 = vpop.f32.mrb[0].mxu0
  %v108 = vadd.f32 0.0, %v107
  %v109 = vpop.f32.mrb[0].mxu0
  %110 = vdwg.mxu0
  %v111 = vadd.f32 %v21, %v103
  %v112 = vadd.f32 %v22, %v108
  %113 = vst.msk [vmem:[#allocation2] sm:$0xff] %vm29, %v111
  %114 = vst.msk [vmem:[#allocation2 + $0x8] sm:$0xff] %vm29, %v112
  // Predicated region
  $region18: #{decoder_block_forward.12} parent=0 // pred_check
    %p115 = pneg %p14
  $region19: #{decoder_block_forward.12} parent=0 // pred_check_branch
    %117 = sbr.rel (%p115) target = $region21
  $region20: #{decoder_block_forward.12} parent=0 // pred_region
    %v118 = vld [vmem:[#allocation2] sm:$0xff]
    %v119 = vld [vmem:[#allocation2 + $0x8] sm:$0xff]
    %v120 = vld [vmem:[%s2] sm:$0x1]
    %v122 = vlaneseq
    %v123 = vshrl.u32 %v122, 7
    %v124 = vsub.s32 0, %v123
    %v125 = vrot.slane %v120, %v124
    %v127 = vadd.f32 %v118, %v125
    %v128 = vadd.f32 %v119, %v125
    %129 = vst.msk [vmem:[%s3] sm:$0xff] %vm29, %v127
    %130 = vst.msk [vmem:[%s3 + $0x8] sm:$0xff] %vm29, %v128
  $region21: #{decoder_block_forward.12} parent=0 // pred_fallthru
    _
  // Predicated region
  $region22: #{decoder_block_forward.12} parent=0 // pred_check
    _
  $region23: #{decoder_block_forward.12} parent=0 // pred_check_branch
    %132 = sbr.rel (0) target = $region25
  $region24: #{decoder_block_forward.12} parent=0 // pred_region
    _
  $region25: #{decoder_block_forward.12} parent=0 // pred_fallthru
    _
  // Predicated region
  $region26: #{decoder_block_forward.12} parent=0 // pred_check
    _
  $region27: #{decoder_block_forward.12} parent=0 // pred_check_branch
    %134 = sbr.rel (0) target = $region29
  $region28: #{decoder_block_forward.12} parent=0 // pred_region
    _
  $region29: #{decoder_block_forward.12} parent=0 // pred_fallthru
    _

// kernel: decoder_block_forward.11
$region0: #{decoder_block_forward.11}
  #allocation0 [shape = 'u32[]', space=smem, size = 0x4, offset = 0x4, fixed_abs, tag = 'smem constant byte address 0x4 - core index']
  #allocation1 [shape = 'u32[144,128]{1,0:T(1,128)}', space=vmem, size = 0x12000, scoped, tag = 'internal scratch']
  #allocation2 [shape = 'f32[16,32]{1,0:T(8,128)}', space=vmem, size = 0x2000, scoped, tag = 'scratch operand']
  %s0 = inlined_call_operand.vmem [shape: f32[16,32], index: 0, kind: input, shape index: {}]
  %s1 = inlined_call_operand.vmem [shape: f32[32,32], index: 1, kind: input, shape index: {}]
  %s2 = inlined_call_operand.vmem [shape: f32[1,32], index: 2, kind: input, shape index: {}]
  %s3 = inlined_call_operand.vmem [shape: f32[16,32], index: 3, kind: input, shape index: {}]
  %s4 = inlined_call_operand.vmem [shape: f32[1,32], index: 4, kind: input, shape index: {}]
  %s5 = inlined_call_operand.vmem [shape: f32[1,32], index: 5, kind: input, shape index: {}]
  %s6 = inlined_call_operand.vmem [shape: f32[16,32], index: 6, kind: output, shape index: {}]
  %s7 = sld [smem:[#allocation0]]
  $region42: #{decoder_block_forward.11} parent=0
    _
  %s9 = ssub.s32 1, %s7
  %s10 = scalar_select 0, %s9, %s7
  // Predicated region
  $region2: #{decoder_block_forward.11} parent=0 // pred_check
    _
  $region3: #{decoder_block_forward.11} parent=0 // pred_check_branch
    %12 = sbr.rel (0) target = $region5
  $region4: #{decoder_block_forward.11} parent=0 // pred_region
    _
  $region5: #{decoder_block_forward.11} parent=0 // pred_fallthru
    _
  // Predicated region
  $region6: #{decoder_block_forward.11} parent=0 // pred_check
    _
  $region7: #{decoder_block_forward.11} parent=0 // pred_check_branch
    %14 = sbr.rel (0) target = $region9
  $region8: #{decoder_block_forward.11} parent=0 // pred_region
    _
  $region9: #{decoder_block_forward.11} parent=0 // pred_fallthru
    _
  // Predicated region
  $region10: #{decoder_block_forward.11} parent=0 // pred_check
    _
  $region11: #{decoder_block_forward.11} parent=0 // pred_check_branch
    %16 = sbr.rel (0) target = $region13
  $region12: #{decoder_block_forward.11} parent=0 // pred_region
    _
  $region13: #{decoder_block_forward.11} parent=0 // pred_fallthru
    _
  // Predicated region
  $region14: #{decoder_block_forward.11} parent=0 // pred_check
    _
  $region15: #{decoder_block_forward.11} parent=0 // pred_check_branch
    %18 = sbr.rel (0) target = $region17
  $region16: #{decoder_block_forward.11} parent=0 // pred_region
    _
  $region17: #{decoder_block_forward.11} parent=0 // pred_fallthru
    _
  // Predicated region
  $region18: #{decoder_block_forward.11} parent=0 // pred_check
    _
  $region19: #{decoder_block_forward.11} parent=0 // pred_check_branch
    %20 = sbr.rel (0) target = $region21
  $region20: #{decoder_block_forward.11} parent=0 // pred_region
    _
  $region21: #{decoder_block_forward.11} parent=0 // pred_fallthru
    _
  // Predicated region
  $region22: #{decoder_block_forward.11} parent=0 // pred_check
    _
  $region23: #{decoder_block_forward.11} parent=0 // pred_check_branch
    %22 = sbr.rel (0) target = $region25
  $region24: #{decoder_block_forward.11} parent=0 // pred_region
    _
  $region25: #{decoder_block_forward.11} parent=0 // pred_fallthru
    _
  %p23 = scmp.eq.s32.totalorder 0, 0
  // Predicated region
  $region26: #{decoder_block_forward.11} parent=0 // pred_check
    %p24 = pneg %p23
  $region27: #{decoder_block_forward.11} parent=0 // pred_check_branch
    %26 = sbr.rel (%p24) target = $region29
  $region28: #{decoder_block_forward.11} parent=0 // pred_region
    %vm27 = vcmask 261120
    %28 = vst.msk [vmem:[#allocation2] sm:$0xff] %vm27, 0.0
    %29 = vst.msk [vmem:[#allocation2 + $0x8] sm:$0xff] %vm27, 0.0
  $region29: #{decoder_block_forward.11} parent=0 // pred_fallthru
    _
  %v30 = vld [vmem:[#allocation2] sm:$0xff]
  %v31 = vld [vmem:[#allocation2 + $0x8] sm:$0xff]
  %v32 = vld [vmem:[%s0] sm:$0xff]
  %v33 = vld [vmem:[%s0 + $0x8] sm:$0xff]
  %v34 = vld [vmem:[%s1] sm:$0xff]
  %v35 = vld [vmem:[%s1 + $0x8] sm:$0xff]
  %v36 = vld [vmem:[%s1 + $0x10] sm:$0xff]
  %v37 = vld [vmem:[%s1 + $0x18] sm:$0xff]
  %vm38 = vcmask 261120
  %v40 = vsel %vm38, %v32, 0
  %v43 = vsel %vm38, %v33, 0
  %45 = vmatprep.subr.mxu0 0.0
  %46 = vmatpush1.msra.mxu0 %v34
  %47 = vmatprep.subr.mxu0 0.0
  %48 = vmatpush1.msra.mxu0 %v35
  %49 = vmatprep.subr.mxu0 0.0
  %50 = vmatpush1.msra.mxu0 %v36
  %51 = vmatprep.subr.mxu0 0.0
  %52 = vmatpush1.msra.mxu0 %v37
  %53 = vmatprep.subr.mxu0 0.0
  %54 = vmatpush1.msra.mxu0 0.0
  %55 = vmatprep.subr.mxu0 0.0
  %56 = vmatpush1.msra.mxu0 0.0
  %57 = vmatprep.subr.mxu0 0.0
  %58 = vmatpush1.msra.mxu0 0.0
  %59 = vmatprep.subr.mxu0 0.0
  %60 = vmatpush1.msra.mxu0 0.0
  %61 = vmatprep.subr.mxu0 0.0
  %62 = vmatpush1.msra.mxu0 0.0
  %63 = vmatprep.subr.mxu0 0.0
  %64 = vmatpush1.msra.mxu0 0.0
  %65 = vmatprep.subr.mxu0 0.0
  %66 = vmatpush1.msra.mxu0 0.0
  %67 = vmatprep.subr.mxu0 0.0
  %68 = vmatpush1.msra.mxu0 0.0
  %69 = vmatprep.subr.mxu0 0.0
  %70 = vmatpush1.msra.mxu0 0.0
  %71 = vmatprep.subr.mxu0 0.0
  %72 = vmatpush1.msra.mxu0 0.0
  %73 = vmatprep.subr.mxu0 0.0
  %74 = vmatpush1.msra.mxu0 0.0
  %75 = vmatprep.subr.mxu0 0.0
  %76 = vmatpush1.msra.mxu0 0.0
  %77 = vmatprep.subr.mxu0 0.0
  %78 = vmatpush1.msra.mxu0 0.0
  %79 = vmatprep.subr.mxu0 0.0
  %80 = vmatpush1.msra.mxu0 0.0
  %81 = vmatprep.subr.mxu0 0.0
  %82 = vmatpush1.msra.mxu0 0.0
  %83 = vmatprep.subr.mxu0 0.0
  %84 = vmatpush1.msra.mxu0 0.0
  %85 = vmatprep.subr.mxu0 0.0
  %86 = vmatpush1.msra.mxu0 0.0
  %87 = vmatprep.subr.mxu0 0.0
  %88 = vmatpush1.msra.mxu0 0.0
  %89 = vmatprep.subr.mxu0 0.0
  %90 = vmatpush1.msra.mxu0 0.0
  %91 = vmatprep.subr.mxu0 0.0
  %92 = vmatpush1.msra.mxu0 0.0
  %93 = vmatprep.subr.mxu0 0.0
  %94 = vmatpush1.msra.mxu0 0.0
  %95 = vmatprep.subr.mxu0 0.0
  %96 = vmatpush1.msra.mxu0 0.0
  %97 = vmatprep.subr.mxu0 0.0
  %98 = vmatpush1.msra.mxu0 0.0
  %99 = vmatprep.subr.mxu0 0.0
  %100 = vmatpush1.msra.mxu0 0.0
  %101 = vmatprep.subr.mxu0 0.0
  %102 = vmatpush1.msra.mxu0 0.0
  %103 = vmatprep.subr.mxu0 0.0
  %104 = vmatpush1.msra.mxu0 0.0
  %105 = vmatprep.subr.mxu0 0.0
  %106 = vmatpush1.msra.mxu0 0.0
  %107 = vmatprep.subr.mxu0 0.0
  %108 = vmatpush1.msra.mxu0 0.0
  %109 = vmatprep.mubr.f32.mxu0 0.0
  %110 = vmatmul.mubr.f32.gmra.mrb[0].mxu0 %v40
  %v111 = vpop.f32.mrb[0].mxu0
  %v112 = vadd.f32 0.0, %v111
  %v113 = vpop.f32.mrb[0].mxu0
  %114 = vmatprep.mubr.f32.mxu0 0.0
  %115 = vmatmul.mubr.f32.gmra.mrb[0].mxu0 %v43
  %v116 = vpop.f32.mrb[0].mxu0
  %v117 = vadd.f32 0.0, %v116
  %v118 = vpop.f32.mrb[0].mxu0
  %119 = vdwg.mxu0
  %v120 = vadd.f32 %v30, %v112
  %v121 = vadd.f32 %v31, %v117
  %122 = vst.msk [vmem:[#allocation2] sm:$0xff] %vm38, %v120
  %123 = vst.msk [vmem:[#allocation2 + $0x8] sm:$0xff] %vm38, %v121
  // Predicated region
  $region30: #{decoder_block_forward.11} parent=0 // pred_check
    %p124 = pneg %p23
  $region31: #{decoder_block_forward.11} parent=0 // pred_check_branch
    %126 = sbr.rel (%p124) target = $region33
  $region32: #{decoder_block_forward.11} parent=0 // pred_region
    %v127 = vld [vmem:[#allocation2] sm:$0xff]
    %v128 = vld [vmem:[#allocation2 + $0x8] sm:$0xff]
    %v129 = vld [vmem:[%s2] sm:$0x1]
    %v131 = vlaneseq
    %v132 = vshrl.u32 %v131, 7
    %v133 = vsub.s32 0, %v132
    %v134 = vrot.slane %v129, %v133
    %v136 = vadd.f32 %v127, %v134
    %v137 = vadd.f32 %v128, %v134
    %v138 = vld [vmem:[%s3] sm:$0xff]
    %v139 = vld [vmem:[%s3 + $0x8] sm:$0xff]
    %v140 = vadd.f32 %v136, %v138
    %v141 = vadd.f32 %v137, %v139
    %v142 = vsel %vm38, %v140, 0.0
    %143 = vadd.xlane.f32.xlu0 %v142
    %v144 = vpop.xlane.xlu0 %143
    %v145 = vsel %vm38, %v141, 0.0
    %146 = vadd.xlane.f32.xlu0 %v145
    %v147 = vpop.xlane.xlu0 %146
    %v148 = vrcp.pop 32.0
    %v149 = vmul.f32 %v144, %v148
    %v150 = vmul.f32 %v147, %v148
    %v151 = vsub.f32 %v140, %v149
    %v152 = vsub.f32 %v141, %v150
    %v153 = vmul.f32 %v151, %v151
    %v154 = vmul.f32 %v152, %v152
    %v155 = vsel %vm38, %v153, 0.0
    %156 = vadd.xlane.f32.xlu0 %v155
    %v157 = vpop.xlane.xlu0 %156
    %v158 = vsel %vm38, %v154, 0.0
    %159 = vadd.xlane.f32.xlu0 %v158
    %v160 = vpop.xlane.xlu0 %159
    %v161 = vmul.f32 %v157, %v148
    %v162 = vmul.f32 %v160, %v148
    %v163 = vadd.f32 %v161, 1e-05
    %v164 = vadd.f32 %v162, 1e-05
    %v165 = vrsqrt.pop %v163
    %v166 = vrsqrt.pop %v164
    %v167 = vmul.f32 %v151, %v165
    %v168 = vmul.f32 %v152, %v166
    %v169 = vld [vmem:[%s4] sm:$0x1]
    %v171 = vlaneseq
    %v172 = vshrl.u32 %v171, 7
    %v173 = vsub.s32 0, %v172
    %v174 = vrot.slane %v169, %v173
    %v176 = vmul.f32 %v167, %v174
    %v177 = vmul.f32 %v168, %v174
    %v178 = vld [vmem:[%s5] sm:$0x1]
    %v180 = vlaneseq
    %v181 = vshrl.u32 %v180, 7
    %v182 = vsub.s32 0, %v181
    %v183 = vrot.slane %v178, %v182
    %v185 = vadd.f32 %v176, %v183
    %v186 = vadd.f32 %v177, %v183
    %187 = vst.msk [vmem:[%s6] sm:$0xff] %vm38, %v185
    %188 = vst.msk [vmem:[%s6 + $0x8] sm:$0xff] %vm38, %v186
  $region33: #{decoder_block_forward.11} parent=0 // pred_fallthru
    _
  // Predicated region
  $region34: #{decoder_block_forward.11} parent=0 // pred_check
    _
  $region35: #{decoder_block_forward.11} parent=0 // pred_check_branch
    %190 = sbr.rel (0) target = $region37
  $region36: #{decoder_block_forward.11} parent=0 // pred_region
    _
  $region37: #{decoder_block_forward.11} parent=0 // pred_fallthru
    _
  // Predicated region
  $region38: #{decoder_block_forward.11} parent=0 // pred_check
    _
  $region39: #{decoder_block_forward.11} parent=0 // pred_check_branch
    %192 = sbr.rel (0) target = $region41
  $region40: #{decoder_block_forward.11} parent=0 // pred_region
    _
  $region41: #{decoder_block_forward.11} parent=0 // pred_fallthru
    _

// kernel: decoder_block_forward.10
$region0: #{decoder_block_forward.10}
  #allocation0 [shape = 'u32[]', space=smem, size = 0x4, offset = 0x4, fixed_abs, tag = 'smem constant byte address 0x4 - core index']
  #allocation1 [shape = 'u32[144,128]{1,0:T(1,128)}', space=vmem, size = 0x12000, scoped, tag = 'internal scratch']
  %s0 = inlined_call_operand.vmem [shape: f32[8,8,8], index: 0, kind: input, shape index: {}]
  %s1 = inlined_call_operand.vmem [shape: f32[8,8,8], index: 1, kind: input, shape index: {}]
  %s2 = inlined_call_operand.vmem [shape: f32[8,8,8], index: 2, kind: input, shape index: {}]
  %s3 = inlined_call_operand.vmem [shape: f32[8,8,8], index: 3, kind: output, shape index: {}]
  %s4 = sld [smem:[#allocation0]]
  $region45: #{decoder_block_forward.10} parent=0
    _
  %s6 = ssub.s32 1, %s4
  %s7 = scalar_select 0, %s6, %s4
  loop: start=0, step=1, limit=4
  $region2: #{decoder_block_forward.10} parent=0 // loop_pre_header
    _
  $region3: #{decoder_block_forward.10} parent=0 // loop_header
    %s9 = sphi 0, %s13
    %p10 = scmp.ge.s32.totalorder %s9, 4
    %s19 = sphi 0, %s21
    %s22 = sphi 0, %s19
    %s23 = sphi 0, %s22
    %s39 = sphi 0, %s23
    %s45 = sphi 0, %s47
    %s48 = sphi 0, %s45
    %s49 = sphi 0, %s48
    %s65 = sphi 0, %s49
    %s71 = sphi 0, %s73
    %s74 = sphi 0, %s71
    %s75 = sphi 0, %s74
    %s91 = sphi 0, %s75
    %s97 = sphi 0, %s99
    %s100 = sphi 0, %s97
    %s101 = sphi 0, %s100
    %s117 = sphi 0, %s101
  $region4: #{decoder_block_forward.10} parent=0 // loop_header_branch
    %12 = sbr.rel (%p10) target = $region8
  $region5: #{decoder_block_forward.10} parent=0 // loop_body
    %s14 = ssub.s32 %s9, 1
    %s15 = ssub.s32 %s9, 2
    %s16 = sadd.s32 %s9, 1
    %s17 = ssub.s32 %s9, %s16
    %p18 = scmp.eq.s32.totalorder %s17, 0
    %s20 = sadd.s32 %s19, 1
    %s21 = scalar_select %p18, %s19, %s20
    %p24 = pneg %p18
    %p25 = scmp.eq.s32.totalorder %s9, 1
    %p26 = por %p24, %p25
    %p27 = scmp.ne.s32.totalorder %s19, %s22
    %p28 = scmp.eq.s32.totalorder %s9, 0
    %p29 = por %p27, %p28
    %p30 = scmp.ne.s32.totalorder %s19, %s22
    %p31 = scmp.eq.s32.totalorder %s14, 1
    %p32 = por %p30, %p31
    %p33 = scmp.ne.s32.totalorder %s22, %s23
    %p34 = scmp.eq.s32.totalorder %s14, 0
    %p35 = por %p33, %p34
    %p36 = scmp.ne.s32.totalorder %s22, %s23
    %p37 = scmp.eq.s32.totalorder %s15, 1
    %p38 = por %p36, %p37
    %p40 = scmp.ne.s32.totalorder %s23, %s39
    %p41 = scmp.eq.s32.totalorder %s15, 0
    %p42 = por %p40, %p41
    %s43 = ssub.s32 %s9, %s16
    %p44 = scmp.eq.s32.totalorder %s43, 0
    %s46 = sadd.s32 %s45, 1
    %s47 = scalar_select %p44, %s45, %s46
    %p50 = pneg %p44
    %p51 = scmp.eq.s32.totalorder %s9, 1
    %p52 = por %p50, %p51
    %p53 = scmp.ne.s32.totalorder %s45, %s48
    %p54 = scmp.eq.s32.totalorder %s9, 0
    %p55 = por %p53, %p54
    %p56 = scmp.ne.s32.totalorder %s45, %s48
    %p57 = scmp.eq.s32.totalorder %s14, 1
    %p58 = por %p56, %p57
    %p59 = scmp.ne.s32.totalorder %s48, %s49
    %p60 = scmp.eq.s32.totalorder %s14, 0
    %p61 = por %p59, %p60
    %p62 = scmp.ne.s32.totalorder %s48, %s49
    %p63 = scmp.eq.s32.totalorder %s15, 1
    %p64 = por %p62, %p63
    %p66 = scmp.ne.s32.totalorder %s49, %s65
    %p67 = scmp.eq.s32.totalorder %s15, 0
    %p68 = por %p66, %p67
    %s69 = ssub.s32 %s9, %s16
    %p70 = scmp.eq.s32.totalorder %s69, 0
    %s72 = sadd.s32 %s71, 1
    %s73 = scalar_select %p70, %s71, %s72
    %p76 = pneg %p70
    %p77 = scmp.eq.s32.totalorder %s9, 1
    %p78 = por %p76, %p77
    %p79 = scmp.ne.s32.totalorder %s71, %s74
    %p80 = scmp.eq.s32.totalorder %s9, 0
    %p81 = por %p79, %p80
    %p82 = scmp.ne.s32.totalorder %s71, %s74
    %p83 = scmp.eq.s32.totalorder %s14, 1
    %p84 = por %p82, %p83
    %p85 = scmp.ne.s32.totalorder %s74, %s75
    %p86 = scmp.eq.s32.totalorder %s14, 0
    %p87 = por %p85, %p86
    %p88 = scmp.ne.s32.totalorder %s74, %s75
    %p89 = scmp.eq.s32.totalorder %s15, 1
    %p90 = por %p88, %p89
    %p92 = scmp.ne.s32.totalorder %s75, %s91
    %p93 = scmp.eq.s32.totalorder %s15, 0
    %p94 = por %p92, %p93
    %s95 = ssub.s32 %s9, %s16
    %p96 = scmp.eq.s32.totalorder %s95, 0
    %s98 = sadd.s32 %s97, 1
    %s99 = scalar_select %p96, %s97, %s98
    %p102 = pneg %p96
    %p103 = scmp.eq.s32.totalorder %s9, 1
    %p104 = por %p102, %p103
    %p105 = scmp.ne.s32.totalorder %s97, %s100
    %p106 = scmp.eq.s32.totalorder %s9, 0
    %p107 = por %p105, %p106
    %p108 = scmp.ne.s32.totalorder %s97, %s100
    %p109 = scmp.eq.s32.totalorder %s14, 1
    %p110 = por %p108, %p109
    %p111 = scmp.ne.s32.totalorder %s100, %s101
    %p112 = scmp.eq.s32.totalorder %s14, 0
    %p113 = por %p111, %p112
    %p114 = scmp.ne.s32.totalorder %s100, %s101
    %p115 = scmp.eq.s32.totalorder %s15, 1
    %p116 = por %p114, %p115
    %p118 = scmp.ne.s32.totalorder %s101, %s117
    %p119 = scmp.eq.s32.totalorder %s15, 0
    %p120 = por %p118, %p119
    %p121 = scmp.le.s32.totalorder 1, %s9
    %p122 = scmp.lt.s32.totalorder %s9, 3
    %p123 = pnand %p121, %p122
    %p124 = pneg %p123
    // Predicated region
    $region9: #{decoder_block_forward.10} parent=5 // pred_check
      _
    $region10: #{decoder_block_forward.10} parent=5 // pred_check_branch
      %126 = sbr.rel (%p123) target = $region12
    $region11: #{decoder_block_forward.10} parent=5 // pred_region
      %s127 = ssub.s32 %s9, 1
    $region12: #{decoder_block_forward.10} parent=5 // pred_fallthru
      _
    %p128 = scmp.lt.s32.totalorder %s9, 2
    // Predicated region
    $region13: #{decoder_block_forward.10} parent=5 // pred_check
      %p129 = pneg %p128
    $region14: #{decoder_block_forward.10} parent=5 // pred_check_branch
      %131 = sbr.rel (%p129) target = $region16
    $region15: #{decoder_block_forward.10} parent=5 // pred_region
      // Predicated region
      $region17: #{decoder_block_forward.10} parent=15 // pred_check
        %p132 = pneg %p29
      $region18: #{decoder_block_forward.10} parent=15 // pred_check_branch
        %134 = sbr.rel (%p132) target = $region20
      $region19: #{decoder_block_forward.10} parent=15 // pred_region
        %s135 = smul.u32 4, %s9
        %p136 = scmp.lt.s32.totalorder %s135, 7
        %s137 = scalar_select %p136, %s135, 7
        %s138 = smul.addr %s137, 8
        %s139 = scalar_lea.vmem %s0, %s138
        %s140 = smul.u32 4, %s9
      $region20: #{decoder_block_forward.10} parent=15 // pred_fallthru
        _
      // Predicated region
      $region21: #{decoder_block_forward.10} parent=15 // pred_check
        %p141 = pneg %p55
      $region22: #{decoder_block_forward.10} parent=15 // pred_check_branch
        %143 = sbr.rel (%p141) target = $region24
      $region23: #{decoder_block_forward.10} parent=15 // pred_region
        %s144 = smul.u32 4, %s9
        %p145 = scmp.lt.s32.totalorder %s144, 7
        %s146 = scalar_select %p145, %s144, 7
        %s147 = smul.addr %s146, 8
        %s148 = scalar_lea.vmem %s1, %s147
        %s149 = smul.u32 4, %s9
      $region24: #{decoder_block_forward.10} parent=15 // pred_fallthru
        _
      // Predicated region
      $region25: #{decoder_block_forward.10} parent=15 // pred_check
        %p150 = pneg %p81
      $region26: #{decoder_block_forward.10} parent=15 // pred_check_branch
        %152 = sbr.rel (%p150) target = $region28
      $region27: #{decoder_block_forward.10} parent=15 // pred_region
        %s153 = smul.u32 4, %s9
        %p154 = scmp.lt.s32.totalorder %s153, 7
        %s155 = scalar_select %p154, %s153, 7
        %s156 = smul.addr %s155, 8
        %s157 = scalar_lea.vmem %s2, %s156
        %s158 = smul.u32 4, %s9
      $region28: #{decoder_block_forward.10} parent=15 // pred_fallthru
        _
    $region16: #{decoder_block_forward.10} parent=5 // pred_fallthru
      _
    %p159 = scmp.le.s32.totalorder 1, %s9
    %p160 = scmp.lt.s32.totalorder %s9, 3
    %p161 = pnand %p159, %p160
    %p162 = pneg %p161
    // Predicated region
    $region29: #{decoder_block_forward.10} parent=5 // pred_check
      _
    $region30: #{decoder_block_forward.10} parent=5 // pred_check_branch
      %164 = sbr.rel (%p161) target = $region32
    $region31: #{decoder_block_forward.10} parent=5 // pred_region
      %s165 = ssub.s32 %s9, 1
      %s166 = smul.u32 4, %s14
      %p167 = scmp.lt.s32.totalorder %s166, 7
      %s168 = scalar_select %p167, %s166, 7
      %s169 = smul.addr %s168, 8
      %s170 = scalar_lea.vmem %s0, %s169
      %p171 = pneg %p35
      %p172 = pneg %p32
      %s173 = smul.u32 4, %s14
      %p174 = scmp.lt.s32.totalorder %s173, 7
      %s175 = scalar_select %p174, %s173, 7
      %s176 = smul.addr %s175, 8
      %s177 = scalar_lea.vmem %s1, %s176
      %p178 = pneg %p61
      %p179 = pneg %p58
      %s180 = smul.u32 4, %s14
      %p181 = scmp.lt.s32.totalorder %s180, 7
      %s182 = scalar_select %p181, %s180, 7
      %s183 = smul.addr %s182, 8
      %s184 = scalar_lea.vmem %s2, %s183
      %p185 = pneg %p87
      %p186 = pneg %p84
      %p187 = pneg %p113
      %p188 = pneg %p110
      %s189 = smul.u32 4, %s14
      %p190 = scmp.lt.s32.totalorder %s189, 7
      %s191 = scalar_select %p190, %s189, 7
      %s192 = smul.addr %s191, 8
      %s193 = scalar_lea.vmem %s3, %s192
      %s194 = smul.u32 4, %s14
      %p195 = scmp.lt.s32.totalorder %s194, 7
      %s196 = scalar_select %p195, %s194, 7
      %s197 = smul.addr %s196, 8
      %s198 = scalar_lea.vmem %s0, %s197
      %s199 = smul.u32 4, %s14
      %s200 = smul.u32 4, %s14
      %p201 = scmp.lt.s32.totalorder %s200, 7
      %s202 = scalar_select %p201, %s200, 7
      %s203 = smul.addr %s202, 8
      %s204 = scalar_lea.vmem %s1, %s203
      %s205 = smul.u32 4, %s14
      %s206 = smul.u32 4, %s14
      %p207 = scmp.lt.s32.totalorder %s206, 7
      %s208 = scalar_select %p207, %s206, 7
      %s209 = smul.addr %s208, 8
      %s210 = scalar_lea.vmem %s2, %s209
      %s211 = smul.u32 4, %s14
      %s212 = smul.u32 4, %s14
      %p213 = scmp.lt.s32.totalorder %s212, 7
      %s214 = scalar_select %p213, %s212, 7
      %s215 = smul.addr %s214, 8
      %s216 = scalar_lea.vmem %s3, %s215
      %s217 = smul.u32 4, %s14
      %v218 = vld [vmem:[%s198] sm:$0xff]
      %v219 = vld [vmem:[%s198 + $0x8] sm:$0xff]
      %v220 = vld [vmem:[%s198 + $0x10] sm:$0xff]
      %v221 = vld [vmem:[%s198 + $0x18] sm:$0xff]
      %v222 = vmul.f32 %v218, 0.35355338
      %v223 = vmul.f32 %v219, 0.35355338
      %v224 = vmul.f32 %v220, 0.35355338
      %v225 = vmul.f32 %v221, 0.35355338
      %v226 = vld [vmem:[%s204] sm:$0xff]
      %v227 = vld [vmem:[%s204 + $0x8] sm:$0xff]
      %v228 = vld [vmem:[%s204 + $0x10] sm:$0xff]
      %v229 = vld [vmem:[%s204 + $0x18] sm:$0xff]
      %v230 = vld [vmem:[%s210] sm:$0xff]
      %v231 = vld [vmem:[%s210 + $0x8] sm:$0xff]
      %v232 = vld [vmem:[%s210 + $0x10] sm:$0xff]
      %v233 = vld [vmem:[%s210 + $0x18] sm:$0xff]
      %vm234 = vcmask 64512
      %v236 = vsel %vm234, %v222, 0
      %v239 = vsel %vm234, %v226, 0
      %241 = vmatprep.subr.mxu0 0.0
      %242 = vmatpush1.xpose.msra.mxu0 %v239
      %243 = vmatprep.subr.mxu0 0.0
      %244 = vmatpush1.xpose.msra.mxu0 0.0
      %245 = vmatprep.subr.mxu0 0.0
      %246 = vmatpush1.xpose.msra.mxu0 0.0
      %247 = vmatprep.subr.mxu0 0.0
      %248 = vmatpush1.xpose.msra.mxu0 0.0
      %249 = vmatprep.subr.mxu0 0.0
      %250 = vmatpush1.xpose.msra.mxu0 0.0
      %251 = vmatprep.subr.mxu0 0.0
      %252 = vmatpush1.xpose.msra.mxu0 0.0
      %253 = vmatprep.subr.mxu0 0.0
      %254 = vmatpush1.xpose.msra.mxu0 0.0
      %255 = vmatprep.subr.mxu0 0.0
      %256 = vmatpush1.xpose.msra.mxu0 0.0
      %257 = vmatprep.subr.mxu0 0.0
      %258 = vmatpush1.xpose.msra.mxu0 0.0
      %259 = vmatprep.subr.mxu0 0.0
      %260 = vmatpush1.xpose.msra.mxu0 0.0
      %261 = vmatprep.subr.mxu0 0.0
      %262 = vmatpush1.xpose.msra.mxu0 0.0
      %263 = vmatprep.subr.mxu0 0.0
      %264 = vmatpush1.xpose.msra.mxu0 0.0
      %265 = vmatprep.subr.mxu0 0.0
      %266 = vmatpush1.xpose.msra.mxu0 0.0
      %267 = vmatprep.subr.mxu0 0.0
      %268 = vmatpush1.xpose.msra.mxu0 0.0
      %269 = vmatprep.subr.mxu0 0.0
      %270 = vmatpush1.xpose.msra.mxu0 0.0
      %271 = vmatprep.subr.mxu0 0.0
      %272 = vmatpush1.xpose.msra.mxu0 0.0
      %273 = vmatprep.subr.mxu0 0.0
      %274 = vmatpush1.xpose.msra.mxu0 0.0
      %275 = vmatprep.subr.mxu0 0.0
      %276 = vmatpush1.xpose.msra.mxu0 0.0
      %277 = vmatprep.subr.mxu0 0.0
      %278 = vmatpush1.xpose.msra.mxu0 0.0
      %279 = vmatprep.subr.mxu0 0.0
      %280 = vmatpush1.xpose.msra.mxu0 0.0
      %281 = vmatprep.subr.mxu0 0.0
      %282 = vmatpush1.xpose.msra.mxu0 0.0
      %283 = vmatprep.subr.mxu0 0.0
      %284 = vmatpush1.xpose.msra.mxu0 0.0
      %285 = vmatprep.subr.mxu0 0.0
      %286 = vmatpush1.xpose.msra.mxu0 0.0
      %287 = vmatprep.subr.mxu0 0.0
      %288 = vmatpush1.xpose.msra.mxu0 0.0
      %289 = vmatprep.subr.mxu0 0.0
      %290 = vmatpush1.xpose.msra.mxu0 0.0
      %291 = vmatprep.subr.mxu0 0.0
      %292 = vmatpush1.xpose.msra.mxu0 0.0
      %293 = vmatprep.subr.mxu0 0.0
      %294 = vmatpush1.xpose.msra.mxu0 0.0
      %295 = vmatprep.subr.mxu0 0.0
      %296 = vmatpush1.xpose.msra.mxu0 0.0
      %297 = vmatprep.subr.mxu0 0.0
      %298 = vmatpush1.xpose.msra.mxu0 0.0
      %299 = vmatprep.subr.mxu0 0.0
      %300 = vmatpush1.xpose.msra.mxu0 0.0
      %301 = vmatprep.subr.mxu0 0.0
      %302 = vmatpush1.xpose.msra.mxu0 0.0
      %303 = vmatprep.subr.mxu0 0.0
      %304 = vmatpush1.xpose.msra.mxu0 0.0
      %305 = vmatprep.mubr.f32.mxu0 0.0
      %306 = vmatmul.mubr.f32.gmra.mrb[0].mxu0 %v236
      %v307 = vpop.f32.mrb[0].mxu0
      %v308 = vadd.f32 0.0, %v307
      %v309 = vpop.f32.mrb[0].mxu0
      %310 = vdwg.mxu0
      %v312 = vsel %vm234, %v223, 0
      %v315 = vsel %vm234, %v227, 0
      %317 = vmatprep.subr.mxu0 0.0
      %318 = vmatpush1.xpose.msra.mxu0 %v315
      %319 = vmatprep.subr.mxu0 0.0
      %320 = vmatpush1.xpose.msra.mxu0 0.0
      %321 = vmatprep.subr.mxu0 0.0
      %322 = vmatpush1.xpose.msra.mxu0 0.0
      %323 = vmatprep.subr.mxu0 0.0
      %324 = vmatpush1.xpose.msra.mxu0 0.0
      %325 = vmatprep.subr.mxu0 0.0
      %326 = vmatpush1.xpose.msra.mxu0 0.0
      %327 = vmatprep.subr.mxu0 0.0
      %328 = vmatpush1.xpose.msra.mxu0 0.0
      %329 = vmatprep.subr.mxu0 0.0
      %330 = vmatpush1.xpose.msra.mxu0 0.0
      %331 = vmatprep.subr.mxu0 0.0
      %332 = vmatpush1.xpose.msra.mxu0 0.0
      %333 = vmatprep.subr.mxu0 0.0
      %334 = vmatpush1.xpose.msra.mxu0 0.0
      %335 = vmatprep.subr.mxu0 0.0
      %336 = vmatpush1.xpose.msra.mxu0 0.0
      %337 = vmatprep.subr.mxu0 0.0
      %338 = vmatpush1.xpose.msra.mxu0 0.0
      %339 = vmatprep.subr.mxu0 0.0
      %340 = vmatpush1.xpose.msra.mxu0 0.0
      %341 = vmatprep.subr.mxu0 0.0
      %342 = vmatpush1.xpose.msra.mxu0 0.0
      %343 = vmatprep.subr.mxu0 0.0
      %344 = vmatpush1.xpose.msra.mxu0 0.0
      %345 = vmatprep.subr.mxu0 0.0
      %346 = vmatpush1.xpose.msra.mxu0 0.0
      %347 = vmatprep.subr.mxu0 0.0
      %348 = vmatpush1.xpose.msra.mxu0 0.0
      %349 = vmatprep.subr.mxu0 0.0
      %350 = vmatpush1.xpose.msra.mxu0 0.0
      %351 = vmatprep.subr.mxu0 0.0
      %352 = vmatpush1.xpose.msra.mxu0 0.0
      %353 = vmatprep.subr.mxu0 0.0
      %354 = vmatpush1.xpose.msra.mxu0 0.0
      %355 = vmatprep.subr.mxu0 0.0
      %356 = vmatpush1.xpose.msra.mxu0 0.0
      %357 = vmatprep.subr.mxu0 0.0
      %358 = vmatpush1.xpose.msra.mxu0 0.0
      %359 = vmatprep.subr.mxu0 0.0
      %360 = vmatpush1.xpose.msra.mxu0 0.0
      %361 = vmatprep.subr.mxu0 0.0
      %362 = vmatpush1.xpose.msra.mxu0 0.0
      %363 = vmatprep.subr.mxu0 0.0
      %364 = vmatpush1.xpose.msra.mxu0 0.0
      %365 = vmatprep.subr.mxu0 0.0
      %366 = vmatpush1.xpose.msra.mxu0 0.0
      %367 = vmatprep.subr.mxu0 0.0
      %368 = vmatpush1.xpose.msra.mxu0 0.0
      %369 = vmatprep.subr.mxu0 0.0
      %370 = vmatpush1.xpose.msra.mxu0 0.0
      %371 = vmatprep.subr.mxu0 0.0
      %372 = vmatpush1.xpose.msra.mxu0 0.0
      %373 = vmatprep.subr.mxu0 0.0
      %374 = vmatpush1.xpose.msra.mxu0 0.0
      %375 = vmatprep.subr.mxu0 0.0
      %376 = vmatpush1.xpose.msra.mxu0 0.0
      %377 = vmatprep.subr.mxu0 0.0
      %378 = vmatpush1.xpose.msra.mxu0 0.0
      %379 = vmatprep.subr.mxu0 0.0
      %380 = vmatpush1.xpose.msra.mxu0 0.0
      %381 = vmatprep.mubr.f32.mxu0 0.0
      %382 = vmatmul.mubr.f32.gmra.mrb[0].mxu0 %v312
      %v383 = vpop.f32.mrb[0].mxu0
      %v384 = vadd.f32 0.0, %v383
      %v385 = vpop.f32.mrb[0].mxu0
      %386 = vdwg.mxu0
      %v388 = vsel %vm234, %v224, 0
      %v391 = vsel %vm234, %v228, 0
      %393 = vmatprep.subr.mxu0 0.0
      %394 = vmatpush1.xpose.msra.mxu0 %v391
      %395 = vmatprep.subr.mxu0 0.0
      %396 = vmatpush1.xpose.msra.mxu0 0.0
      %397 = vmatprep.subr.mxu0 0.0
      %398 = vmatpush1.xpose.msra.mxu0 0.0
      %399 = vmatprep.subr.mxu0 0.0
      %400 = vmatpush1.xpose.msra.mxu0 0.0
      %401 = vmatprep.subr.mxu0 0.0
      %402 = vmatpush1.xpose.msra.mxu0 0.0
      %403 = vmatprep.subr.mxu0 0.0
      %404 = vmatpush1.xpose.msra.mxu0 0.0
      %405 = vmatprep.subr.mxu0 0.0
      %406 = vmatpush1.xpose.msra.mxu0 0.0
      %407 = vmatprep.subr.mxu0 0.0
      %408 = vmatpush1.xpose.msra.mxu0 0.0
      %409 = vmatprep.subr.mxu0 0.0
      %410 = vmatpush1.xpose.msra.mxu0 0.0
      %411 = vmatprep.subr.mxu0 0.0
      %412 = vmatpush1.xpose.msra.mxu0 0.0
      %413 = vmatprep.subr.mxu0 0.0
      %414 = vmatpush1.xpose.msra.mxu0 0.0
      %415 = vmatprep.subr.mxu0 0.0
      %416 = vmatpush1.xpose.msra.mxu0 0.0
      %417 = vmatprep.subr.mxu0 0.0
      %418 = vmatpush1.xpose.msra.mxu0 0.0
      %419 = vmatprep.subr.mxu0 0.0
      %420 = vmatpush1.xpose.msra.mxu0 0.0
      %421 = vmatprep.subr.mxu0 0.0
      %422 = vmatpush1.xpose.msra.mxu0 0.0
      %423 = vmatprep.subr.mxu0 0.0
      %424 = vmatpush1.xpose.msra.mxu0 0.0
      %425 = vmatprep.subr.mxu0 0.0
      %426 = vmatpush1.xpose.msra.mxu0 0.0
      %427 = vmatprep.subr.mxu0 0.0
      %428 = vmatpush1.xpose.msra.mxu0 0.0
      %429 = vmatprep.subr.mxu0 0.0
      %430 = vmatpush1.xpose.msra.mxu0 0.0
      %431 = vmatprep.subr.mxu0 0.0
      %432 = vmatpush1.xpose.msra.mxu0 0.0
      %433 = vmatprep.subr.mxu0 0.0
      %434 = vmatpush1.xpose.msra.mxu0 0.0
      %435 = vmatprep.subr.mxu0 0.0
      %436 = vmatpush1.xpose.msra.mxu0 0.0
      %437 = vmatprep.subr.mxu0 0.0
      %438 = vmatpush1.xpose.msra.mxu0 0.0
      %439 = vmatprep.subr.mxu0 0.0
      %440 = vmatpush1.xpose.msra.mxu0 0.0
      %441 = vmatprep.subr.mxu0 0.0
      %442 = vmatpush1.xpose.msra.mxu0 0.0
      %443 = vmatprep.subr.mxu0 0.0
      %444 = vmatpush1.xpose.msra.mxu0 0.0
      %445 = vmatprep.subr.mxu0 0.0
      %446 = vmatpush1.xpose.msra.mxu0 0.0
      %447 = vmatprep.subr.mxu0 0.0
      %448 = vmatpush1.xpose.msra.mxu0 0.0
      %449 = vmatprep.subr.mxu0 0.0
      %450 = vmatpush1.xpose.msra.mxu0 0.0
      %451 = vmatprep.subr.mxu0 0.0
      %452 = vmatpush1.xpose.msra.mxu0 0.0
      %453 = vmatprep.subr.mxu0 0.0
      %454 = vmatpush1.xpose.msra.mxu0 0.0
      %455 = vmatprep.subr.mxu0 0.0
      %456 = vmatpush1.xpose.msra.mxu0 0.0
      %457 = vmatprep.mubr.f32.mxu0 0.0
      %458 = vmatmul.mubr.f32.gmra.mrb[0].mxu0 %v388
      %v459 = vpop.f32.mrb[0].mxu0
      %v460 = vadd.f32 0.0, %v459
      %v461 = vpop.f32.mrb[0].mxu0
      %462 = vdwg.mxu0
      %v464 = vsel %vm234, %v225, 0
      %v467 = vsel %vm234, %v229, 0
      %469 = vmatprep.subr.mxu0 0.0
      %470 = vmatpush1.xpose.msra.mxu0 %v467
      %471 = vmatprep.subr.mxu0 0.0
      %472 = vmatpush1.xpose.msra.mxu0 0.0
      %473 = vmatprep.subr.mxu0 0.0
      %474 = vmatpush1.xpose.msra.mxu0 0.0
      %475 = vmatprep.subr.mxu0 0.0
      %476 = vmatpush1.xpose.msra.mxu0 0.0
      %477 = vmatprep.subr.mxu0 0.0
      %478 = vmatpush1.xpose.msra.mxu0 0.0
      %479 = vmatprep.subr.mxu0 0.0
      %480 = vmatpush1.xpose.msra.mxu0 0.0
      %481 = vmatprep.subr.mxu0 0.0
      %482 = vmatpush1.xpose.msra.mxu0 0.0
      %483 = vmatprep.subr.mxu0 0.0
      %484 = vmatpush1.xpose.msra.mxu0 0.0
      %485 = vmatprep.subr.mxu0 0.0
      %486 = vmatpush1.xpose.msra.mxu0 0.0
      %487 = vmatprep.subr.mxu0 0.0
      %488 = vmatpush1.xpose.msra.mxu0 0.0
      %489 = vmatprep.subr.mxu0 0.0
      %490 = vmatpush1.xpose.msra.mxu0 0.0
      %491 = vmatprep.subr.mxu0 0.0
      %492 = vmatpush1.xpose.msra.mxu0 0.0
      %493 = vmatprep.subr.mxu0 0.0
      %494 = vmatpush1.xpose.msra.mxu0 0.0
      %495 = vmatprep.subr.mxu0 0.0
      %496 = vmatpush1.xpose.msra.mxu0 0.0
      %497 = vmatprep.subr.mxu0 0.0
      %498 = vmatpush1.xpose.msra.mxu0 0.0
      %499 = vmatprep.subr.mxu0 0.0
      %500 = vmatpush1.xpose.msra.mxu0 0.0
      %501 = vmatprep.subr.mxu0 0.0
      %502 = vmatpush1.xpose.msra.mxu0 0.0
      %503 = vmatprep.subr.mxu0 0.0
      %504 = vmatpush1.xpose.msra.mxu0 0.0
      %505 = vmatprep.subr.mxu0 0.0
      %506 = vmatpush1.xpose.msra.mxu0 0.0
      %507 = vmatprep.subr.mxu0 0.0
      %508 = vmatpush1.xpose.msra.mxu0 0.0
      %509 = vmatprep.subr.mxu0 0.0
      %510 = vmatpush1.xpose.msra.mxu0 0.0
      %511 = vmatprep.subr.mxu0 0.0
      %512 = vmatpush1.xpose.msra.mxu0 0.0
      %513 = vmatprep.subr.mxu0 0.0
      %514 = vmatpush1.xpose.msra.mxu0 0.0
      %515 = vmatprep.subr.mxu0 0.0
      %516 = vmatpush1.xpose.msra.mxu0 0.0
      %517 = vmatprep.subr.mxu0 0.0
      %518 = vmatpush1.xpose.msra.mxu0 0.0
      %519 = vmatprep.subr.mxu0 0.0
      %520 = vmatpush1.xpose.msra.mxu0 0.0
      %521 = vmatprep.subr.mxu0 0.0
      %522 = vmatpush1.xpose.msra.mxu0 0.0
      %523 = vmatprep.subr.mxu0 0.0
      %524 = vmatpush1.xpose.msra.mxu0 0.0
      %525 = vmatprep.subr.mxu0 0.0
      %526 = vmatpush1.xpose.msra.mxu0 0.0
      %527 = vmatprep.subr.mxu0 0.0
      %528 = vmatpush1.xpose.msra.mxu0 0.0
      %529 = vmatprep.subr.mxu0 0.0
      %530 = vmatpush1.xpose.msra.mxu0 0.0
      %531 = vmatprep.subr.mxu0 0.0
      %532 = vmatpush1.xpose.msra.mxu0 0.0
      %533 = vmatprep.mubr.f32.mxu0 0.0
      %534 = vmatmul.mubr.f32.gmra.mrb[0].mxu0 %v464
      %v535 = vpop.f32.mrb[0].mxu0
      %v536 = vadd.f32 0.0, %v535
      %v537 = vpop.f32.mrb[0].mxu0
      %538 = vdwg.mxu0
      %v539 = vlaneseq
      %v540 = vshrl.u32 %v539, 7
      %v541 = vlaneseq
      %v542 = vand.u32 %v541, 127
      %vm543 = vcmp.le.s32.totalorder %v542, %v540
      %v544 = vsel %vm543, 1, 0
      %vm545 = vcmp.eq.s32.totalorder %v544, 1
      %v546 = vsel %vm545, %v308, -10000.0
      %v547 = vsel %vm545, %v384, -10000.0
      %v548 = vsel %vm545, %v460, -10000.0
      %v549 = vsel %vm545, %v536, -10000.0
      %v550 = vsel %vm234, %v546, -inf
      %551 = vmax.xlane.f32.xlu0 %v550
      %v552 = vpop.xlane.xlu0 %551
      %v553 = vsel %vm234, %v547, -inf
      %554 = vmax.xlane.f32.xlu0 %v553
      %v555 = vpop.xlane.xlu0 %554
      %v556 = vsel %vm234, %v548, -inf
      %557 = vmax.xlane.f32.xlu0 %v556
      %v558 = vpop.xlane.xlu0 %557
      %v559 = vsel %vm234, %v549, -inf
      %560 = vmax.xlane.f32.xlu0 %v559
      %v561 = vpop.xlane.xlu0 %560
      %v562 = vsub.f32 %v546, %v552
      %v563 = vsub.f32 %v547, %v555
      %v564 = vsub.f32 %v548, %v558
      %v565 = vsub.f32 %v549, %v561
      %v566 = vmul.f32 %v562, 1.442695
      %v567 = vpow.pop %v566
      %v568 = vmul.f32 %v563, 1.442695
      %v569 = vpow.pop %v568
      %v570 = vmul.f32 %v564, 1.442695
      %v571 = vpow.pop %v570
      %v572 = vmul.f32 %v565, 1.442695
      %v573 = vpow.pop %v572
      %v574 = vsel %vm234, %v567, 0.0
      %575 = vadd.xlane.f32.xlu0 %v574
      %v576 = vpop.xlane.xlu0 %575
      %v577 = vsel %vm234, %v569, 0.0
      %578 = vadd.xlane.f32.xlu0 %v577
      %v579 = vpop.xlane.xlu0 %578
      %v580 = vsel %vm234, %v571, 0.0
      %581 = vadd.xlane.f32.xlu0 %v580
      %v582 = vpop.xlane.xlu0 %581
      %v583 = vsel %vm234, %v573, 0.0
      %584 = vadd.xlane.f32.xlu0 %v583
      %v585 = vpop.xlane.xlu0 %584
      %v586 = vrcp.pop %v576
      %v587 = vrcp.pop %v579
      %v588 = vrcp.pop %v582
      %v589 = vrcp.pop %v585
      %v590 = vmul.f32 %v567, %v586
      %v591 = vmul.f32 %v569, %v587
      %v592 = vmul.f32 %v571, %v588
      %v593 = vmul.f32 %v573, %v589
      %v595 = vsel %vm234, %v590, 0
      %597 = vmatprep.subr.mxu0 0.0
      %598 = vmatpush1.msra.mxu0 %v230
      %599 = vmatprep.subr.mxu0 0.0
      %600 = vmatpush1.msra.mxu0 0.0
      %601 = vmatprep.subr.mxu0 0.0
      %602 = vmatpush1.msra.mxu0 0.0
      %603 = vmatprep.subr.mxu0 0.0
      %604 = vmatpush1.msra.mxu0 0.0
      %605 = vmatprep.subr.mxu0 0.0
      %606 = vmatpush1.msra.mxu0 0.0
      %607 = vmatprep.subr.mxu0 0.0
      %608 = vmatpush1.msra.mxu0 0.0
      %609 = vmatprep.subr.mxu0 0.0
      %610 = vmatpush1.msra.mxu0 0.0
      %611 = vmatprep.subr.mxu0 0.0
      %612 = vmatpush1.msra.mxu0 0.0
      %613 = vmatprep.subr.mxu0 0.0
      %614 = vmatpush1.msra.mxu0 0.0
      %615 = vmatprep.subr.mxu0 0.0
      %616 = vmatpush1.msra.mxu0 0.0
      %617 = vmatprep.subr.mxu0 0.0
      %618 = vmatpush1.msra.mxu0 0.0
      %619 = vmatprep.subr.mxu0 0.0
      %620 = vmatpush1.msra.mxu0 0.0
      %621 = vmatprep.subr.mxu0 0.0
      %622 = vmatpush1.msra.mxu0 0.0
      %623 = vmatprep.subr.mxu0 0.0
      %624 = vmatpush1.msra.mxu0 0.0
      %625 = vmatprep.subr.mxu0 0.0
      %626 = vmatpush1.msra.mxu0 0.0
      %627 = vmatprep.subr.mxu0 0.0
      %628 = vmatpush1.msra.mxu0 0.0
      %629 = vmatprep.subr.mxu0 0.0
      %630 = vmatpush1.msra.mxu0 0.0
      %631 = vmatprep.subr.mxu0 0.0
      %632 = vmatpush1.msra.mxu0 0.0
      %633 = vmatprep.subr.mxu0 0.0
      %634 = vmatpush1.msra.mxu0 0.0
      %635 = vmatprep.subr.mxu0 0.0
      %636 = vmatpush1.msra.mxu0 0.0
      %637 = vmatprep.subr.mxu0 0.0
      %638 = vmatpush1.msra.mxu0 0.0
      %639 = vmatprep.subr.mxu0 0.0
      %640 = vmatpush1.msra.mxu0 0.0
      %641 = vmatprep.subr.mxu0 0.0
      %642 = vmatpush1.msra.mxu0 0.0
      %643 = vmatprep.subr.mxu0 0.0
      %644 = vmatpush1.msra.mxu0 0.0
      %645 = vmatprep.subr.mxu0 0.0
      %646 = vmatpush1.msra.mxu0 0.0
      %647 = vmatprep.subr.mxu0 0.0
      %648 = vmatpush1.msra.mxu0 0.0
      %649 = vmatprep.subr.mxu0 0.0
      %650 = vmatpush1.msra.mxu0 0.0
      %651 = vmatprep.subr.mxu0 0.0
      %652 = vmatpush1.msra.mxu0 0.0
      %653 = vmatprep.subr.mxu0 0.0
      %654 = vmatpush1.msra.mxu0 0.0
      %655 = vmatprep.subr.mxu0 0.0
      %656 = vmatpush1.msra.mxu0 0.0
      %657 = vmatprep.subr.mxu0 0.0
      %658 = vmatpush1.msra.mxu0 0.0
      %659 = vmatprep.subr.mxu0 0.0
      %660 = vmatpush1.msra.mxu0 0.0
      %661 = vmatprep.mubr.f32.mxu0 0.0
      %662 = vmatmul.mubr.f32.gmra.mrb[0].mxu0 %v595
      %v663 = vpop.f32.mrb[0].mxu0
      %v664 = vadd.f32 0.0, %v663
      %v665 = vpop.f32.mrb[0].mxu0
      %666 = vdwg.mxu0
      %v668 = vsel %vm234, %v591, 0
      %670 = vmatprep.subr.mxu0 0.0
      %671 = vmatpush1.msra.mxu0 %v231
      %672 = vmatprep.subr.mxu0 0.0
      %673 = vmatpush1.msra.mxu0 0.0
      %674 = vmatprep.subr.mxu0 0.0
      %675 = vmatpush1.msra.mxu0 0.0
      %676 = vmatprep.subr.mxu0 0.0
      %677 = vmatpush1.msra.mxu0 0.0
      %678 = vmatprep.subr.mxu0 0.0
      %679 = vmatpush1.msra.mxu0 0.0
      %680 = vmatprep.subr.mxu0 0.0
      %681 = vmatpush1.msra.mxu0 0.0
      %682 = vmatprep.subr.mxu0 0.0
      %683 = vmatpush1.msra.mxu0 0.0
      %684 = vmatprep.subr.mxu0 0.0
      %685 = vmatpush1.msra.mxu0 0.0
      %686 = vmatprep.subr.mxu0 0.0
      %687 = vmatpush1.msra.mxu0 0.0
      %688 = vmatprep.subr.mxu0 0.0
      %689 = vmatpush1.msra.mxu0 0.0
      %690 = vmatprep.subr.mxu0 0.0
      %691 = vmatpush1.msra.mxu0 0.0
      %692 = vmatprep.subr.mxu0 0.0
      %693 = vmatpush1.msra.mxu0 0.0
      %694 = vmatprep.subr.mxu0 0.0
      %695 = vmatpush1.msra.mxu0 0.0
      %696 = vmatprep.subr.mxu0 0.0
      %697 = vmatpush1.msra.mxu0 0.0
      %698 = vmatprep.subr.mxu0 0.0
      %699 = vmatpush1.msra.mxu0 0.0
      %700 = vmatprep.subr.mxu0 0.0
      %701 = vmatpush1.msra.mxu0 0.0
      %702 = vmatprep.subr.mxu0 0.0
      %703 = vmatpush1.msra.mxu0 0.0
      %704 = vmatprep.subr.mxu0 0.0
      %705 = vmatpush1.msra.mxu0 0.0
      %706 = vmatprep.subr.mxu0 0.0
      %707 = vmatpush1.msra.mxu0 0.0
      %708 = vmatprep.subr.mxu0 0.0
      %709 = vmatpush1.msra.mxu0 0.0
      %710 = vmatprep.subr.mxu0 0.0
      %711 = vmatpush1.msra.mxu0 0.0
      %712 = vmatprep.subr.mxu0 0.0
      %713 = vmatpush1.msra.mxu0 0.0
      %714 = vmatprep.subr.mxu0 0.0
      %715 = vmatpush1.msra.mxu0 0.0
      %716 = vmatprep.subr.mxu0 0.0
      %717 = vmatpush1.msra.mxu0 0.0
      %718 = vmatprep.subr.mxu0 0.0
      %719 = vmatpush1.msra.mxu0 0.0
      %720 = vmatprep.subr.mxu0 0.0
      %721 = vmatpush1.msra.mxu0 0.0
      %722 = vmatprep.subr.mxu0 0.0
      %723 = vmatpush1.msra.mxu0 0.0
      %724 = vmatprep.subr.mxu0 0.0
      %725 = vmatpush1.msra.mxu0 0.0
      %726 = vmatprep.subr.mxu0 0.0
      %727 = vmatpush1.msra.mxu0 0.0
      %728 = vmatprep.subr.mxu0 0.0
      %729 = vmatpush1.msra.mxu0 0.0
      %730 = vmatprep.subr.mxu0 0.0
      %731 = vmatpush1.msra.mxu0 0.0
      %732 = vmatprep.subr.mxu0 0.0
      %733 = vmatpush1.msra.mxu0 0.0
      %734 = vmatprep.mubr.f32.mxu0 0.0
      %735 = vmatmul.mubr.f32.gmra.mrb[0].mxu0 %v668
      %v736 = vpop.f32.mrb[0].mxu0
      %v737 = vadd.f32 0.0, %v736
      %v738 = vpop.f32.mrb[0].mxu0
      %739 = vdwg.mxu0
      %v741 = vsel %vm234, %v592, 0
      %743 = vmatprep.subr.mxu0 0.0
      %744 = vmatpush1.msra.mxu0 %v232
      %745 = vmatprep.subr.mxu0 0.0
      %746 = vmatpush1.msra.mxu0 0.0
      %747 = vmatprep.subr.mxu0 0.0
      %748 = vmatpush1.msra.mxu0 0.0
      %749 = vmatprep.subr.mxu0 0.0
      %750 = vmatpush1.msra.mxu0 0.0
      %751 = vmatprep.subr.mxu0 0.0
      %752 = vmatpush1.msra.mxu0 0.0
      %753 = vmatprep.subr.mxu0 0.0
      %754 = vmatpush1.msra.mxu0 0.0
      %755 = vmatprep.subr.mxu0 0.0
      %756 = vmatpush1.msra.mxu0 0.0
      %757 = vmatprep.subr.mxu0 0.0
      %758 = vmatpush1.msra.mxu0 0.0
      %759 = vmatprep.subr.mxu0 0.0
      %760 = vmatpush1.msra.mxu0 0.0
      %761 = vmatprep.subr.mxu0 0.0
      %762 = vmatpush1.msra.mxu0 0.0
      %763 = vmatprep.subr.mxu0 0.0
      %764 = vmatpush1.msra.mxu0 0.0
      %765 = vmatprep.subr.mxu0 0.0
      %766 = vmatpush1.msra.mxu0 0.0
      %767 = vmatprep.subr.mxu0 0.0
      %768 = vmatpush1.msra.mxu0 0.0
      %769 = vmatprep.subr.mxu0 0.0
      %770 = vmatpush1.msra.mxu0 0.0
      %771 = vmatprep.subr.mxu0 0.0
      %772 = vmatpush1.msra.mxu0 0.0
      %773 = vmatprep.subr.mxu0 0.0
      %774 = vmatpush1.msra.mxu0 0.0
      %775 = vmatprep.subr.mxu0 0.0
      %776 = vmatpush1.msra.mxu0 0.0
      %777 = vmatprep.subr.mxu0 0.0
      %778 = vmatpush1.msra.mxu0 0.0
      %779 = vmatprep.subr.mxu0 0.0
      %780 = vmatpush1.msra.mxu0 0.0
      %781 = vmatprep.subr.mxu0 0.0
      %782 = vmatpush1.msra.mxu0 0.0
      %783 = vmatprep.subr.mxu0 0.0
      %784 = vmatpush1.msra.mxu0 0.0
      %785 = vmatprep.subr.mxu0 0.0
      %786 = vmatpush1.msra.mxu0 0.0
      %787 = vmatprep.subr.mxu0 0.0
      %788 = vmatpush1.msra.mxu0 0.0
      %789 = vmatprep.subr.mxu0 0.0
      %790 = vmatpush1.msra.mxu0 0.0
      %791 = vmatprep.subr.mxu0 0.0
      %792 = vmatpush1.msra.mxu0 0.0
      %793 = vmatprep.subr.mxu0 0.0
      %794 = vmatpush1.msra.mxu0 0.0
      %795 = vmatprep.subr.mxu0 0.0
      %796 = vmatpush1.msra.mxu0 0.0
      %797 = vmatprep.subr.mxu0 0.0
      %798 = vmatpush1.msra.mxu0 0.0
      %799 = vmatprep.subr.mxu0 0.0
      %800 = vmatpush1.msra.mxu0 0.0
      %801 = vmatprep.subr.mxu0 0.0
      %802 = vmatpush1.msra.mxu0 0.0
      %803 = vmatprep.subr.mxu0 0.0
      %804 = vmatpush1.msra.mxu0 0.0
      %805 = vmatprep.subr.mxu0 0.0
      %806 = vmatpush1.msra.mxu0 0.0
      %807 = vmatprep.mubr.f32.mxu0 0.0
      %808 = vmatmul.mubr.f32.gmra.mrb[0].mxu0 %v741
      %v809 = vpop.f32.mrb[0].mxu0
      %v810 = vadd.f32 0.0, %v809
      %v811 = vpop.f32.mrb[0].mxu0
      %812 = vdwg.mxu0
      %v814 = vsel %vm234, %v593, 0
      %816 = vmatprep.subr.mxu0 0.0
      %817 = vmatpush1.msra.mxu0 %v233
      %818 = vmatprep.subr.mxu0 0.0
      %819 = vmatpush1.msra.mxu0 0.0
      %820 = vmatprep.subr.mxu0 0.0
      %821 = vmatpush1.msra.mxu0 0.0
      %822 = vmatprep.subr.mxu0 0.0
      %823 = vmatpush1.msra.mxu0 0.0
      %824 = vmatprep.subr.mxu0 0.0
      %825 = vmatpush1.msra.mxu0 0.0
      %826 = vmatprep.subr.mxu0 0.0
      %827 = vmatpush1.msra.mxu0 0.0
      %828 = vmatprep.subr.mxu0 0.0
      %829 = vmatpush1.msra.mxu0 0.0
      %830 = vmatprep.subr.mxu0 0.0
      %831 = vmatpush1.msra.mxu0 0.0
      %832 = vmatprep.subr.mxu0 0.0
      %833 = vmatpush1.msra.mxu0 0.0
      %834 = vmatprep.subr.mxu0 0.0
      %835 = vmatpush1.msra.mxu0 0.0
      %836 = vmatprep.subr.mxu0 0.0
      %837 = vmatpush1.msra.mxu0 0.0
      %838 = vmatprep.subr.mxu0 0.0
      %839 = vmatpush1.msra.mxu0 0.0
      %840 = vmatprep.subr.mxu0 0.0
      %841 = vmatpush1.msra.mxu0 0.0
      %842 = vmatprep.subr.mxu0 0.0
      %843 = vmatpush1.msra.mxu0 0.0
      %844 = vmatprep.subr.mxu0 0.0
      %845 = vmatpush1.msra.mxu0 0.0
      %846 = vmatprep.subr.mxu0 0.0
      %847 = vmatpush1.msra.mxu0 0.0
      %848 = vmatprep.subr.mxu0 0.0
      %849 = vmatpush1.msra.mxu0 0.0
      %850 = vmatprep.subr.mxu0 0.0
      %851 = vmatpush1.msra.mxu0 0.0
      %852 = vmatprep.subr.mxu0 0.0
      %853 = vmatpush1.msra.mxu0 0.0
      %854 = vmatprep.subr.mxu0 0.0
      %855 = vmatpush1.msra.mxu0 0.0
      %856 = vmatprep.subr.mxu0 0.0
      %857 = vmatpush1.msra.mxu0 0.0
      %858 = vmatprep.subr.mxu0 0.0
      %859 = vmatpush1.msra.mxu0 0.0
      %860 = vmatprep.subr.mxu0 0.0
      %861 = vmatpush1.msra.mxu0 0.0
      %862 = vmatprep.subr.mxu0 0.0
      %863 = vmatpush1.msra.mxu0 0.0
      %864 = vmatprep.subr.mxu0 0.0
      %865 = vmatpush1.msra.mxu0 0.0
      %866 = vmatprep.subr.mxu0 0.0
      %867 = vmatpush1.msra.mxu0 0.0
      %868 = vmatprep.subr.mxu0 0.0
      %869 = vmatpush1.msra.mxu0 0.0
      %870 = vmatprep.subr.mxu0 0.0
      %871 = vmatpush1.msra.mxu0 0.0
      %872 = vmatprep.subr.mxu0 0.0
      %873 = vmatpush1.msra.mxu0 0.0
      %874 = vmatprep.subr.mxu0 0.0
      %875 = vmatpush1.msra.mxu0 0.0
      %876 = vmatprep.subr.mxu0 0.0
      %877 = vmatpush1.msra.mxu0 0.0
      %878 = vmatprep.subr.mxu0 0.0
      %879 = vmatpush1.msra.mxu0 0.0
      %880 = vmatprep.mubr.f32.mxu0 0.0
      %881 = vmatmul.mubr.f32.gmra.mrb[0].mxu0 %v814
      %v882 = vpop.f32.mrb[0].mxu0
      %v883 = vadd.f32 0.0, %v882
      %v884 = vpop.f32.mrb[0].mxu0
      %885 = vdwg.mxu0
      %886 = vst.msk [vmem:[%s216] sm:$0xff] %vm234, %v664
      %887 = vst.msk [vmem:[%s216 + $0x8] sm:$0xff] %vm234, %v737
      %888 = vst.msk [vmem:[%s216 + $0x10] sm:$0xff] %vm234, %v810
      %889 = vst.msk [vmem:[%s216 + $0x18] sm:$0xff] %vm234, %v883
      %s890 = smul.u32 4, %s14
      %p891 = scmp.lt.s32.totalorder %s890, 7
      %s892 = scalar_select %p891, %s890, 7
      %s893 = smul.addr %s892, 8
      %s894 = scalar_lea.vmem %s3, %s893
      // Predicated region
      $region33: #{decoder_block_forward.10} parent=31 // pred_check
        %p895 = pneg %p110
      $region34: #{decoder_block_forward.10} parent=31 // pred_check_branch
        %897 = sbr.rel (%p895) target = $region36
      $region35: #{decoder_block_forward.10} parent=31 // pred_region
        %s898 = smul.u32 4, %s14
      $region36: #{decoder_block_forward.10} parent=31 // pred_fallthru
        _
    $region32: #{decoder_block_forward.10} parent=5 // pred_fallthru
      _
    %p899 = scmp.le.s32.totalorder 2, %s9
    // Predicated region
    $region37: #{decoder_block_forward.10} parent=5 // pred_check
      %p900 = pneg %p899
    $region38: #{decoder_block_forward.10} parent=5 // pred_check_branch
      %902 = sbr.rel (%p900) target = $region40
    $region39: #{decoder_block_forward.10} parent=5 // pred_region
      %s903 = ssub.s32 %s9, 2
      // Predicated region
      $region41: #{decoder_block_forward.10} parent=39 // pred_check
        %p904 = pneg %p116
      $region42: #{decoder_block_forward.10} parent=39 // pred_check_branch
        %906 = sbr.rel (%p904) target = $region44
      $region43: #{decoder_block_forward.10} parent=39 // pred_region
        %s907 = smul.u32 4, %s15
        %p908 = scmp.lt.s32.totalorder %s907, 7
        %s909 = scalar_select %p908, %s907, 7
        %s910 = smul.addr %s909, 8
        %s911 = scalar_lea.vmem %s3, %s910
      $region44: #{decoder_block_forward.10} parent=39 // pred_fallthru
        _
    $region40: #{decoder_block_forward.10} parent=5 // pred_fallthru
      _
  $region6: #{decoder_block_forward.10} parent=0 // loop_footer
    %s13 = sadd.s32 1, %s9
  $region7: #{decoder_block_forward.10} parent=0 // loop_footer_branch
    %8 = sbr.rel target = $region3
  $region8: #{decoder_block_forward.10} parent=0 // loop_exit
    _

// kernel: decoder_block_forward.13
$region0: #{decoder_block_forward.13}
  #allocation0 [shape = 'u32[]', space=smem, size = 0x4, offset = 0x4, fixed_abs, tag = 'smem constant byte address 0x4 - core index']
  #allocation1 [shape = 'u32[144,128]{1,0:T(1,128)}', space=vmem, size = 0x12000, scoped, tag = 'internal scratch']
  #allocation2 [shape = 'f32[16,64]{1,0:T(8,128)}', space=vmem, size = 0x2000, scoped, tag = 'scratch operand']
  %s0 = inlined_call_operand.vmem [shape: f32[16,32], index: 0, kind: input, shape index: {}]
  %s1 = inlined_call_operand.vmem [shape: f32[32,64], index: 1, kind: input, shape index: {}]
  %s2 = inlined_call_operand.vmem [shape: f32[1,64], index: 2, kind: input, shape index: {}]
  %s3 = inlined_call_operand.vmem [shape: f32[16,64], index: 3, kind: output, shape index: {}]
  %s4 = sld [smem:[#allocation0]]
  $region30: #{decoder_block_forward.13} parent=0
    _
  %s6 = ssub.s32 1, %s4
  %s7 = scalar_select 0, %s6, %s4
  // Predicated region
  $region2: #{decoder_block_forward.13} parent=0 // pred_check
    _
  $region3: #{decoder_block_forward.13} parent=0 // pred_check_branch
    %9 = sbr.rel (0) target = $region5
  $region4: #{decoder_block_forward.13} parent=0 // pred_region
    _
  $region5: #{decoder_block_forward.13} parent=0 // pred_fallthru
    _
  // Predicated region
  $region6: #{decoder_block_forward.13} parent=0 // pred_check
    _
  $region7: #{decoder_block_forward.13} parent=0 // pred_check_branch
    %11 = sbr.rel (0) target = $region9
  $region8: #{decoder_block_forward.13} parent=0 // pred_region
    _
  $region9: #{decoder_block_forward.13} parent=0 // pred_fallthru
    _
  // Predicated region
  $region10: #{decoder_block_forward.13} parent=0 // pred_check
    _
  $region11: #{decoder_block_forward.13} parent=0 // pred_check_branch
    %13 = sbr.rel (0) target = $region13
  $region12: #{decoder_block_forward.13} parent=0 // pred_region
    _
  $region13: #{decoder_block_forward.13} parent=0 // pred_fallthru
    _
  %p14 = scmp.eq.s32.totalorder 0, 0
  // Predicated region
  $region14: #{decoder_block_forward.13} parent=0 // pred_check
    %p15 = pneg %p14
  $region15: #{decoder_block_forward.13} parent=0 // pred_check_branch
    %17 = sbr.rel (%p15) target = $region17
  $region16: #{decoder_block_forward.13} parent=0 // pred_region
    %vm18 = vcmask 523264
    %19 = vst.msk [vmem:[#allocation2] sm:$0xff] %vm18, 0.0
    %20 = vst.msk [vmem:[#allocation2 + $0x8] sm:$0xff] %vm18, 0.0
  $region17: #{decoder_block_forward.13} parent=0 // pred_fallthru
    _
  %v21 = vld [vmem:[#allocation2] sm:$0xff]
  %v22 = vld [vmem:[#allocation2 + $0x8] sm:$0xff]
  %v23 = vld [vmem:[%s0] sm:$0xff]
  %v24 = vld [vmem:[%s0 + $0x8] sm:$0xff]
  %v25 = vld [vmem:[%s1] sm:$0xff]
  %v26 = vld [vmem:[%s1 + $0x8] sm:$0xff]
  %v27 = vld [vmem:[%s1 + $0x10] sm:$0xff]
  %v28 = vld [vmem:[%s1 + $0x18] sm:$0xff]
  %vm29 = vcmask 261120
  %v31 = vsel %vm29, %v23, 0
  %v34 = vsel %vm29, %v24, 0
  %36 = vmatprep.subr.mxu0 0.0
  %37 = vmatpush1.msra.mxu0 %v25
  %38 = vmatprep.subr.mxu0 0.0
  %39 = vmatpush1.msra.mxu0 %v26
  %40 = vmatprep.subr.mxu0 0.0
  %41 = vmatpush1.msra.mxu0 %v27
  %42 = vmatprep.subr.mxu0 0.0
  %43 = vmatpush1.msra.mxu0 %v28
  %44 = vmatprep.subr.mxu0 0.0
  %45 = vmatpush1.msra.mxu0 0.0
  %46 = vmatprep.subr.mxu0 0.0
  %47 = vmatpush1.msra.mxu0 0.0
  %48 = vmatprep.subr.mxu0 0.0
  %49 = vmatpush1.msra.mxu0 0.0
  %50 = vmatprep.subr.mxu0 0.0
  %51 = vmatpush1.msra.mxu0 0.0
  %52 = vmatprep.subr.mxu0 0.0
  %53 = vmatpush1.msra.mxu0 0.0
  %54 = vmatprep.subr.mxu0 0.0
  %55 = vmatpush1.msra.mxu0 0.0
  %56 = vmatprep.subr.mxu0 0.0
  %57 = vmatpush1.msra.mxu0 0.0
  %58 = vmatprep.subr.mxu0 0.0
  %59 = vmatpush1.msra.mxu0 0.0
  %60 = vmatprep.subr.mxu0 0.0
  %61 = vmatpush1.msra.mxu0 0.0
  %62 = vmatprep.subr.mxu0 0.0
  %63 = vmatpush1.msra.mxu0 0.0
  %64 = vmatprep.subr.mxu0 0.0
  %65 = vmatpush1.msra.mxu0 0.0
  %66 = vmatprep.subr.mxu0 0.0
  %67 = vmatpush1.msra.mxu0 0.0
  %68 = vmatprep.subr.mxu0 0.0
  %69 = vmatpush1.msra.mxu0 0.0
  %70 = vmatprep.subr.mxu0 0.0
  %71 = vmatpush1.msra.mxu0 0.0
  %72 = vmatprep.subr.mxu0 0.0
  %73 = vmatpush1.msra.mxu0 0.0
  %74 = vmatprep.subr.mxu0 0.0
  %75 = vmatpush1.msra.mxu0 0.0
  %76 = vmatprep.subr.mxu0 0.0
  %77 = vmatpush1.msra.mxu0 0.0
  %78 = vmatprep.subr.mxu0 0.0
  %79 = vmatpush1.msra.mxu0 0.0
  %80 = vmatprep.subr.mxu0 0.0
  %81 = vmatpush1.msra.mxu0 0.0
  %82 = vmatprep.subr.mxu0 0.0
  %83 = vmatpush1.msra.mxu0 0.0
  %84 = vmatprep.subr.mxu0 0.0
  %85 = vmatpush1.msra.mxu0 0.0
  %86 = vmatprep.subr.mxu0 0.0
  %87 = vmatpush1.msra.mxu0 0.0
  %88 = vmatprep.subr.mxu0 0.0
  %89 = vmatpush1.msra.mxu0 0.0
  %90 = vmatprep.subr.mxu0 0.0
  %91 = vmatpush1.msra.mxu0 0.0
  %92 = vmatprep.subr.mxu0 0.0
  %93 = vmatpush1.msra.mxu0 0.0
  %94 = vmatprep.subr.mxu0 0.0
  %95 = vmatpush1.msra.mxu0 0.0
  %96 = vmatprep.subr.mxu0 0.0
  %97 = vmatpush1.msra.mxu0 0.0
  %98 = vmatprep.subr.mxu0 0.0
  %99 = vmatpush1.msra.mxu0 0.0
  %100 = vmatprep.mubr.f32.mxu0 0.0
  %101 = vmatmul.mubr.f32.gmra.mrb[0].mxu0 %v31
  %v102 = vpop.f32.mrb[0].mxu0
  %v103 = vadd.f32 0.0, %v102
  %v104 = vpop.f32.mrb[0].mxu0
  %105 = vmatprep.mubr.f32.mxu0 0.0
  %106 = vmatmul.mubr.f32.gmra.mrb[0].mxu0 %v34
  %v107 = vpop.f32.mrb[0].mxu0
  %v108 = vadd.f32 0.0, %v107
  %v109 = vpop.f32.mrb[0].mxu0
  %110 = vdwg.mxu0
  %v111 = vadd.f32 %v21, %v103
  %v112 = vadd.f32 %v22, %v108
  %vm113 = vcmask 523264
  %114 = vst.msk [vmem:[#allocation2] sm:$0xff] %vm113, %v111
  %115 = vst.msk [vmem:[#allocation2 + $0x8] sm:$0xff] %vm113, %v112
  // Predicated region
  $region18: #{decoder_block_forward.13} parent=0 // pred_check
    %p116 = pneg %p14
  $region19: #{decoder_block_forward.13} parent=0 // pred_check_branch
    %118 = sbr.rel (%p116) target = $region21
  $region20: #{decoder_block_forward.13} parent=0 // pred_region
    %v119 = vld [vmem:[#allocation2] sm:$0xff]
    %v120 = vld [vmem:[#allocation2 + $0x8] sm:$0xff]
    %v121 = vld [vmem:[%s2] sm:$0x1]
    %v123 = vlaneseq
    %v124 = vshrl.u32 %v123, 7
    %v125 = vsub.s32 0, %v124
    %v126 = vrot.slane %v121, %v125
    %v128 = vadd.f32 %v119, %v126
    %v129 = vadd.f32 %v120, %v126
    %130 = vst.msk [vmem:[%s3] sm:$0xff] %vm113, %v128
    %131 = vst.msk [vmem:[%s3 + $0x8] sm:$0xff] %vm113, %v129
  $region21: #{decoder_block_forward.13} parent=0 // pred_fallthru
    _
  // Predicated region
  $region22: #{decoder_block_forward.13} parent=0 // pred_check
    _
  $region23: #{decoder_block_forward.13} parent=0 // pred_check_branch
    %133 = sbr.rel (0) target = $region25
  $region24: #{decoder_block_forward.13} parent=0 // pred_region
    _
  $region25: #{decoder_block_forward.13} parent=0 // pred_fallthru
    _
  // Predicated region
  $region26: #{decoder_block_forward.13} parent=0 // pred_check
    _
  $region27: #{decoder_block_forward.13} parent=0 // pred_check_branch
    %135 = sbr.rel (0) target = $region29
  $region28: #{decoder_block_forward.13} parent=0 // pred_region
    _
  $region29: #{decoder_block_forward.13} parent=0 // pred_fallthru
    _

// kernel: decoder_block_forward.16
$region0: #{decoder_block_forward.16}
  #allocation0 [shape = 'u32[]', space=smem, size = 0x4, offset = 0x4, fixed_abs, tag = 'smem constant byte address 0x4 - core index']
  #allocation1 [shape = 'u32[144,128]{1,0:T(1,128)}', space=vmem, size = 0x12000, scoped, tag = 'internal scratch']
  #allocation2 [shape = 'f32[16,128]{1,0:T(8,128)}', space=vmem, size = 0x2000, scoped, tag = 'scratch operand']
  %s0 = inlined_call_operand.vmem [shape: f32[16,32], index: 0, kind: input, shape index: {}]
  %s1 = inlined_call_operand.vmem [shape: f32[32,128], index: 1, kind: input, shape index: {}]
  %s2 = inlined_call_operand.vmem [shape: f32[1,128], index: 2, kind: input, shape index: {}]
  %s3 = inlined_call_operand.vmem [shape: f32[16,128], index: 3, kind: output, shape index: {}]
  %s4 = sld [smem:[#allocation0]]
  $region30: #{decoder_block_forward.16} parent=0
    _
  %s6 = ssub.s32 1, %s4
  %s7 = scalar_select 0, %s6, %s4
  // Predicated region
  $region2: #{decoder_block_forward.16} parent=0 // pred_check
    _
  $region3: #{decoder_block_forward.16} parent=0 // pred_check_branch
    %9 = sbr.rel (0) target = $region5
  $region4: #{decoder_block_forward.16} parent=0 // pred_region
    _
  $region5: #{decoder_block_forward.16} parent=0 // pred_fallthru
    _
  // Predicated region
  $region6: #{decoder_block_forward.16} parent=0 // pred_check
    _
  $region7: #{decoder_block_forward.16} parent=0 // pred_check_branch
    %11 = sbr.rel (0) target = $region9
  $region8: #{decoder_block_forward.16} parent=0 // pred_region
    _
  $region9: #{decoder_block_forward.16} parent=0 // pred_fallthru
    _
  // Predicated region
  $region10: #{decoder_block_forward.16} parent=0 // pred_check
    _
  $region11: #{decoder_block_forward.16} parent=0 // pred_check_branch
    %13 = sbr.rel (0) target = $region13
  $region12: #{decoder_block_forward.16} parent=0 // pred_region
    _
  $region13: #{decoder_block_forward.16} parent=0 // pred_fallthru
    _
  %p14 = scmp.eq.s32.totalorder 0, 0
  // Predicated region
  $region14: #{decoder_block_forward.16} parent=0 // pred_check
    %p15 = pneg %p14
  $region15: #{decoder_block_forward.16} parent=0 // pred_check_branch
    %17 = sbr.rel (%p15) target = $region17
  $region16: #{decoder_block_forward.16} parent=0 // pred_region
    %18 = vst [vmem:[#allocation2] sm:$0xff] 0.0
    %19 = vst [vmem:[#allocation2 + $0x8] sm:$0xff] 0.0
  $region17: #{decoder_block_forward.16} parent=0 // pred_fallthru
    _
  %v20 = vld [vmem:[#allocation2] sm:$0xff]
  %v21 = vld [vmem:[#allocation2 + $0x8] sm:$0xff]
  %v22 = vld [vmem:[%s0] sm:$0xff]
  %v23 = vld [vmem:[%s0 + $0x8] sm:$0xff]
  %v24 = vld [vmem:[%s1] sm:$0xff]
  %v25 = vld [vmem:[%s1 + $0x8] sm:$0xff]
  %v26 = vld [vmem:[%s1 + $0x10] sm:$0xff]
  %v27 = vld [vmem:[%s1 + $0x18] sm:$0xff]
  %vm28 = vcmask 261120
  %v30 = vsel %vm28, %v22, 0
  %v33 = vsel %vm28, %v23, 0
  %35 = vmatprep.subr.mxu0 0.0
  %36 = vmatpush1.msra.mxu0 %v24
  %37 = vmatprep.subr.mxu0 0.0
  %38 = vmatpush1.msra.mxu0 %v25
  %39 = vmatprep.subr.mxu0 0.0
  %40 = vmatpush1.msra.mxu0 %v26
  %41 = vmatprep.subr.mxu0 0.0
  %42 = vmatpush1.msra.mxu0 %v27
  %43 = vmatprep.subr.mxu0 0.0
  %44 = vmatpush1.msra.mxu0 0.0
  %45 = vmatprep.subr.mxu0 0.0
  %46 = vmatpush1.msra.mxu0 0.0
  %47 = vmatprep.subr.mxu0 0.0
  %48 = vmatpush1.msra.mxu0 0.0
  %49 = vmatprep.subr.mxu0 0.0
  %50 = vmatpush1.msra.mxu0 0.0
  %51 = vmatprep.subr.mxu0 0.0
  %52 = vmatpush1.msra.mxu0 0.0
  %53 = vmatprep.subr.mxu0 0.0
  %54 = vmatpush1.msra.mxu0 0.0
  %55 = vmatprep.subr.mxu0 0.0
  %56 = vmatpush1.msra.mxu0 0.0
  %57 = vmatprep.subr.mxu0 0.0
  %58 = vmatpush1.msra.mxu0 0.0
  %59 = vmatprep.subr.mxu0 0.0
  %60 = vmatpush1.msra.mxu0 0.0
  %61 = vmatprep.subr.mxu0 0.0
  %62 = vmatpush1.msra.mxu0 0.0
  %63 = vmatprep.subr.mxu0 0.0
  %64 = vmatpush1.msra.mxu0 0.0
  %65 = vmatprep.subr.mxu0 0.0
  %66 = vmatpush1.msra.mxu0 0.0
  %67 = vmatprep.subr.mxu0 0.0
  %68 = vmatpush1.msra.mxu0 0.0
  %69 = vmatprep.subr.mxu0 0.0
  %70 = vmatpush1.msra.mxu0 0.0
  %71 = vmatprep.subr.mxu0 0.0
  %72 = vmatpush1.msra.mxu0 0.0
  %73 = vmatprep.subr.mxu0 0.0
  %74 = vmatpush1.msra.mxu0 0.0
  %75 = vmatprep.subr.mxu0 0.0
  %76 = vmatpush1.msra.mxu0 0.0
  %77 = vmatprep.subr.mxu0 0.0
  %78 = vmatpush1.msra.mxu0 0.0
  %79 = vmatprep.subr.mxu0 0.0
  %80 = vmatpush1.msra.mxu0 0.0
  %81 = vmatprep.subr.mxu0 0.0
  %82 = vmatpush1.msra.mxu0 0.0
  %83 = vmatprep.subr.mxu0 0.0
  %84 = vmatpush1.msra.mxu0 0.0
  %85 = vmatprep.subr.mxu0 0.0
  %86 = vmatpush1.msra.mxu0 0.0
  %87 = vmatprep.subr.mxu0 0.0
  %88 = vmatpush1.msra.mxu0 0.0
  %89 = vmatprep.subr.mxu0 0.0
  %90 = vmatpush1.msra.mxu0 0.0
  %91 = vmatprep.subr.mxu0 0.0
  %92 = vmatpush1.msra.mxu0 0.0
  %93 = vmatprep.subr.mxu0 0.0
  %94 = vmatpush1.msra.mxu0 0.0
  %95 = vmatprep.subr.mxu0 0.0
  %96 = vmatpush1.msra.mxu0 0.0
  %97 = vmatprep.subr.mxu0 0.0
  %98 = vmatpush1.msra.mxu0 0.0
  %99 = vmatprep.mubr.f32.mxu0 0.0
  %100 = vmatmul.mubr.f32.gmra.mrb[0].mxu0 %v30
  %v101 = vpop.f32.mrb[0].mxu0
  %v102 = vadd.f32 0.0, %v101
  %v103 = vpop.f32.mrb[0].mxu0
  %104 = vmatprep.mubr.f32.mxu0 0.0
  %105 = vmatmul.mubr.f32.gmra.mrb[0].mxu0 %v33
  %v106 = vpop.f32.mrb[0].mxu0
  %v107 = vadd.f32 0.0, %v106
  %v108 = vpop.f32.mrb[0].mxu0
  %109 = vdwg.mxu0
  %v110 = vadd.f32 %v20, %v102
  %v111 = vadd.f32 %v21, %v107
  %112 = vst [vmem:[#allocation2] sm:$0xff] %v110
  %113 = vst [vmem:[#allocation2 + $0x8] sm:$0xff] %v111
  // Predicated region
  $region18: #{decoder_block_forward.16} parent=0 // pred_check
    %p114 = pneg %p14
  $region19: #{decoder_block_forward.16} parent=0 // pred_check_branch
    %116 = sbr.rel (%p114) target = $region21
  $region20: #{decoder_block_forward.16} parent=0 // pred_region
    %v117 = vld [vmem:[#allocation2] sm:$0xff]
    %v118 = vld [vmem:[#allocation2 + $0x8] sm:$0xff]
    %v119 = vld [vmem:[%s2] sm:$0x1]
    %v121 = vlaneseq
    %v122 = vshrl.u32 %v121, 7
    %v123 = vsub.s32 0, %v122
    %v124 = vrot.slane %v119, %v123
    %v126 = vadd.f32 %v117, %v124
    %v127 = vadd.f32 %v118, %v124
    %v128 = vmul.f32 %v126, 0.5
    %v129 = vmul.f32 %v127, 0.5
    %v130 = vmul.f32 %v126, 0.044715
    %v131 = vmul.f32 %v127, 0.044715
    %v132 = vmul.f32 %v130, %v126
    %v133 = vmul.f32 %v131, %v127
    %v134 = vmul.f32 %v132, %v126
    %v135 = vmul.f32 %v133, %v127
    %v136 = vadd.f32 %v126, %v134
    %v137 = vadd.f32 %v127, %v135
    %v138 = vmul.f32 %v136, 0.7978846
    %v139 = vmul.f32 %v137, 0.7978846
    %v140 = vtanh.pop %v138
    %v141 = vtanh.pop %v139
    %v142 = vadd.f32 %v140, 1.0
    %v143 = vadd.f32 %v141, 1.0
    %v144 = vmul.f32 %v128, %v142
    %v145 = vmul.f32 %v129, %v143
    %146 = vst [vmem:[%s3] sm:$0xff] %v144
    %147 = vst [vmem:[%s3 + $0x8] sm:$0xff] %v145
  $region21: #{decoder_block_forward.16} parent=0 // pred_fallthru
    _
  // Predicated region
  $region22: #{decoder_block_forward.16} parent=0 // pred_check
    _
  $region23: #{decoder_block_forward.16} parent=0 // pred_check_branch
    %149 = sbr.rel (0) target = $region25
  $region24: #{decoder_block_forward.16} parent=0 // pred_region
    _
  $region25: #{decoder_block_forward.16} parent=0 // pred_fallthru
    _
  // Predicated region
  $region26: #{decoder_block_forward.16} parent=0 // pred_check
    _
  $region27: #{decoder_block_forward.16} parent=0 // pred_check_branch
    %151 = sbr.rel (0) target = $region29
  $region28: #{decoder_block_forward.16} parent=0 // pred_region
    _
  $region29: #{decoder_block_forward.16} parent=0 // pred_fallthru
    _

// kernel: decoder_block_forward.17
$region0: #{decoder_block_forward.17}
  #allocation0 [shape = 'u32[]', space=smem, size = 0x4, offset = 0x4, fixed_abs, tag = 'smem constant byte address 0x4 - core index']
  #allocation1 [shape = 'u32[144,128]{1,0:T(1,128)}', space=vmem, size = 0x12000, scoped, tag = 'internal scratch']
  #allocation2 [shape = 'f32[16,32]{1,0:T(8,128)}', space=vmem, size = 0x2000, scoped, tag = 'scratch operand']
  %s0 = inlined_call_operand.vmem [shape: f32[16,128], index: 0, kind: input, shape index: {}]
  %s1 = inlined_call_operand.vmem [shape: f32[128,32], index: 1, kind: input, shape index: {}]
  %s2 = inlined_call_operand.vmem [shape: f32[1,32], index: 2, kind: input, shape index: {}]
  %s3 = inlined_call_operand.vmem [shape: f32[16,32], index: 3, kind: input, shape index: {}]
  %s4 = inlined_call_operand.vmem [shape: f32[1,32], index: 4, kind: input, shape index: {}]
  %s5 = inlined_call_operand.vmem [shape: f32[1,32], index: 5, kind: input, shape index: {}]
  %s6 = inlined_call_operand.hbm [shape: f32[16,32], index: 6, kind: output, shape index: {}]
  %s7 = sld [smem:[#allocation0]]
  $region42: #{decoder_block_forward.17} parent=0
    _
  %s9 = ssub.s32 1, %s7
  %s10 = scalar_select 0, %s9, %s7
  $region1: #{decoder_block_forward.17} parent=0
    #allocation3 [shape = 'u8[8192]{0}', space=vmem, size = 0x2000, scoped, tag = 'output window, operand 0, single buffered']
    #allocation4 [shape = 's32[1]{0}', space=sflag, size = 0x4, scoped, tag = 'scoped memory for decoder_block_forward.17']
    %11 = vsyncpa [#allocation4], 0
    // Predicated region
    $region2: #{decoder_block_forward.17} parent=1 // pred_check
      _
    $region3: #{decoder_block_forward.17} parent=1 // pred_check_branch
      %13 = sbr.rel (0) target = $region5
    $region4: #{decoder_block_forward.17} parent=1 // pred_region
      _
    $region5: #{decoder_block_forward.17} parent=1 // pred_fallthru
      _
    // Predicated region
    $region6: #{decoder_block_forward.17} parent=1 // pred_check
      _
    $region7: #{decoder_block_forward.17} parent=1 // pred_check_branch
      %15 = sbr.rel (0) target = $region9
    $region8: #{decoder_block_forward.17} parent=1 // pred_region
      _
    $region9: #{decoder_block_forward.17} parent=1 // pred_fallthru
      _
    // Predicated region
    $region10: #{decoder_block_forward.17} parent=1 // pred_check
      _
    $region11: #{decoder_block_forward.17} parent=1 // pred_check_branch
      %17 = sbr.rel (0) target = $region13
    $region12: #{decoder_block_forward.17} parent=1 // pred_region
      _
    $region13: #{decoder_block_forward.17} parent=1 // pred_fallthru
      _
    // Predicated region
    $region14: #{decoder_block_forward.17} parent=1 // pred_check
      _
    $region15: #{decoder_block_forward.17} parent=1 // pred_check_branch
      %19 = sbr.rel (0) target = $region17
    $region16: #{decoder_block_forward.17} parent=1 // pred_region
      _
    $region17: #{decoder_block_forward.17} parent=1 // pred_fallthru
      _
    // Predicated region
    $region18: #{decoder_block_forward.17} parent=1 // pred_check
      _
    $region19: #{decoder_block_forward.17} parent=1 // pred_check_branch
      %21 = sbr.rel (0) target = $region21
    $region20: #{decoder_block_forward.17} parent=1 // pred_region
      _
    $region21: #{decoder_block_forward.17} parent=1 // pred_fallthru
      _
    // Predicated region
    $region22: #{decoder_block_forward.17} parent=1 // pred_check
      _
    $region23: #{decoder_block_forward.17} parent=1 // pred_check_branch
      %23 = sbr.rel (0) target = $region25
    $region24: #{decoder_block_forward.17} parent=1 // pred_region
      _
    $region25: #{decoder_block_forward.17} parent=1 // pred_fallthru
      _
    %p24 = scmp.eq.s32.totalorder 0, 0
    // Predicated region
    $region26: #{decoder_block_forward.17} parent=1 // pred_check
      %p25 = pneg %p24
    $region27: #{decoder_block_forward.17} parent=1 // pred_check_branch
      %27 = sbr.rel (%p25) target = $region29
    $region28: #{decoder_block_forward.17} parent=1 // pred_region
      %vm28 = vcmask 261120
      %29 = vst.msk [vmem:[#allocation2] sm:$0xff] %vm28, 0.0
      %30 = vst.msk [vmem:[#allocation2 + $0x8] sm:$0xff] %vm28, 0.0
    $region29: #{decoder_block_forward.17} parent=1 // pred_fallthru
      _
    %v31 = vld [vmem:[#allocation2] sm:$0xff]
    %v32 = vld [vmem:[#allocation2 + $0x8] sm:$0xff]
    %v33 = vld [vmem:[%s0] sm:$0xff]
    %v34 = vld [vmem:[%s0 + $0x8] sm:$0xff]
    %v35 = vld [vmem:[%s1] sm:$0xff]
    %v36 = vld [vmem:[%s1 + $0x8] sm:$0xff]
    %v37 = vld [vmem:[%s1 + $0x10] sm:$0xff]
    %v38 = vld [vmem:[%s1 + $0x18] sm:$0xff]
    %v39 = vld [vmem:[%s1 + $0x20] sm:$0xff]
    %v40 = vld [vmem:[%s1 + $0x28] sm:$0xff]
    %v41 = vld [vmem:[%s1 + $0x30] sm:$0xff]
    %v42 = vld [vmem:[%s1 + $0x38] sm:$0xff]
    %v43 = vld [vmem:[%s1 + $0x40] sm:$0xff]
    %v44 = vld [vmem:[%s1 + $0x48] sm:$0xff]
    %v45 = vld [vmem:[%s1 + $0x50] sm:$0xff]
    %v46 = vld [vmem:[%s1 + $0x58] sm:$0xff]
    %v47 = vld [vmem:[%s1 + $0x60] sm:$0xff]
    %v48 = vld [vmem:[%s1 + $0x68] sm:$0xff]
    %v49 = vld [vmem:[%s1 + $0x70] sm:$0xff]
    %v50 = vld [vmem:[%s1 + $0x78] sm:$0xff]
    %51 = vmatprep.subr.mxu0 0.0
    %52 = vmatpush1.msra.mxu0 %v35
    %53 = vmatprep.subr.mxu0 0.0
    %54 = vmatpush1.msra.mxu0 %v36
    %55 = vmatprep.subr.mxu0 0.0
    %56 = vmatpush1.msra.mxu0 %v37
    %57 = vmatprep.subr.mxu0 0.0
    %58 = vmatpush1.msra.mxu0 %v38
    %59 = vmatprep.subr.mxu0 0.0
    %60 = vmatpush1.msra.mxu0 %v39
    %61 = vmatprep.subr.mxu0 0.0
    %62 = vmatpush1.msra.mxu0 %v40
    %63 = vmatprep.subr.mxu0 0.0
    %64 = vmatpush1.msra.mxu0 %v41
    %65 = vmatprep.subr.mxu0 0.0
    %66 = vmatpush1.msra.mxu0 %v42
    %67 = vmatprep.subr.mxu0 0.0
    %68 = vmatpush1.msra.mxu0 %v43
    %69 = vmatprep.subr.mxu0 0.0
    %70 = vmatpush1.msra.mxu0 %v44
    %71 = vmatprep.subr.mxu0 0.0
    %72 = vmatpush1.msra.mxu0 %v45
    %73 = vmatprep.subr.mxu0 0.0
    %74 = vmatpush1.msra.mxu0 %v46
    %75 = vmatprep.subr.mxu0 0.0
    %76 = vmatpush1.msra.mxu0 %v47
    %77 = vmatprep.subr.mxu0 0.0
    %78 = vmatpush1.msra.mxu0 %v48
    %79 = vmatprep.subr.mxu0 0.0
    %80 = vmatpush1.msra.mxu0 %v49
    %81 = vmatprep.subr.mxu0 0.0
    %82 = vmatpush1.msra.mxu0 %v50
    %83 = vmatprep.subr.mxu0 0.0
    %84 = vmatpush1.msra.mxu0 0.0
    %85 = vmatprep.subr.mxu0 0.0
    %86 = vmatpush1.msra.mxu0 0.0
    %87 = vmatprep.subr.mxu0 0.0
    %88 = vmatpush1.msra.mxu0 0.0
    %89 = vmatprep.subr.mxu0 0.0
    %90 = vmatpush1.msra.mxu0 0.0
    %91 = vmatprep.subr.mxu0 0.0
    %92 = vmatpush1.msra.mxu0 0.0
    %93 = vmatprep.subr.mxu0 0.0
    %94 = vmatpush1.msra.mxu0 0.0
    %95 = vmatprep.subr.mxu0 0.0
    %96 = vmatpush1.msra.mxu0 0.0
    %97 = vmatprep.subr.mxu0 0.0
    %98 = vmatpush1.msra.mxu0 0.0
    %99 = vmatprep.subr.mxu0 0.0
    %100 = vmatpush1.msra.mxu0 0.0
    %101 = vmatprep.subr.mxu0 0.0
    %102 = vmatpush1.msra.mxu0 0.0
    %103 = vmatprep.subr.mxu0 0.0
    %104 = vmatpush1.msra.mxu0 0.0
    %105 = vmatprep.subr.mxu0 0.0
    %106 = vmatpush1.msra.mxu0 0.0
    %107 = vmatprep.subr.mxu0 0.0
    %108 = vmatpush1.msra.mxu0 0.0
    %109 = vmatprep.subr.mxu0 0.0
    %110 = vmatpush1.msra.mxu0 0.0
    %111 = vmatprep.subr.mxu0 0.0
    %112 = vmatpush1.msra.mxu0 0.0
    %113 = vmatprep.subr.mxu0 0.0
    %114 = vmatpush1.msra.mxu0 0.0
    %115 = vmatprep.mubr.f32.mxu0 0.0
    %116 = vmatmul.mubr.f32.gmra.mrb[0].mxu0 %v33
    %v117 = vpop.f32.mrb[0].mxu0
    %v118 = vadd.f32 0.0, %v117
    %v119 = vpop.f32.mrb[0].mxu0
    %120 = vmatprep.mubr.f32.mxu0 0.0
    %121 = vmatmul.mubr.f32.gmra.mrb[0].mxu0 %v34
    %v122 = vpop.f32.mrb[0].mxu0
    %v123 = vadd.f32 0.0, %v122
    %v124 = vpop.f32.mrb[0].mxu0
    %125 = vdwg.mxu0
    %v126 = vadd.f32 %v31, %v118
    %v127 = vadd.f32 %v32, %v123
    %vm128 = vcmask 261120
    %129 = vst.msk [vmem:[#allocation2] sm:$0xff] %vm128, %v126
    %130 = vst.msk [vmem:[#allocation2 + $0x8] sm:$0xff] %vm128, %v127
    // Predicated region
    $region30: #{decoder_block_forward.17} parent=1 // pred_check
      %p131 = pneg %p24
    $region31: #{decoder_block_forward.17} parent=1 // pred_check_branch
      %133 = sbr.rel (%p131) target = $region33
    $region32: #{decoder_block_forward.17} parent=1 // pred_region
      %v134 = vld [vmem:[#allocation2] sm:$0xff]
      %v135 = vld [vmem:[#allocation2 + $0x8] sm:$0xff]
      %v136 = vld [vmem:[%s2] sm:$0x1]
      %v138 = vlaneseq
      %v139 = vshrl.u32 %v138, 7
      %v140 = vsub.s32 0, %v139
      %v141 = vrot.slane %v136, %v140
      %v143 = vadd.f32 %v134, %v141
      %v144 = vadd.f32 %v135, %v141
      %v145 = vld [vmem:[%s3] sm:$0xff]
      %v146 = vld [vmem:[%s3 + $0x8] sm:$0xff]
      %v147 = vadd.f32 %v143, %v145
      %v148 = vadd.f32 %v144, %v146
      %v149 = vsel %vm128, %v147, 0.0
      %150 = vadd.xlane.f32.xlu0 %v149
      %v151 = vpop.xlane.xlu0 %150
      %v152 = vsel %vm128, %v148, 0.0
      %153 = vadd.xlane.f32.xlu0 %v152
      %v154 = vpop.xlane.xlu0 %153
      %v155 = vrcp.pop 32.0
      %v156 = vmul.f32 %v151, %v155
      %v157 = vmul.f32 %v154, %v155
      %v158 = vsub.f32 %v147, %v156
      %v159 = vsub.f32 %v148, %v157
      %v160 = vmul.f32 %v158, %v158
      %v161 = vmul.f32 %v159, %v159
      %v162 = vsel %vm128, %v160, 0.0
      %163 = vadd.xlane.f32.xlu0 %v162
      %v164 = vpop.xlane.xlu0 %163
      %v165 = vsel %vm128, %v161, 0.0
      %166 = vadd.xlane.f32.xlu0 %v165
      %v167 = vpop.xlane.xlu0 %166
      %v168 = vmul.f32 %v164, %v155
      %v169 = vmul.f32 %v167, %v155
      %v170 = vadd.f32 %v168, 1e-05
      %v171 = vadd.f32 %v169, 1e-05
      %v172 = vrsqrt.pop %v170
      %v173 = vrsqrt.pop %v171
      %v174 = vmul.f32 %v158, %v172
      %v175 = vmul.f32 %v159, %v173
      %v176 = vld [vmem:[%s4] sm:$0x1]
      %v178 = vlaneseq
      %v179 = vshrl.u32 %v178, 7
      %v180 = vsub.s32 0, %v179
      %v181 = vrot.slane %v176, %v180
      %v183 = vmul.f32 %v174, %v181
      %v184 = vmul.f32 %v175, %v181
      %v185 = vld [vmem:[%s5] sm:$0x1]
      %v187 = vlaneseq
      %v188 = vshrl.u32 %v187, 7
      %v189 = vsub.s32 0, %v188
      %v190 = vrot.slane %v185, %v189
      %v192 = vadd.f32 %v183, %v190
      %v193 = vadd.f32 %v184, %v190
      %194 = vst.msk [vmem:[#allocation3] sm:$0xff] %vm128, %v192
      %195 = vst.msk [vmem:[#allocation3 + $0x8] sm:$0xff] %vm128, %v193
    $region33: #{decoder_block_forward.17} parent=1 // pred_fallthru
      _
    // Predicated region
    $region34: #{decoder_block_forward.17} parent=1 // pred_check
      _
    $region35: #{decoder_block_forward.17} parent=1 // pred_check_branch
      %197 = sbr.rel (0) target = $region37
    $region36: #{decoder_block_forward.17} parent=1 // pred_region
      %s199 = ssub.s32 256, 256
      %200 = vsyncadd [#allocation4], %s199
      %s201 = sshll.u32 [#allocation3], 4
      %s202 = int_to_ptr.vmem [resolvable:$true] %s201
      %207 = dma.vmem_to_hbm [thread:$0]  %s202, 256, %s6, [#allocation4], 128, 128, 8
    $region37: #{decoder_block_forward.17} parent=1 // pred_fallthru
      _
    // Predicated region
    $region38: #{decoder_block_forward.17} parent=1 // pred_check
      _
    $region39: #{decoder_block_forward.17} parent=1 // pred_check_branch
      %209 = sbr.rel (0) target = $region41
    $region40: #{decoder_block_forward.17} parent=1 // pred_region
      %210 = dma.done [#allocation4], 256
    $region41: #{decoder_block_forward.17} parent=1 // pred_fallthru
      _
    %211 = vsyncpa [#allocation4], 1

// kernel: decoder_block_forward.14
$region0: #{decoder_block_forward.14}
  #allocation0 [shape = 'u32[]', space=smem, size = 0x4, offset = 0x4, fixed_abs, tag = 'smem constant byte address 0x4 - core index']
  #allocation1 [shape = 'u32[144,128]{1,0:T(1,128)}', space=vmem, size = 0x12000, scoped, tag = 'internal scratch']
  %s0 = inlined_call_operand.vmem [shape: f32[8,8,8], index: 0, kind: input, shape index: {}]
  %s1 = inlined_call_operand.vmem [shape: f32[8,8,8], index: 1, kind: input, shape index: {}]
  %s2 = inlined_call_operand.vmem [shape: f32[8,8,8], index: 2, kind: input, shape index: {}]
  %s3 = inlined_call_operand.vmem [shape: f32[8,8,8], index: 3, kind: output, shape index: {}]
  %s4 = sld [smem:[#allocation0]]
  $region45: #{decoder_block_forward.14} parent=0
    _
  %s6 = ssub.s32 1, %s4
  %s7 = scalar_select 0, %s6, %s4
  loop: start=0, step=1, limit=4
  $region2: #{decoder_block_forward.14} parent=0 // loop_pre_header
    _
  $region3: #{decoder_block_forward.14} parent=0 // loop_header
    %s9 = sphi 0, %s13
    %p10 = scmp.ge.s32.totalorder %s9, 4
    %s19 = sphi 0, %s21
    %s22 = sphi 0, %s19
    %s23 = sphi 0, %s22
    %s39 = sphi 0, %s23
    %s45 = sphi 0, %s47
    %s48 = sphi 0, %s45
    %s49 = sphi 0, %s48
    %s65 = sphi 0, %s49
    %s71 = sphi 0, %s73
    %s74 = sphi 0, %s71
    %s75 = sphi 0, %s74
    %s91 = sphi 0, %s75
    %s97 = sphi 0, %s99
    %s100 = sphi 0, %s97
    %s101 = sphi 0, %s100
    %s117 = sphi 0, %s101
  $region4: #{decoder_block_forward.14} parent=0 // loop_header_branch
    %12 = sbr.rel (%p10) target = $region8
  $region5: #{decoder_block_forward.14} parent=0 // loop_body
    %s14 = ssub.s32 %s9, 1
    %s15 = ssub.s32 %s9, 2
    %s16 = sadd.s32 %s9, 1
    %s17 = ssub.s32 %s9, %s16
    %p18 = scmp.eq.s32.totalorder %s17, 0
    %s20 = sadd.s32 %s19, 1
    %s21 = scalar_select %p18, %s19, %s20
    %p24 = pneg %p18
    %p25 = scmp.eq.s32.totalorder %s9, 1
    %p26 = por %p24, %p25
    %p27 = scmp.ne.s32.totalorder %s19, %s22
    %p28 = scmp.eq.s32.totalorder %s9, 0
    %p29 = por %p27, %p28
    %p30 = scmp.ne.s32.totalorder %s19, %s22
    %p31 = scmp.eq.s32.totalorder %s14, 1
    %p32 = por %p30, %p31
    %p33 = scmp.ne.s32.totalorder %s22, %s23
    %p34 = scmp.eq.s32.totalorder %s14, 0
    %p35 = por %p33, %p34
    %p36 = scmp.ne.s32.totalorder %s22, %s23
    %p37 = scmp.eq.s32.totalorder %s15, 1
    %p38 = por %p36, %p37
    %p40 = scmp.ne.s32.totalorder %s23, %s39
    %p41 = scmp.eq.s32.totalorder %s15, 0
    %p42 = por %p40, %p41
    %s43 = ssub.s32 %s9, %s16
    %p44 = scmp.eq.s32.totalorder %s43, 0
    %s46 = sadd.s32 %s45, 1
    %s47 = scalar_select %p44, %s45, %s46
    %p50 = pneg %p44
    %p51 = scmp.eq.s32.totalorder %s9, 1
    %p52 = por %p50, %p51
    %p53 = scmp.ne.s32.totalorder %s45, %s48
    %p54 = scmp.eq.s32.totalorder %s9, 0
    %p55 = por %p53, %p54
    %p56 = scmp.ne.s32.totalorder %s45, %s48
    %p57 = scmp.eq.s32.totalorder %s14, 1
    %p58 = por %p56, %p57
    %p59 = scmp.ne.s32.totalorder %s48, %s49
    %p60 = scmp.eq.s32.totalorder %s14, 0
    %p61 = por %p59, %p60
    %p62 = scmp.ne.s32.totalorder %s48, %s49
    %p63 = scmp.eq.s32.totalorder %s15, 1
    %p64 = por %p62, %p63
    %p66 = scmp.ne.s32.totalorder %s49, %s65
    %p67 = scmp.eq.s32.totalorder %s15, 0
    %p68 = por %p66, %p67
    %s69 = ssub.s32 %s9, %s16
    %p70 = scmp.eq.s32.totalorder %s69, 0
    %s72 = sadd.s32 %s71, 1
    %s73 = scalar_select %p70, %s71, %s72
    %p76 = pneg %p70
    %p77 = scmp.eq.s32.totalorder %s9, 1
    %p78 = por %p76, %p77
    %p79 = scmp.ne.s32.totalorder %s71, %s74
    %p80 = scmp.eq.s32.totalorder %s9, 0
    %p81 = por %p79, %p80
    %p82 = scmp.ne.s32.totalorder %s71, %s74
    %p83 = scmp.eq.s32.totalorder %s14, 1
    %p84 = por %p82, %p83
    %p85 = scmp.ne.s32.totalorder %s74, %s75
    %p86 = scmp.eq.s32.totalorder %s14, 0
    %p87 = por %p85, %p86
    %p88 = scmp.ne.s32.totalorder %s74, %s75
    %p89 = scmp.eq.s32.totalorder %s15, 1
    %p90 = por %p88, %p89
    %p92 = scmp.ne.s32.totalorder %s75, %s91
    %p93 = scmp.eq.s32.totalorder %s15, 0
    %p94 = por %p92, %p93
    %s95 = ssub.s32 %s9, %s16
    %p96 = scmp.eq.s32.totalorder %s95, 0
    %s98 = sadd.s32 %s97, 1
    %s99 = scalar_select %p96, %s97, %s98
    %p102 = pneg %p96
    %p103 = scmp.eq.s32.totalorder %s9, 1
    %p104 = por %p102, %p103
    %p105 = scmp.ne.s32.totalorder %s97, %s100
    %p106 = scmp.eq.s32.totalorder %s9, 0
    %p107 = por %p105, %p106
    %p108 = scmp.ne.s32.totalorder %s97, %s100
    %p109 = scmp.eq.s32.totalorder %s14, 1
    %p110 = por %p108, %p109
    %p111 = scmp.ne.s32.totalorder %s100, %s101
    %p112 = scmp.eq.s32.totalorder %s14, 0
    %p113 = por %p111, %p112
    %p114 = scmp.ne.s32.totalorder %s100, %s101
    %p115 = scmp.eq.s32.totalorder %s15, 1
    %p116 = por %p114, %p115
    %p118 = scmp.ne.s32.totalorder %s101, %s117
    %p119 = scmp.eq.s32.totalorder %s15, 0
    %p120 = por %p118, %p119
    %p121 = scmp.le.s32.totalorder 1, %s9
    %p122 = scmp.lt.s32.totalorder %s9, 3
    %p123 = pnand %p121, %p122
    %p124 = pneg %p123
    // Predicated region
    $region9: #{decoder_block_forward.14} parent=5 // pred_check
      _
    $region10: #{decoder_block_forward.14} parent=5 // pred_check_branch
      %126 = sbr.rel (%p123) target = $region12
    $region11: #{decoder_block_forward.14} parent=5 // pred_region
      %s127 = ssub.s32 %s9, 1
    $region12: #{decoder_block_forward.14} parent=5 // pred_fallthru
      _
    %p128 = scmp.lt.s32.totalorder %s9, 2
    // Predicated region
    $region13: #{decoder_block_forward.14} parent=5 // pred_check
      %p129 = pneg %p128
    $region14: #{decoder_block_forward.14} parent=5 // pred_check_branch
      %131 = sbr.rel (%p129) target = $region16
    $region15: #{decoder_block_forward.14} parent=5 // pred_region
      // Predicated region
      $region17: #{decoder_block_forward.14} parent=15 // pred_check
        %p132 = pneg %p29
      $region18: #{decoder_block_forward.14} parent=15 // pred_check_branch
        %134 = sbr.rel (%p132) target = $region20
      $region19: #{decoder_block_forward.14} parent=15 // pred_region
        %s135 = smul.u32 4, %s9
        %p136 = scmp.lt.s32.totalorder %s135, 7
        %s137 = scalar_select %p136, %s135, 7
        %s138 = smul.addr %s137, 8
        %s139 = scalar_lea.vmem %s0, %s138
        %s140 = smul.u32 4, %s9
      $region20: #{decoder_block_forward.14} parent=15 // pred_fallthru
        _
      // Predicated region
      $region21: #{decoder_block_forward.14} parent=15 // pred_check
        %p141 = pneg %p55
      $region22: #{decoder_block_forward.14} parent=15 // pred_check_branch
        %143 = sbr.rel (%p141) target = $region24
      $region23: #{decoder_block_forward.14} parent=15 // pred_region
        %s144 = smul.u32 4, %s9
        %p145 = scmp.lt.s32.totalorder %s144, 7
        %s146 = scalar_select %p145, %s144, 7
        %s147 = smul.addr %s146, 8
        %s148 = scalar_lea.vmem %s1, %s147
        %s149 = smul.u32 4, %s9
      $region24: #{decoder_block_forward.14} parent=15 // pred_fallthru
        _
      // Predicated region
      $region25: #{decoder_block_forward.14} parent=15 // pred_check
        %p150 = pneg %p81
      $region26: #{decoder_block_forward.14} parent=15 // pred_check_branch
        %152 = sbr.rel (%p150) target = $region28
      $region27: #{decoder_block_forward.14} parent=15 // pred_region
        %s153 = smul.u32 4, %s9
        %p154 = scmp.lt.s32.totalorder %s153, 7
        %s155 = scalar_select %p154, %s153, 7
        %s156 = smul.addr %s155, 8
        %s157 = scalar_lea.vmem %s2, %s156
        %s158 = smul.u32 4, %s9
      $region28: #{decoder_block_forward.14} parent=15 // pred_fallthru
        _
    $region16: #{decoder_block_forward.14} parent=5 // pred_fallthru
      _
    %p159 = scmp.le.s32.totalorder 1, %s9
    %p160 = scmp.lt.s32.totalorder %s9, 3
    %p161 = pnand %p159, %p160
    %p162 = pneg %p161
    // Predicated region
    $region29: #{decoder_block_forward.14} parent=5 // pred_check
      _
    $region30: #{decoder_block_forward.14} parent=5 // pred_check_branch
      %164 = sbr.rel (%p161) target = $region32
    $region31: #{decoder_block_forward.14} parent=5 // pred_region
      %s165 = ssub.s32 %s9, 1
      %s166 = smul.u32 4, %s14
      %p167 = scmp.lt.s32.totalorder %s166, 7
      %s168 = scalar_select %p167, %s166, 7
      %s169 = smul.addr %s168, 8
      %s170 = scalar_lea.vmem %s0, %s169
      %p171 = pneg %p35
      %p172 = pneg %p32
      %s173 = smul.u32 4, %s14
      %p174 = scmp.lt.s32.totalorder %s173, 7
      %s175 = scalar_select %p174, %s173, 7
      %s176 = smul.addr %s175, 8
      %s177 = scalar_lea.vmem %s1, %s176
      %p178 = pneg %p61
      %p179 = pneg %p58
      %s180 = smul.u32 4, %s14
      %p181 = scmp.lt.s32.totalorder %s180, 7
      %s182 = scalar_select %p181, %s180, 7
      %s183 = smul.addr %s182, 8
      %s184 = scalar_lea.vmem %s2, %s183
      %p185 = pneg %p87
      %p186 = pneg %p84
      %p187 = pneg %p113
      %p188 = pneg %p110
      %s189 = smul.u32 4, %s14
      %p190 = scmp.lt.s32.totalorder %s189, 7
      %s191 = scalar_select %p190, %s189, 7
      %s192 = smul.addr %s191, 8
      %s193 = scalar_lea.vmem %s3, %s192
      %s194 = smul.u32 4, %s14
      %p195 = scmp.lt.s32.totalorder %s194, 7
      %s196 = scalar_select %p195, %s194, 7
      %s197 = smul.addr %s196, 8
      %s198 = scalar_lea.vmem %s0, %s197
      %s199 = smul.u32 4, %s14
      %s200 = smul.u32 4, %s14
      %p201 = scmp.lt.s32.totalorder %s200, 7
      %s202 = scalar_select %p201, %s200, 7
      %s203 = smul.addr %s202, 8
      %s204 = scalar_lea.vmem %s1, %s203
      %s205 = smul.u32 4, %s14
      %s206 = smul.u32 4, %s14
      %p207 = scmp.lt.s32.totalorder %s206, 7
      %s208 = scalar_select %p207, %s206, 7
      %s209 = smul.addr %s208, 8
      %s210 = scalar_lea.vmem %s2, %s209
      %s211 = smul.u32 4, %s14
      %s212 = smul.u32 4, %s14
      %p213 = scmp.lt.s32.totalorder %s212, 7
      %s214 = scalar_select %p213, %s212, 7
      %s215 = smul.addr %s214, 8
      %s216 = scalar_lea.vmem %s3, %s215
      %s217 = smul.u32 4, %s14
      %v218 = vld [vmem:[%s198] sm:$0xff]
      %v219 = vld [vmem:[%s198 + $0x8] sm:$0xff]
      %v220 = vld [vmem:[%s198 + $0x10] sm:$0xff]
      %v221 = vld [vmem:[%s198 + $0x18] sm:$0xff]
      %v222 = vmul.f32 %v218, 0.35355338
      %v223 = vmul.f32 %v219, 0.35355338
      %v224 = vmul.f32 %v220, 0.35355338
      %v225 = vmul.f32 %v221, 0.35355338
      %v226 = vld [vmem:[%s204] sm:$0xff]
      %v227 = vld [vmem:[%s204 + $0x8] sm:$0xff]
      %v228 = vld [vmem:[%s204 + $0x10] sm:$0xff]
      %v229 = vld [vmem:[%s204 + $0x18] sm:$0xff]
      %v230 = vld [vmem:[%s210] sm:$0xff]
      %v231 = vld [vmem:[%s210 + $0x8] sm:$0xff]
      %v232 = vld [vmem:[%s210 + $0x10] sm:$0xff]
      %v233 = vld [vmem:[%s210 + $0x18] sm:$0xff]
      %vm234 = vcmask 64512
      %v236 = vsel %vm234, %v222, 0
      %v239 = vsel %vm234, %v226, 0
      %241 = vmatprep.subr.mxu0 0.0
      %242 = vmatpush1.xpose.msra.mxu0 %v239
      %243 = vmatprep.subr.mxu0 0.0
      %244 = vmatpush1.xpose.msra.mxu0 0.0
      %245 = vmatprep.subr.mxu0 0.0
      %246 = vmatpush1.xpose.msra.mxu0 0.0
      %247 = vmatprep.subr.mxu0 0.0
      %248 = vmatpush1.xpose.msra.mxu0 0.0
      %249 = vmatprep.subr.mxu0 0.0
      %250 = vmatpush1.xpose.msra.mxu0 0.0
      %251 = vmatprep.subr.mxu0 0.0
      %252 = vmatpush1.xpose.msra.mxu0 0.0
      %253 = vmatprep.subr.mxu0 0.0
      %254 = vmatpush1.xpose.msra.mxu0 0.0
      %255 = vmatprep.subr.mxu0 0.0
      %256 = vmatpush1.xpose.msra.mxu0 0.0
      %257 = vmatprep.subr.mxu0 0.0
      %258 = vmatpush1.xpose.msra.mxu0 0.0
      %259 = vmatprep.subr.mxu0 0.0
      %260 = vmatpush1.xpose.msra.mxu0 0.0
      %261 = vmatprep.subr.mxu0 0.0
      %262 = vmatpush1.xpose.msra.mxu0 0.0
      %263 = vmatprep.subr.mxu0 0.0
      %264 = vmatpush1.xpose.msra.mxu0 0.0
      %265 = vmatprep.subr.mxu0 0.0
      %266 = vmatpush1.xpose.msra.mxu0 0.0
      %267 = vmatprep.subr.mxu0 0.0
      %268 = vmatpush1.xpose.msra.mxu0 0.0
      %269 = vmatprep.subr.mxu0 0.0
      %270 = vmatpush1.xpose.msra.mxu0 0.0
      %271 = vmatprep.subr.mxu0 0.0
      %272 = vmatpush1.xpose.msra.mxu0 0.0
      %273 = vmatprep.subr.mxu0 0.0
      %274 = vmatpush1.xpose.msra.mxu0 0.0
      %275 = vmatprep.subr.mxu0 0.0
      %276 = vmatpush1.xpose.msra.mxu0 0.0
      %277 = vmatprep.subr.mxu0 0.0
      %278 = vmatpush1.xpose.msra.mxu0 0.0
      %279 = vmatprep.subr.mxu0 0.0
      %280 = vmatpush1.xpose.msra.mxu0 0.0
      %281 = vmatprep.subr.mxu0 0.0
      %282 = vmatpush1.xpose.msra.mxu0 0.0
      %283 = vmatprep.subr.mxu0 0.0
      %284 = vmatpush1.xpose.msra.mxu0 0.0
      %285 = vmatprep.subr.mxu0 0.0
      %286 = vmatpush1.xpose.msra.mxu0 0.0
      %287 = vmatprep.subr.mxu0 0.0
      %288 = vmatpush1.xpose.msra.mxu0 0.0
      %289 = vmatprep.subr.mxu0 0.0
      %290 = vmatpush1.xpose.msra.mxu0 0.0
      %291 = vmatprep.subr.mxu0 0.0
      %292 = vmatpush1.xpose.msra.mxu0 0.0
      %293 = vmatprep.subr.mxu0 0.0
      %294 = vmatpush1.xpose.msra.mxu0 0.0
      %295 = vmatprep.subr.mxu0 0.0
      %296 = vmatpush1.xpose.msra.mxu0 0.0
      %297 = vmatprep.subr.mxu0 0.0
      %298 = vmatpush1.xpose.msra.mxu0 0.0
      %299 = vmatprep.subr.mxu0 0.0
      %300 = vmatpush1.xpose.msra.mxu0 0.0
      %301 = vmatprep.subr.mxu0 0.0
      %302 = vmatpush1.xpose.msra.mxu0 0.0
      %303 = vmatprep.subr.mxu0 0.0
      %304 = vmatpush1.xpose.msra.mxu0 0.0
      %305 = vmatprep.mubr.f32.mxu0 0.0
      %306 = vmatmul.mubr.f32.gmra.mrb[0].mxu0 %v236
      %v307 = vpop.f32.mrb[0].mxu0
      %v308 = vadd.f32 0.0, %v307
      %v309 = vpop.f32.mrb[0].mxu0
      %310 = vdwg.mxu0
      %v312 = vsel %vm234, %v223, 0
      %v315 = vsel %vm234, %v227, 0
      %317 = vmatprep.subr.mxu0 0.0
      %318 = vmatpush1.xpose.msra.mxu0 %v315
      %319 = vmatprep.subr.mxu0 0.0
      %320 = vmatpush1.xpose.msra.mxu0 0.0
      %321 = vmatprep.subr.mxu0 0.0
      %322 = vmatpush1.xpose.msra.mxu0 0.0
      %323 = vmatprep.subr.mxu0 0.0
      %324 = vmatpush1.xpose.msra.mxu0 0.0
      %325 = vmatprep.subr.mxu0 0.0
      %326 = vmatpush1.xpose.msra.mxu0 0.0
      %327 = vmatprep.subr.mxu0 0.0
      %328 = vmatpush1.xpose.msra.mxu0 0.0
      %329 = vmatprep.subr.mxu0 0.0
      %330 = vmatpush1.xpose.msra.mxu0 0.0
      %331 = vmatprep.subr.mxu0 0.0
      %332 = vmatpush1.xpose.msra.mxu0 0.0
      %333 = vmatprep.subr.mxu0 0.0
      %334 = vmatpush1.xpose.msra.mxu0 0.0
      %335 = vmatprep.subr.mxu0 0.0
      %336 = vmatpush1.xpose.msra.mxu0 0.0
      %337 = vmatprep.subr.mxu0 0.0
      %338 = vmatpush1.xpose.msra.mxu0 0.0
      %339 = vmatprep.subr.mxu0 0.0
      %340 = vmatpush1.xpose.msra.mxu0 0.0
      %341 = vmatprep.subr.mxu0 0.0
      %342 = vmatpush1.xpose.msra.mxu0 0.0
      %343 = vmatprep.subr.mxu0 0.0
      %344 = vmatpush1.xpose.msra.mxu0 0.0
      %345 = vmatprep.subr.mxu0 0.0
      %346 = vmatpush1.xpose.msra.mxu0 0.0
      %347 = vmatprep.subr.mxu0 0.0
      %348 = vmatpush1.xpose.msra.mxu0 0.0
      %349 = vmatprep.subr.mxu0 0.0
      %350 = vmatpush1.xpose.msra.mxu0 0.0
      %351 = vmatprep.subr.mxu0 0.0
      %352 = vmatpush1.xpose.msra.mxu0 0.0
      %353 = vmatprep.subr.mxu0 0.0
      %354 = vmatpush1.xpose.msra.mxu0 0.0
      %355 = vmatprep.subr.mxu0 0.0
      %356 = vmatpush1.xpose.msra.mxu0 0.0
      %357 = vmatprep.subr.mxu0 0.0
      %358 = vmatpush1.xpose.msra.mxu0 0.0
      %359 = vmatprep.subr.mxu0 0.0
      %360 = vmatpush1.xpose.msra.mxu0 0.0
      %361 = vmatprep.subr.mxu0 0.0
      %362 = vmatpush1.xpose.msra.mxu0 0.0
      %363 = vmatprep.subr.mxu0 0.0
      %364 = vmatpush1.xpose.msra.mxu0 0.0
      %365 = vmatprep.subr.mxu0 0.0
      %366 = vmatpush1.xpose.msra.mxu0 0.0
      %367 = vmatprep.subr.mxu0 0.0
      %368 = vmatpush1.xpose.msra.mxu0 0.0
      %369 = vmatprep.subr.mxu0 0.0
      %370 = vmatpush1.xpose.msra.mxu0 0.0
      %371 = vmatprep.subr.mxu0 0.0
      %372 = vmatpush1.xpose.msra.mxu0 0.0
      %373 = vmatprep.subr.mxu0 0.0
      %374 = vmatpush1.xpose.msra.mxu0 0.0
      %375 = vmatprep.subr.mxu0 0.0
      %376 = vmatpush1.xpose.msra.mxu0 0.0
      %377 = vmatprep.subr.mxu0 0.0
      %378 = vmatpush1.xpose.msra.mxu0 0.0
      %379 = vmatprep.subr.mxu0 0.0
      %380 = vmatpush1.xpose.msra.mxu0 0.0
      %381 = vmatprep.mubr.f32.mxu0 0.0
      %382 = vmatmul.mubr.f32.gmra.mrb[0].mxu0 %v312
      %v383 = vpop.f32.mrb[0].mxu0
      %v384 = vadd.f32 0.0, %v383
      %v385 = vpop.f32.mrb[0].mxu0
      %386 = vdwg.mxu0
      %v388 = vsel %vm234, %v224, 0
      %v391 = vsel %vm234, %v228, 0
      %393 = vmatprep.subr.mxu0 0.0
      %394 = vmatpush1.xpose.msra.mxu0 %v391
      %395 = vmatprep.subr.mxu0 0.0
      %396 = vmatpush1.xpose.msra.mxu0 0.0
      %397 = vmatprep.subr.mxu0 0.0
      %398 = vmatpush1.xpose.msra.mxu0 0.0
      %399 = vmatprep.subr.mxu0 0.0
      %400 = vmatpush1.xpose.msra.mxu0 0.0
      %401 = vmatprep.subr.mxu0 0.0
      %402 = vmatpush1.xpose.msra.mxu0 0.0
      %403 = vmatprep.subr.mxu0 0.0
      %404 = vmatpush1.xpose.msra.mxu0 0.0
      %405 = vmatprep.subr.mxu0 0.0
      %406 = vmatpush1.xpose.msra.mxu0 0.0
      %407 = vmatprep.subr.mxu0 0.0
      %408 = vmatpush1.xpose.msra.mxu0 0.0
      %409 = vmatprep.subr.mxu0 0.0
      %410 = vmatpush1.xpose.msra.mxu0 0.0
      %411 = vmatprep.subr.mxu0 0.0
      %412 = vmatpush1.xpose.msra.mxu0 0.0
      %413 = vmatprep.subr.mxu0 0.0
      %414 = vmatpush1.xpose.msra.mxu0 0.0
      %415 = vmatprep.subr.mxu0 0.0
      %416 = vmatpush1.xpose.msra.mxu0 0.0
      %417 = vmatprep.subr.mxu0 0.0
      %418 = vmatpush1.xpose.msra.mxu0 0.0
      %419 = vmatprep.subr.mxu0 0.0
      %420 = vmatpush1.xpose.msra.mxu0 0.0
      %421 = vmatprep.subr.mxu0 0.0
      %422 = vmatpush1.xpose.msra.mxu0 0.0
      %423 = vmatprep.subr.mxu0 0.0
      %424 = vmatpush1.xpose.msra.mxu0 0.0
      %425 = vmatprep.subr.mxu0 0.0
      %426 = vmatpush1.xpose.msra.mxu0 0.0
      %427 = vmatprep.subr.mxu0 0.0
      %428 = vmatpush1.xpose.msra.mxu0 0.0
      %429 = vmatprep.subr.mxu0 0.0
      %430 = vmatpush1.xpose.msra.mxu0 0.0
      %431 = vmatprep.subr.mxu0 0.0
      %432 = vmatpush1.xpose.msra.mxu0 0.0
      %433 = vmatprep.subr.mxu0 0.0
      %434 = vmatpush1.xpose.msra.mxu0 0.0
      %435 = vmatprep.subr.mxu0 0.0
      %436 = vmatpush1.xpose.msra.mxu0 0.0
      %437 = vmatprep.subr.mxu0 0.0
      %438 = vmatpush1.xpose.msra.mxu0 0.0
      %439 = vmatprep.subr.mxu0 0.0
      %440 = vmatpush1.xpose.msra.mxu0 0.0
      %441 = vmatprep.subr.mxu0 0.0
      %442 = vmatpush1.xpose.msra.mxu0 0.0
      %443 = vmatprep.subr.mxu0 0.0
      %444 = vmatpush1.xpose.msra.mxu0 0.0
      %445 = vmatprep.subr.mxu0 0.0
      %446 = vmatpush1.xpose.msra.mxu0 0.0
      %447 = vmatprep.subr.mxu0 0.0
      %448 = vmatpush1.xpose.msra.mxu0 0.0
      %449 = vmatprep.subr.mxu0 0.0
      %450 = vmatpush1.xpose.msra.mxu0 0.0
      %451 = vmatprep.subr.mxu0 0.0
      %452 = vmatpush1.xpose.msra.mxu0 0.0
      %453 = vmatprep.subr.mxu0 0.0
      %454 = vmatpush1.xpose.msra.mxu0 0.0
      %455 = vmatprep.subr.mxu0 0.0
      %456 = vmatpush1.xpose.msra.mxu0 0.0
      %457 = vmatprep.mubr.f32.mxu0 0.0
      %458 = vmatmul.mubr.f32.gmra.mrb[0].mxu0 %v388
      %v459 = vpop.f32.mrb[0].mxu0
      %v460 = vadd.f32 0.0, %v459
      %v461 = vpop.f32.mrb[0].mxu0
      %462 = vdwg.mxu0
      %v464 = vsel %vm234, %v225, 0
      %v467 = vsel %vm234, %v229, 0
      %469 = vmatprep.subr.mxu0 0.0
      %470 = vmatpush1.xpose.msra.mxu0 %v467
      %471 = vmatprep.subr.mxu0 0.0
      %472 = vmatpush1.xpose.msra.mxu0 0.0
      %473 = vmatprep.subr.mxu0 0.0
      %474 = vmatpush1.xpose.msra.mxu0 0.0
      %475 = vmatprep.subr.mxu0 0.0
      %476 = vmatpush1.xpose.msra.mxu0 0.0
      %477 = vmatprep.subr.mxu0 0.0
      %478 = vmatpush1.xpose.msra.mxu0 0.0
      %479 = vmatprep.subr.mxu0 0.0
      %480 = vmatpush1.xpose.msra.mxu0 0.0
      %481 = vmatprep.subr.mxu0 0.0
      %482 = vmatpush1.xpose.msra.mxu0 0.0
      %483 = vmatprep.subr.mxu0 0.0
      %484 = vmatpush1.xpose.msra.mxu0 0.0
      %485 = vmatprep.subr.mxu0 0.0
      %486 = vmatpush1.xpose.msra.mxu0 0.0
      %487 = vmatprep.subr.mxu0 0.0
      %488 = vmatpush1.xpose.msra.mxu0 0.0
      %489 = vmatprep.subr.mxu0 0.0
      %490 = vmatpush1.xpose.msra.mxu0 0.0
      %491 = vmatprep.subr.mxu0 0.0
      %492 = vmatpush1.xpose.msra.mxu0 0.0
      %493 = vmatprep.subr.mxu0 0.0
      %494 = vmatpush1.xpose.msra.mxu0 0.0
      %495 = vmatprep.subr.mxu0 0.0
      %496 = vmatpush1.xpose.msra.mxu0 0.0
      %497 = vmatprep.subr.mxu0 0.0
      %498 = vmatpush1.xpose.msra.mxu0 0.0
      %499 = vmatprep.subr.mxu0 0.0
      %500 = vmatpush1.xpose.msra.mxu0 0.0
      %501 = vmatprep.subr.mxu0 0.0
      %502 = vmatpush1.xpose.msra.mxu0 0.0
      %503 = vmatprep.subr.mxu0 0.0
      %504 = vmatpush1.xpose.msra.mxu0 0.0
      %505 = vmatprep.subr.mxu0 0.0
      %506 = vmatpush1.xpose.msra.mxu0 0.0
      %507 = vmatprep.subr.mxu0 0.0
      %508 = vmatpush1.xpose.msra.mxu0 0.0
      %509 = vmatprep.subr.mxu0 0.0
      %510 = vmatpush1.xpose.msra.mxu0 0.0
      %511 = vmatprep.subr.mxu0 0.0
      %512 = vmatpush1.xpose.msra.mxu0 0.0
      %513 = vmatprep.subr.mxu0 0.0
      %514 = vmatpush1.xpose.msra.mxu0 0.0
      %515 = vmatprep.subr.mxu0 0.0
      %516 = vmatpush1.xpose.msra.mxu0 0.0
      %517 = vmatprep.subr.mxu0 0.0
      %518 = vmatpush1.xpose.msra.mxu0 0.0
      %519 = vmatprep.subr.mxu0 0.0
      %520 = vmatpush1.xpose.msra.mxu0 0.0
      %521 = vmatprep.subr.mxu0 0.0
      %522 = vmatpush1.xpose.msra.mxu0 0.0
      %523 = vmatprep.subr.mxu0 0.0
      %524 = vmatpush1.xpose.msra.mxu0 0.0
      %525 = vmatprep.subr.mxu0 0.0
      %526 = vmatpush1.xpose.msra.mxu0 0.0
      %527 = vmatprep.subr.mxu0 0.0
      %528 = vmatpush1.xpose.msra.mxu0 0.0
      %529 = vmatprep.subr.mxu0 0.0
      %530 = vmatpush1.xpose.msra.mxu0 0.0
      %531 = vmatprep.subr.mxu0 0.0
      %532 = vmatpush1.xpose.msra.mxu0 0.0
      %533 = vmatprep.mubr.f32.mxu0 0.0
      %534 = vmatmul.mubr.f32.gmra.mrb[0].mxu0 %v464
      %v535 = vpop.f32.mrb[0].mxu0
      %v536 = vadd.f32 0.0, %v535
      %v537 = vpop.f32.mrb[0].mxu0
      %538 = vdwg.mxu0
      %v539 = vsel %vm234, %v308, -inf
      %540 = vmax.xlane.f32.xlu0 %v539
      %v541 = vpop.xlane.xlu0 %540
      %v542 = vsel %vm234, %v384, -inf
      %543 = vmax.xlane.f32.xlu0 %v542
      %v544 = vpop.xlane.xlu0 %543
      %v545 = vsel %vm234, %v460, -inf
      %546 = vmax.xlane.f32.xlu0 %v545
      %v547 = vpop.xlane.xlu0 %546
      %v548 = vsel %vm234, %v536, -inf
      %549 = vmax.xlane.f32.xlu0 %v548
      %v550 = vpop.xlane.xlu0 %549
      %v551 = vsub.f32 %v308, %v541
      %v552 = vsub.f32 %v384, %v544
      %v553 = vsub.f32 %v460, %v547
      %v554 = vsub.f32 %v536, %v550
      %v555 = vmul.f32 %v551, 1.442695
      %v556 = vpow.pop %v555
      %v557 = vmul.f32 %v552, 1.442695
      %v558 = vpow.pop %v557
      %v559 = vmul.f32 %v553, 1.442695
      %v560 = vpow.pop %v559
      %v561 = vmul.f32 %v554, 1.442695
      %v562 = vpow.pop %v561
      %v563 = vsel %vm234, %v556, 0.0
      %564 = vadd.xlane.f32.xlu0 %v563
      %v565 = vpop.xlane.xlu0 %564
      %v566 = vsel %vm234, %v558, 0.0
      %567 = vadd.xlane.f32.xlu0 %v566
      %v568 = vpop.xlane.xlu0 %567
      %v569 = vsel %vm234, %v560, 0.0
      %570 = vadd.xlane.f32.xlu0 %v569
      %v571 = vpop.xlane.xlu0 %570
      %v572 = vsel %vm234, %v562, 0.0
      %573 = vadd.xlane.f32.xlu0 %v572
      %v574 = vpop.xlane.xlu0 %573
      %v575 = vrcp.pop %v565
      %v576 = vrcp.pop %v568
      %v577 = vrcp.pop %v571
      %v578 = vrcp.pop %v574
      %v579 = vmul.f32 %v556, %v575
      %v580 = vmul.f32 %v558, %v576
      %v581 = vmul.f32 %v560, %v577
      %v582 = vmul.f32 %v562, %v578
      %v584 = vsel %vm234, %v579, 0
      %586 = vmatprep.subr.mxu0 0.0
      %587 = vmatpush1.msra.mxu0 %v230
      %588 = vmatprep.subr.mxu0 0.0
      %589 = vmatpush1.msra.mxu0 0.0
      %590 = vmatprep.subr.mxu0 0.0
      %591 = vmatpush1.msra.mxu0 0.0
      %592 = vmatprep.subr.mxu0 0.0
      %593 = vmatpush1.msra.mxu0 0.0
      %594 = vmatprep.subr.mxu0 0.0
      %595 = vmatpush1.msra.mxu0 0.0
      %596 = vmatprep.subr.mxu0 0.0
      %597 = vmatpush1.msra.mxu0 0.0
      %598 = vmatprep.subr.mxu0 0.0
      %599 = vmatpush1.msra.mxu0 0.0
      %600 = vmatprep.subr.mxu0 0.0
      %601 = vmatpush1.msra.mxu0 0.0
      %602 = vmatprep.subr.mxu0 0.0
      %603 = vmatpush1.msra.mxu0 0.0
      %604 = vmatprep.subr.mxu0 0.0
      %605 = vmatpush1.msra.mxu0 0.0
      %606 = vmatprep.subr.mxu0 0.0
      %607 = vmatpush1.msra.mxu0 0.0
      %608 = vmatprep.subr.mxu0 0.0
      %609 = vmatpush1.msra.mxu0 0.0
      %610 = vmatprep.subr.mxu0 0.0
      %611 = vmatpush1.msra.mxu0 0.0
      %612 = vmatprep.subr.mxu0 0.0
      %613 = vmatpush1.msra.mxu0 0.0
      %614 = vmatprep.subr.mxu0 0.0
      %615 = vmatpush1.msra.mxu0 0.0
      %616 = vmatprep.subr.mxu0 0.0
      %617 = vmatpush1.msra.mxu0 0.0
      %618 = vmatprep.subr.mxu0 0.0
      %619 = vmatpush1.msra.mxu0 0.0
      %620 = vmatprep.subr.mxu0 0.0
      %621 = vmatpush1.msra.mxu0 0.0
      %622 = vmatprep.subr.mxu0 0.0
      %623 = vmatpush1.msra.mxu0 0.0
      %624 = vmatprep.subr.mxu0 0.0
      %625 = vmatpush1.msra.mxu0 0.0
      %626 = vmatprep.subr.mxu0 0.0
      %627 = vmatpush1.msra.mxu0 0.0
      %628 = vmatprep.subr.mxu0 0.0
      %629 = vmatpush1.msra.mxu0 0.0
      %630 = vmatprep.subr.mxu0 0.0
      %631 = vmatpush1.msra.mxu0 0.0
      %632 = vmatprep.subr.mxu0 0.0
      %633 = vmatpush1.msra.mxu0 0.0
      %634 = vmatprep.subr.mxu0 0.0
      %635 = vmatpush1.msra.mxu0 0.0
      %636 = vmatprep.subr.mxu0 0.0
      %637 = vmatpush1.msra.mxu0 0.0
      %638 = vmatprep.subr.mxu0 0.0
      %639 = vmatpush1.msra.mxu0 0.0
      %640 = vmatprep.subr.mxu0 0.0
      %641 = vmatpush1.msra.mxu0 0.0
      %642 = vmatprep.subr.mxu0 0.0
      %643 = vmatpush1.msra.mxu0 0.0
      %644 = vmatprep.subr.mxu0 0.0
      %645 = vmatpush1.msra.mxu0 0.0
      %646 = vmatprep.subr.mxu0 0.0
      %647 = vmatpush1.msra.mxu0 0.0
      %648 = vmatprep.subr.mxu0 0.0
      %649 = vmatpush1.msra.mxu0 0.0
      %650 = vmatprep.mubr.f32.mxu0 0.0
      %651 = vmatmul.mubr.f32.gmra.mrb[0].mxu0 %v584
      %v652 = vpop.f32.mrb[0].mxu0
      %v653 = vadd.f32 0.0, %v652
      %v654 = vpop.f32.mrb[0].mxu0
      %655 = vdwg.mxu0
      %v657 = vsel %vm234, %v580, 0
      %659 = vmatprep.subr.mxu0 0.0
      %660 = vmatpush1.msra.mxu0 %v231
      %661 = vmatprep.subr.mxu0 0.0
      %662 = vmatpush1.msra.mxu0 0.0
      %663 = vmatprep.subr.mxu0 0.0
      %664 = vmatpush1.msra.mxu0 0.0
      %665 = vmatprep.subr.mxu0 0.0
      %666 = vmatpush1.msra.mxu0 0.0
      %667 = vmatprep.subr.mxu0 0.0
      %668 = vmatpush1.msra.mxu0 0.0
      %669 = vmatprep.subr.mxu0 0.0
      %670 = vmatpush1.msra.mxu0 0.0
      %671 = vmatprep.subr.mxu0 0.0
      %672 = vmatpush1.msra.mxu0 0.0
      %673 = vmatprep.subr.mxu0 0.0
      %674 = vmatpush1.msra.mxu0 0.0
      %675 = vmatprep.subr.mxu0 0.0
      %676 = vmatpush1.msra.mxu0 0.0
      %677 = vmatprep.subr.mxu0 0.0
      %678 = vmatpush1.msra.mxu0 0.0
      %679 = vmatprep.subr.mxu0 0.0
      %680 = vmatpush1.msra.mxu0 0.0
      %681 = vmatprep.subr.mxu0 0.0
      %682 = vmatpush1.msra.mxu0 0.0
      %683 = vmatprep.subr.mxu0 0.0
      %684 = vmatpush1.msra.mxu0 0.0
      %685 = vmatprep.subr.mxu0 0.0
      %686 = vmatpush1.msra.mxu0 0.0
      %687 = vmatprep.subr.mxu0 0.0
      %688 = vmatpush1.msra.mxu0 0.0
      %689 = vmatprep.subr.mxu0 0.0
      %690 = vmatpush1.msra.mxu0 0.0
      %691 = vmatprep.subr.mxu0 0.0
      %692 = vmatpush1.msra.mxu0 0.0
      %693 = vmatprep.subr.mxu0 0.0
      %694 = vmatpush1.msra.mxu0 0.0
      %695 = vmatprep.subr.mxu0 0.0
      %696 = vmatpush1.msra.mxu0 0.0
      %697 = vmatprep.subr.mxu0 0.0
      %698 = vmatpush1.msra.mxu0 0.0
      %699 = vmatprep.subr.mxu0 0.0
      %700 = vmatpush1.msra.mxu0 0.0
      %701 = vmatprep.subr.mxu0 0.0
      %702 = vmatpush1.msra.mxu0 0.0
      %703 = vmatprep.subr.mxu0 0.0
      %704 = vmatpush1.msra.mxu0 0.0
      %705 = vmatprep.subr.mxu0 0.0
      %706 = vmatpush1.msra.mxu0 0.0
      %707 = vmatprep.subr.mxu0 0.0
      %708 = vmatpush1.msra.mxu0 0.0
      %709 = vmatprep.subr.mxu0 0.0
      %710 = vmatpush1.msra.mxu0 0.0
      %711 = vmatprep.subr.mxu0 0.0
      %712 = vmatpush1.msra.mxu0 0.0
      %713 = vmatprep.subr.mxu0 0.0
      %714 = vmatpush1.msra.mxu0 0.0
      %715 = vmatprep.subr.mxu0 0.0
      %716 = vmatpush1.msra.mxu0 0.0
      %717 = vmatprep.subr.mxu0 0.0
      %718 = vmatpush1.msra.mxu0 0.0
      %719 = vmatprep.subr.mxu0 0.0
      %720 = vmatpush1.msra.mxu0 0.0
      %721 = vmatprep.subr.mxu0 0.0
      %722 = vmatpush1.msra.mxu0 0.0
      %723 = vmatprep.mubr.f32.mxu0 0.0
      %724 = vmatmul.mubr.f32.gmra.mrb[0].mxu0 %v657
      %v725 = vpop.f32.mrb[0].mxu0
      %v726 = vadd.f32 0.0, %v725
      %v727 = vpop.f32.mrb[0].mxu0
      %728 = vdwg.mxu0
      %v730 = vsel %vm234, %v581, 0
      %732 = vmatprep.subr.mxu0 0.0
      %733 = vmatpush1.msra.mxu0 %v232
      %734 = vmatprep.subr.mxu0 0.0
      %735 = vmatpush1.msra.mxu0 0.0
      %736 = vmatprep.subr.mxu0 0.0
      %737 = vmatpush1.msra.mxu0 0.0
      %738 = vmatprep.subr.mxu0 0.0
      %739 = vmatpush1.msra.mxu0 0.0
      %740 = vmatprep.subr.mxu0 0.0
      %741 = vmatpush1.msra.mxu0 0.0
      %742 = vmatprep.subr.mxu0 0.0
      %743 = vmatpush1.msra.mxu0 0.0
      %744 = vmatprep.subr.mxu0 0.0
      %745 = vmatpush1.msra.mxu0 0.0
      %746 = vmatprep.subr.mxu0 0.0
      %747 = vmatpush1.msra.mxu0 0.0
      %748 = vmatprep.subr.mxu0 0.0
      %749 = vmatpush1.msra.mxu0 0.0
      %750 = vmatprep.subr.mxu0 0.0
      %751 = vmatpush1.msra.mxu0 0.0
      %752 = vmatprep.subr.mxu0 0.0
      %753 = vmatpush1.msra.mxu0 0.0
      %754 = vmatprep.subr.mxu0 0.0
      %755 = vmatpush1.msra.mxu0 0.0
      %756 = vmatprep.subr.mxu0 0.0
      %757 = vmatpush1.msra.mxu0 0.0
      %758 = vmatprep.subr.mxu0 0.0
      %759 = vmatpush1.msra.mxu0 0.0
      %760 = vmatprep.subr.mxu0 0.0
      %761 = vmatpush1.msra.mxu0 0.0
      %762 = vmatprep.subr.mxu0 0.0
      %763 = vmatpush1.msra.mxu0 0.0
      %764 = vmatprep.subr.mxu0 0.0
      %765 = vmatpush1.msra.mxu0 0.0
      %766 = vmatprep.subr.mxu0 0.0
      %767 = vmatpush1.msra.mxu0 0.0
      %768 = vmatprep.subr.mxu0 0.0
      %769 = vmatpush1.msra.mxu0 0.0
      %770 = vmatprep.subr.mxu0 0.0
      %771 = vmatpush1.msra.mxu0 0.0
      %772 = vmatprep.subr.mxu0 0.0
      %773 = vmatpush1.msra.mxu0 0.0
      %774 = vmatprep.subr.mxu0 0.0
      %775 = vmatpush1.msra.mxu0 0.0
      %776 = vmatprep.subr.mxu0 0.0
      %777 = vmatpush1.msra.mxu0 0.0
      %778 = vmatprep.subr.mxu0 0.0
      %779 = vmatpush1.msra.mxu0 0.0
      %780 = vmatprep.subr.mxu0 0.0
      %781 = vmatpush1.msra.mxu0 0.0
      %782 = vmatprep.subr.mxu0 0.0
      %783 = vmatpush1.msra.mxu0 0.0
      %784 = vmatprep.subr.mxu0 0.0
      %785 = vmatpush1.msra.mxu0 0.0
      %786 = vmatprep.subr.mxu0 0.0
      %787 = vmatpush1.msra.mxu0 0.0
      %788 = vmatprep.subr.mxu0 0.0
      %789 = vmatpush1.msra.mxu0 0.0
      %790 = vmatprep.subr.mxu0 0.0
      %791 = vmatpush1.msra.mxu0 0.0
      %792 = vmatprep.subr.mxu0 0.0
      %793 = vmatpush1.msra.mxu0 0.0
      %794 = vmatprep.subr.mxu0 0.0
      %795 = vmatpush1.msra.mxu0 0.0
      %796 = vmatprep.mubr.f32.mxu0 0.0
      %797 = vmatmul.mubr.f32.gmra.mrb[0].mxu0 %v730
      %v798 = vpop.f32.mrb[0].mxu0
      %v799 = vadd.f32 0.0, %v798
      %v800 = vpop.f32.mrb[0].mxu0
      %801 = vdwg.mxu0
      %v803 = vsel %vm234, %v582, 0
      %805 = vmatprep.subr.mxu0 0.0
      %806 = vmatpush1.msra.mxu0 %v233
      %807 = vmatprep.subr.mxu0 0.0
      %808 = vmatpush1.msra.mxu0 0.0
      %809 = vmatprep.subr.mxu0 0.0
      %810 = vmatpush1.msra.mxu0 0.0
      %811 = vmatprep.subr.mxu0 0.0
      %812 = vmatpush1.msra.mxu0 0.0
      %813 = vmatprep.subr.mxu0 0.0
      %814 = vmatpush1.msra.mxu0 0.0
      %815 = vmatprep.subr.mxu0 0.0
      %816 = vmatpush1.msra.mxu0 0.0
      %817 = vmatprep.subr.mxu0 0.0
      %818 = vmatpush1.msra.mxu0 0.0
      %819 = vmatprep.subr.mxu0 0.0
      %820 = vmatpush1.msra.mxu0 0.0
      %821 = vmatprep.subr.mxu0 0.0
      %822 = vmatpush1.msra.mxu0 0.0
      %823 = vmatprep.subr.mxu0 0.0
      %824 = vmatpush1.msra.mxu0 0.0
      %825 = vmatprep.subr.mxu0 0.0
      %826 = vmatpush1.msra.mxu0 0.0
      %827 = vmatprep.subr.mxu0 0.0
      %828 = vmatpush1.msra.mxu0 0.0
      %829 = vmatprep.subr.mxu0 0.0
      %830 = vmatpush1.msra.mxu0 0.0
      %831 = vmatprep.subr.mxu0 0.0
      %832 = vmatpush1.msra.mxu0 0.0
      %833 = vmatprep.subr.mxu0 0.0
      %834 = vmatpush1.msra.mxu0 0.0
      %835 = vmatprep.subr.mxu0 0.0
      %836 = vmatpush1.msra.mxu0 0.0
      %837 = vmatprep.subr.mxu0 0.0
      %838 = vmatpush1.msra.mxu0 0.0
      %839 = vmatprep.subr.mxu0 0.0
      %840 = vmatpush1.msra.mxu0 0.0
      %841 = vmatprep.subr.mxu0 0.0
      %842 = vmatpush1.msra.mxu0 0.0
      %843 = vmatprep.subr.mxu0 0.0
      %844 = vmatpush1.msra.mxu0 0.0
      %845 = vmatprep.subr.mxu0 0.0
      %846 = vmatpush1.msra.mxu0 0.0
      %847 = vmatprep.subr.mxu0 0.0
      %848 = vmatpush1.msra.mxu0 0.0
      %849 = vmatprep.subr.mxu0 0.0
      %850 = vmatpush1.msra.mxu0 0.0
      %851 = vmatprep.subr.mxu0 0.0
      %852 = vmatpush1.msra.mxu0 0.0
      %853 = vmatprep.subr.mxu0 0.0
      %854 = vmatpush1.msra.mxu0 0.0
      %855 = vmatprep.subr.mxu0 0.0
      %856 = vmatpush1.msra.mxu0 0.0
      %857 = vmatprep.subr.mxu0 0.0
      %858 = vmatpush1.msra.mxu0 0.0
      %859 = vmatprep.subr.mxu0 0.0
      %860 = vmatpush1.msra.mxu0 0.0
      %861 = vmatprep.subr.mxu0 0.0
      %862 = vmatpush1.msra.mxu0 0.0
      %863 = vmatprep.subr.mxu0 0.0
      %864 = vmatpush1.msra.mxu0 0.0
      %865 = vmatprep.subr.mxu0 0.0
      %866 = vmatpush1.msra.mxu0 0.0
      %867 = vmatprep.subr.mxu0 0.0
      %868 = vmatpush1.msra.mxu0 0.0
      %869 = vmatprep.mubr.f32.mxu0 0.0
      %870 = vmatmul.mubr.f32.gmra.mrb[0].mxu0 %v803
      %v871 = vpop.f32.mrb[0].mxu0
      %v872 = vadd.f32 0.0, %v871
      %v873 = vpop.f32.mrb[0].mxu0
      %874 = vdwg.mxu0
      %875 = vst.msk [vmem:[%s216] sm:$0xff] %vm234, %v653
      %876 = vst.msk [vmem:[%s216 + $0x8] sm:$0xff] %vm234, %v726
      %877 = vst.msk [vmem:[%s216 + $0x10] sm:$0xff] %vm234, %v799
      %878 = vst.msk [vmem:[%s216 + $0x18] sm:$0xff] %vm234, %v872
      %s879 = smul.u32 4, %s14
      %p880 = scmp.lt.s32.totalorder %s879, 7
      %s881 = scalar_select %p880, %s879, 7
      %s882 = smul.addr %s881, 8
      %s883 = scalar_lea.vmem %s3, %s882
      // Predicated region
      $region33: #{decoder_block_forward.14} parent=31 // pred_check
        %p884 = pneg %p110
      $region34: #{decoder_block_forward.14} parent=31 // pred_check_branch
        %886 = sbr.rel (%p884) target = $region36
      $region35: #{decoder_block_forward.14} parent=31 // pred_region
        %s887 = smul.u32 4, %s14
      $region36: #{decoder_block_forward.14} parent=31 // pred_fallthru
        _
    $region32: #{decoder_block_forward.14} parent=5 // pred_fallthru
      _
    %p888 = scmp.le.s32.totalorder 2, %s9
    // Predicated region
    $region37: #{decoder_block_forward.14} parent=5 // pred_check
      %p889 = pneg %p888
    $region38: #{decoder_block_forward.14} parent=5 // pred_check_branch
      %891 = sbr.rel (%p889) target = $region40
    $region39: #{decoder_block_forward.14} parent=5 // pred_region
      %s892 = ssub.s32 %s9, 2
      // Predicated region
      $region41: #{decoder_block_forward.14} parent=39 // pred_check
        %p893 = pneg %p116
      $region42: #{decoder_block_forward.14} parent=39 // pred_check_branch
        %895 = sbr.rel (%p893) target = $region44
      $region43: #{decoder_block_forward.14} parent=39 // pred_region
        %s896 = smul.u32 4, %s15
        %p897 = scmp.lt.s32.totalorder %s896, 7
        %s898 = scalar_select %p897, %s896, 7
        %s899 = smul.addr %s898, 8
        %s900 = scalar_lea.vmem %s3, %s899
      $region44: #{decoder_block_forward.14} parent=39 // pred_fallthru
        _
    $region40: #{decoder_block_forward.14} parent=5 // pred_fallthru
      _
  $region6: #{decoder_block_forward.14} parent=0 // loop_footer
    %s13 = sadd.s32 1, %s9
  $region7: #{decoder_block_forward.14} parent=0 // loop_footer_branch
    %8 = sbr.rel target = $region3
  $region8: #{decoder_block_forward.14} parent=0 // loop_exit
    _

</llo_original>
